<compile_context>
chip_gen: v5e
topology: v5e:2x2
jax: 0.10.0
libtpu: 0.0.40
codegen_flags: <defaults>
</compile_context>

<pallas_src>
import functools
import numpy as np
import jax
import jax.numpy as jnp
from jax import lax
from jax.experimental import pallas as pl
from jax.experimental.pallas import tpu as pltpu


# ----------------------------------------------------------------------------
# Fused ResBlock kernel (one batch element per grid step)
# ----------------------------------------------------------------------------
def _resblock_kernel(xp_ref, w1p_ref, s1_ref, b1_ref, w2_ref, s2_ref, b2_ref,
                     wd_ref, sd_ref, bd_ref, o_ref, h1p_ref,
                     *, H, W, Cin, Cmid, Cout):
    # ---- conv1 (3x3, pad=1) + BN1 + ReLU, dx packed into K ------------------
    # xp_ref[0, i, j, k*Cin:(k+1)*Cin] == x_pad[i, j + DX[k], :], DX = (1, 0, 2)
    p0 = xp_ref[0, 0:H, :, :].reshape(H * W, 3 * Cin)
    p1 = xp_ref[0, 1:H + 1, :, :].reshape(H * W, 3 * Cin)
    p2 = xp_ref[0, 2:H + 2, :, :].reshape(H * W, 3 * Cin)
    acc1 = jnp.dot(p0, w1p_ref[0], preferred_element_type=jnp.float32)
    acc1 = acc1 + jnp.dot(p1, w1p_ref[1], preferred_element_type=jnp.float32)
    acc1 = acc1 + jnp.dot(p2, w1p_ref[2], preferred_element_type=jnp.float32)
    h1 = jnp.maximum(acc1 * s1_ref[...] + b1_ref[...], 0.0)           # (H*W, Cmid)

    # ---- identity path: 1x1 conv (no bias) + BN_d ---------------------------
    # wd_ref is (3*Cin, Cout), zero except rows [0:Cin] (the center-tap slot),
    # so it reuses the already-loaded center row-slab patch p1.
    iden = jnp.dot(p1, wd_ref[...], preferred_element_type=jnp.float32)
    iden = iden * sd_ref[...] + bd_ref[...]                           # (H*W, Cout)

    # ---- stage h1 in a zero-bordered VMEM scratch (= conv2's pad=1) ---------
    h1p_ref[...] = jnp.zeros_like(h1p_ref)
    h1p_ref[1:H + 1, 1:W + 1, :] = h1.reshape(H, W, Cmid)

    # ---- conv2 (3x3, pad=1) + BN2 + ReLU, local accumulation ----------------
    acc2 = None
    for dy in range(3):
        for dx in range(3):
            patch = h1p_ref[dy:dy + H, dx:dx + W, :].reshape(H * W, Cmid)
            c = jnp.dot(patch, w2_ref[dy * 3 + dx],
                        preferred_element_type=jnp.float32)
            acc2 = c if acc2 is None else acc2 + c
    h2 = jnp.maximum(acc2 * s2_ref[...] + b2_ref[...], 0.0)           # (H*W, Cout)

    # ---- residual add + final ReLU, single store ----------------------------
    out = jnp.maximum(h2 + iden, 0.0)
    o_ref[...] = out.reshape(1, H, W, Cout).astype(o_ref.dtype)


def resblock_pallas(xp, w1p, s1, b1, w2, s2, b2, wd, sd, bd, H, W):
    B = xp.shape[0]
    Cin = xp.shape[-1] // 3
    Cmid = w1p.shape[-1]
    Cout = w2.shape[-1]
    kernel = functools.partial(_resblock_kernel, H=H, W=W,
                               Cin=Cin, Cmid=Cmid, Cout=Cout)

    # rough VMEM budget: double-buffered in/out blocks + weights + scratch
    est = 4 * 2 * ((H + 2) * W * 3 * Cin + H * W * Cout)              # x block + out block (x2 buf)
    est += 4 * 2 * (3 * 3 * Cin * Cmid + 9 * Cmid * Cout
                    + 3 * Cin * Cout + 2 * (Cmid + 2 * Cout))          # weights / affines
    est += 4 * (H + 2) * (W + 2) * Cmid                                # h1 scratch
    vmem_limit = int(min(max(4 * est, 16 * 1024 * 1024), 64 * 1024 * 1024))

    return pl.pallas_call(
        kernel,
        out_shape=jax.ShapeDtypeStruct((B, H, W, Cout), jnp.float32),
        grid_spec=pltpu.PrefetchScalarGridSpec(
            num_scalar_prefetch=0,
            grid=(B,),
            in_specs=[
                pl.BlockSpec((1, H + 2, W, 3 * Cin), lambda b: (b, 0, 0, 0)),
                pl.BlockSpec((3, 3 * Cin, Cmid), lambda b: (0, 0, 0)),
                pl.BlockSpec((1, Cmid), lambda b: (0, 0)),
                pl.BlockSpec((1, Cmid), lambda b: (0, 0)),
                pl.BlockSpec((9, Cmid, Cout), lambda b: (0, 0, 0)),
                pl.BlockSpec((1, Cout), lambda b: (0, 0)),
                pl.BlockSpec((1, Cout), lambda b: (0, 0)),
                pl.BlockSpec((3 * Cin, Cout), lambda b: (0, 0)),
                pl.BlockSpec((1, Cout), lambda b: (0, 0)),
                pl.BlockSpec((1, Cout), lambda b: (0, 0)),
            ],
            out_specs=pl.BlockSpec((1, H, W, Cout), lambda b: (b, 0, 0, 0)),
            scratch_shapes=[pltpu.VMEM((H + 2, W + 2, Cmid), jnp.float32)],
        ),
        compiler_params=pltpu.CompilerParams(
            dimension_semantics=("parallel",),
            vmem_limit_bytes=vmem_limit,
        ),
    )(xp, w1p, s1, b1, w2, s2, b2, wd, sd, bd)


# ----------------------------------------------------------------------------
# Parameter setup + full forward (glue in plain JAX, jit-safe)
# ----------------------------------------------------------------------------
def init_params(key, in_ch, out_ch):
    ks = jax.random.split(key, 16)
    p = {}
    # conv weights stored HWIO
    p["w1"] = jax.random.normal(ks[0], (3, 3, in_ch, out_ch), jnp.float32) * 0.1
    p["b1"] = jax.random.normal(ks[1], (out_ch,), jnp.float32) * 0.1
    p["w2"] = jax.random.normal(ks[2], (3, 3, out_ch, out_ch), jnp.float32) * 0.1
    p["b2"] = jax.random.normal(ks[3], (out_ch,), jnp.float32) * 0.1
    p["wd"] = jax.random.normal(ks[4], (in_ch, out_ch), jnp.float32) * 0.1   # 1x1, no bias
    # BatchNorm (eval mode) params
    p["gamma1"] = jax.random.uniform(ks[5], (out_ch,), jnp.float32, 0.5, 1.5)
    p["beta1"] = jax.random.normal(ks[6], (out_ch,), jnp.float32) * 0.1
    p["mean1"] = jax.random.normal(ks[7], (out_ch,), jnp.float32) * 0.1
    p["var1"] = jax.random.uniform(ks[8], (out_ch,), jnp.float32, 0.5, 1.5)
    p["gamma2"] = jax.random.uniform(ks[9], (out_ch,), jnp.float32, 0.5, 1.5)
    p["beta2"] = jax.random.normal(ks[10], (out_ch,), jnp.float32) * 0.1
    p["mean2"] = jax.random.normal(ks[11], (out_ch,), jnp.float32) * 0.1
    p["var2"] = jax.random.uniform(ks[12], (out_ch,), jnp.float32, 0.5, 1.5)
    p["gammad"] = jax.random.uniform(ks[13], (out_ch,), jnp.float32, 0.5, 1.5)
    p["betad"] = jax.random.normal(ks[14], (out_ch,), jnp.float32) * 0.1
    p["meand"] = jax.random.normal(ks[15], (out_ch,), jnp.float32) * 0.1
    p["vard"] = jax.random.uniform(jax.random.fold_in(key, 99),
                                   (out_ch,), jnp.float32, 0.5, 1.5)
    return p


def _fold_bn(conv_bias, gamma, beta, mean, var, eps=1e-5):
    scale = gamma / jnp.sqrt(var + eps)
    bias = beta + (conv_bias - mean) * scale
    return scale.reshape(1, -1), bias.reshape(1, -1)


def resblock_forward(x_nchw, params):
    """Forward of ResBlock.  x_nchw: (B, Cin, H, W) float32 -> (B, Cout, H, W)."""
    B, Cin, H, W = x_nchw.shape
    Cmid = params["w1"].shape[-1]
    Cout = params["w2"].shape[-1]

    x = jnp.transpose(x_nchw, (0, 2, 3, 1))                            # NHWC
    x_pad = jnp.pad(x, ((0, 0), (1, 1), (1, 1), (0, 0)))               # (B, H+2, W+2, Cin)

    # dx-packed input, center tap first:
    #   xp[b, i, j, k*Cin:(k+1)*Cin] = x_pad[b, i, j + DX[k], :],  DX = (1, 0, 2)
    DX = (1, 0, 2)
    xp = jnp.concatenate([x_pad[:, :, d:d + W, :] for d in DX], axis=-1)   # (B,H+2,W,3Cin)
    w1p = jnp.concatenate([params["w1"][:, d] for d in DX], axis=1)        # (3, 3Cin, Cmid)

    s1, b1 = _fold_bn(params["b1"], params["gamma1"], params["beta1"],
                      params["mean1"], params["var1"])
    w2 = params["w2"].reshape(9, Cmid, Cout)
    s2, b2 = _fold_bn(params["b2"], params["gamma2"], params["beta2"],
                      params["mean2"], params["var2"])

    # downsample: 1x1 conv (no bias) + BN, weight zero-padded so it consumes the
    # packed center-row patch (rows [0:Cin] = center tap, rest = 0)
    wd_aug = jnp.zeros((3 * Cin, Cout), jnp.float32).at[:Cin, :].set(params["wd"])
    sd, bd = _fold_bn(jnp.zeros((Cout,), jnp.float32), params["gammad"],
                      params["betad"], params["meand"], params["vard"])

    out = resblock_pallas(xp, w1p, s1, b1, w2, s2, b2, wd_aug, sd, bd, H, W)
    return jnp.transpose(out, (0, 3, 1, 2))                            # back to NCHW


# ----------------------------------------------------------------------------
# Pure-JAX reference (for correctness check)
# ----------------------------------------------------------------------------
def reference_forward(x_nchw, params, eps=1e-5):
    def conv3(x, w_hwio, b):
        w_oihw = jnp.transpose(w_hwio, (3, 2, 0, 1))
        y = lax.conv_general_dilated(x, w_oihw, (1, 1), ((1, 1), (1, 1)),
                                     dimension_numbers=("NCHW", "OIHW", "NCHW"))
        return y + b[None, :, None, None]

    def bn(x, g, be, m, v):
        return (x - m[None, :, None, None]) / jnp.sqrt(v[None, :, None, None] + eps) \
            * g[None, :, None, None] + be[None, :, None, None]

    h1 = jnp.maximum(bn(conv3(x_nchw, params["w1"], params["b1"]),
                        params["gamma1"], params["beta1"],
                        params["mean1"], params["var1"]), 0.0)
    h2 = jnp.maximum(bn(conv3(h1, params["w2"], params["b2"]),
                        params["gamma2"], params["beta2"],
                        params["mean2"], params["var2"]), 0.0)
    iden = bn(jnp.einsum("bchw,co->bohw", x_nchw, params["wd"]),
              params["gammad"], params["betad"], params["meand"], params["vard"])
    return jnp.maximum(h2 + iden, 0.0)


# ----------------------------------------------------------------------------
if __name__ == "__main__":
    key = jax.random.PRNGKey(0)
    B, Cin, Cout, H, W = 2, 4, 8, 16, 16

    kx, kp = jax.random.split(key)
    x = jax.random.normal(kx, (B, Cin, H, W), jnp.float32)
    params = init_params(kp, Cin, Cout)

    fwd = jax.jit(resblock_forward)
    out = jax.block_until_ready(fwd(x, params))

    ref = jax.block_until_ready(reference_forward(x, params))
    assert out.shape == (B, Cout, H, W), out.shape
    np.testing.assert_allclose(np.asarray(out), np.asarray(ref), rtol=2e-4, atol=2e-4)

    print("KERNEL_OK")
</pallas_src>

<mosaic_0001>
module attributes {stable_mosaic.version = 11 : i64} {
  func.func @_resblock_kernel(%arg0: i32, %arg1: memref<1x18x16x12xf32, #tpu.memory_space<vmem>>, %arg2: memref<3x12x8xf32, #tpu.memory_space<vmem>>, %arg3: memref<1x8xf32, #tpu.memory_space<vmem>>, %arg4: memref<1x8xf32, #tpu.memory_space<vmem>>, %arg5: memref<9x8x8xf32, #tpu.memory_space<vmem>>, %arg6: memref<1x8xf32, #tpu.memory_space<vmem>>, %arg7: memref<1x8xf32, #tpu.memory_space<vmem>>, %arg8: memref<12x8xf32, #tpu.memory_space<vmem>>, %arg9: memref<1x8xf32, #tpu.memory_space<vmem>>, %arg10: memref<1x8xf32, #tpu.memory_space<vmem>>, %arg11: memref<1x16x16x8xf32, #tpu.memory_space<vmem>>, %arg12: memref<18x18x8xf32, #tpu.memory_space<vmem>>) attributes {dimension_semantics = [#tpu.dimension_semantics<parallel>], iteration_bounds = array<i64: 2>, scalar_prefetch = 0 : i64, scratch_operands = 1 : i64, tpu.core_type = #tpu.core_type<tc>, window_params = [{transform_indices = @transform_0, window_bounds = array<i64: 1, 18, 16, 12>}, {pipeline_mode = #tpu.pipeline_mode<synchronous>, transform_indices = @transform_1, window_bounds = array<i64: 3, 12, 8>}, {pipeline_mode = #tpu.pipeline_mode<synchronous>, transform_indices = @transform_2, window_bounds = array<i64: 1, 8>}, {pipeline_mode = #tpu.pipeline_mode<synchronous>, transform_indices = @transform_3, window_bounds = array<i64: 1, 8>}, {pipeline_mode = #tpu.pipeline_mode<synchronous>, transform_indices = @transform_4, window_bounds = array<i64: 9, 8, 8>}, {pipeline_mode = #tpu.pipeline_mode<synchronous>, transform_indices = @transform_5, window_bounds = array<i64: 1, 8>}, {pipeline_mode = #tpu.pipeline_mode<synchronous>, transform_indices = @transform_6, window_bounds = array<i64: 1, 8>}, {pipeline_mode = #tpu.pipeline_mode<synchronous>, transform_indices = @transform_7, window_bounds = array<i64: 12, 8>}, {pipeline_mode = #tpu.pipeline_mode<synchronous>, transform_indices = @transform_8, window_bounds = array<i64: 1, 8>}, {pipeline_mode = #tpu.pipeline_mode<synchronous>, transform_indices = @transform_9, window_bounds = array<i64: 1, 8>}, {transform_indices = @transform_10, window_bounds = array<i64: 1, 16, 16, 8>}]} {
    %c0 = arith.constant 0 : index
    %c0_0 = arith.constant 0 : index
    %c0_1 = arith.constant 0 : index
    %c0_2 = arith.constant 0 : index
    %0 = vector.load %arg1[%c0, %c0_0, %c0_1, %c0_2] : memref<1x18x16x12xf32, #tpu.memory_space<vmem>>, vector<1x16x16x12xf32>
    %1 = vector.shape_cast %0 : vector<1x16x16x12xf32> to vector<16x16x12xf32>
    %2 = vector.shape_cast %1 : vector<16x16x12xf32> to vector<256x12xf32>
    %c0_3 = arith.constant 0 : index
    %c1 = arith.constant 1 : index
    %c0_4 = arith.constant 0 : index
    %c0_5 = arith.constant 0 : index
    %3 = vector.load %arg1[%c0_3, %c1, %c0_4, %c0_5] : memref<1x18x16x12xf32, #tpu.memory_space<vmem>>, vector<1x16x16x12xf32>
    %4 = vector.shape_cast %3 : vector<1x16x16x12xf32> to vector<16x16x12xf32>
    %5 = vector.shape_cast %4 : vector<16x16x12xf32> to vector<256x12xf32>
    %c0_6 = arith.constant 0 : index
    %c2 = arith.constant 2 : index
    %c0_7 = arith.constant 0 : index
    %c0_8 = arith.constant 0 : index
    %6 = vector.load %arg1[%c0_6, %c2, %c0_7, %c0_8] : memref<1x18x16x12xf32, #tpu.memory_space<vmem>>, vector<1x16x16x12xf32>
    %7 = vector.shape_cast %6 : vector<1x16x16x12xf32> to vector<16x16x12xf32>
    %8 = vector.shape_cast %7 : vector<16x16x12xf32> to vector<256x12xf32>
    %c0_9 = arith.constant 0 : index
    %c0_10 = arith.constant 0 : index
    %c0_11 = arith.constant 0 : index
    %9 = vector.load %arg2[%c0_9, %c0_10, %c0_11] : memref<3x12x8xf32, #tpu.memory_space<vmem>>, vector<1x12x8xf32>
    %10 = vector.shape_cast %9 : vector<1x12x8xf32> to vector<12x8xf32>
    %cst = arith.constant dense<0.000000e+00> : vector<256x8xf32>
    %11 = tpu.matmul %2, %10, %cst {dimension_numbers = #tpu.dot_dimension_numbers<[1], [0], [0], [1], [0, 0, 1, 1], [], []>} : vector<256x12xf32>, vector<12x8xf32>, vector<256x8xf32> -> vector<256x8xf32>
    %c1_12 = arith.constant 1 : index
    %c0_13 = arith.constant 0 : index
    %c0_14 = arith.constant 0 : index
    %12 = vector.load %arg2[%c1_12, %c0_13, %c0_14] : memref<3x12x8xf32, #tpu.memory_space<vmem>>, vector<1x12x8xf32>
    %13 = vector.shape_cast %12 : vector<1x12x8xf32> to vector<12x8xf32>
    %cst_15 = arith.constant dense<0.000000e+00> : vector<256x8xf32>
    %14 = tpu.matmul %5, %13, %cst_15 {dimension_numbers = #tpu.dot_dimension_numbers<[1], [0], [0], [1], [0, 0, 1, 1], [], []>} : vector<256x12xf32>, vector<12x8xf32>, vector<256x8xf32> -> vector<256x8xf32>
    %15 = arith.addf %11, %14 : vector<256x8xf32>
    %c2_16 = arith.constant 2 : index
    %c0_17 = arith.constant 0 : index
    %c0_18 = arith.constant 0 : index
    %16 = vector.load %arg2[%c2_16, %c0_17, %c0_18] : memref<3x12x8xf32, #tpu.memory_space<vmem>>, vector<1x12x8xf32>
    %17 = vector.shape_cast %16 : vector<1x12x8xf32> to vector<12x8xf32>
    %cst_19 = arith.constant dense<0.000000e+00> : vector<256x8xf32>
    %18 = tpu.matmul %8, %17, %cst_19 {dimension_numbers = #tpu.dot_dimension_numbers<[1], [0], [0], [1], [0, 0, 1, 1], [], []>} : vector<256x12xf32>, vector<12x8xf32>, vector<256x8xf32> -> vector<256x8xf32>
    %19 = arith.addf %15, %18 : vector<256x8xf32>
    %c0_20 = arith.constant 0 : index
    %c0_21 = arith.constant 0 : index
    %20 = vector.load %arg3[%c0_20, %c0_21] : memref<1x8xf32, #tpu.memory_space<vmem>>, vector<1x8xf32>
    %21 = vector.broadcast %20 : vector<1x8xf32> to vector<256x8xf32>
    %22 = arith.mulf %19, %21 : vector<256x8xf32>
    %c0_22 = arith.constant 0 : index
    %c0_23 = arith.constant 0 : index
    %23 = vector.load %arg4[%c0_22, %c0_23] : memref<1x8xf32, #tpu.memory_space<vmem>>, vector<1x8xf32>
    %24 = vector.broadcast %23 : vector<1x8xf32> to vector<256x8xf32>
    %25 = arith.addf %22, %24 : vector<256x8xf32>
    %cst_24 = arith.constant 0.000000e+00 : f32
    %26 = vector.broadcast %cst_24 : f32 to vector<256x8xf32>
    %27 = arith.maximumf %25, %26 : vector<256x8xf32>
    %c0_25 = arith.constant 0 : index
    %c0_26 = arith.constant 0 : index
    %28 = vector.load %arg8[%c0_25, %c0_26] : memref<12x8xf32, #tpu.memory_space<vmem>>, vector<12x8xf32>
    %cst_27 = arith.constant dense<0.000000e+00> : vector<256x8xf32>
    %29 = tpu.matmul %5, %28, %cst_27 {dimension_numbers = #tpu.dot_dimension_numbers<[1], [0], [0], [1], [0, 0, 1, 1], [], []>} : vector<256x12xf32>, vector<12x8xf32>, vector<256x8xf32> -> vector<256x8xf32>
    %c0_28 = arith.constant 0 : index
    %c0_29 = arith.constant 0 : index
    %30 = vector.load %arg9[%c0_28, %c0_29] : memref<1x8xf32, #tpu.memory_space<vmem>>, vector<1x8xf32>
    %31 = vector.broadcast %30 : vector<1x8xf32> to vector<256x8xf32>
    %32 = arith.mulf %29, %31 : vector<256x8xf32>
    %c0_30 = arith.constant 0 : index
    %c0_31 = arith.constant 0 : index
    %33 = vector.load %arg10[%c0_30, %c0_31] : memref<1x8xf32, #tpu.memory_space<vmem>>, vector<1x8xf32>
    %34 = vector.broadcast %33 : vector<1x8xf32> to vector<256x8xf32>
    %35 = arith.addf %32, %34 : vector<256x8xf32>
    %cst_32 = arith.constant 0.000000e+00 : f32
    %36 = vector.broadcast %cst_32 : f32 to vector<18x18x8xf32>
    %c0_33 = arith.constant 0 : index
    %c0_34 = arith.constant 0 : index
    %c0_35 = arith.constant 0 : index
    %37 = vector.load %arg12[%c0_33, %c0_34, %c0_35] : memref<18x18x8xf32, #tpu.memory_space<vmem>>, vector<18x18x8xf32>
    tpu.vector_store %arg12[%c0_33, %c0_34, %c0_35], %36 {strides = array<i32>} : memref<18x18x8xf32, #tpu.memory_space<vmem>>, vector<18x18x8xf32>,
    %38 = vector.shape_cast %27 : vector<256x8xf32> to vector<16x16x8xf32>
    %c1_36 = arith.constant 1 : index
    %c1_37 = arith.constant 1 : index
    %c0_38 = arith.constant 0 : index
    %39 = vector.load %arg12[%c1_36, %c1_37, %c0_38] : memref<18x18x8xf32, #tpu.memory_space<vmem>>, vector<16x16x8xf32>
    tpu.vector_store %arg12[%c1_36, %c1_37, %c0_38], %38 {strides = array<i32>} : memref<18x18x8xf32, #tpu.memory_space<vmem>>, vector<16x16x8xf32>,
    %c0_39 = arith.constant 0 : index
    %c0_40 = arith.constant 0 : index
    %c0_41 = arith.constant 0 : index
    %40 = vector.load %arg12[%c0_39, %c0_40, %c0_41] : memref<18x18x8xf32, #tpu.memory_space<vmem>>, vector<16x16x8xf32>
    %41 = vector.shape_cast %40 : vector<16x16x8xf32> to vector<256x8xf32>
    %c0_42 = arith.constant 0 : index
    %c0_43 = arith.constant 0 : index
    %c0_44 = arith.constant 0 : index
    %42 = vector.load %arg5[%c0_42, %c0_43, %c0_44] : memref<9x8x8xf32, #tpu.memory_space<vmem>>, vector<1x8x8xf32>
    %43 = vector.shape_cast %42 : vector<1x8x8xf32> to vector<8x8xf32>
    %cst_45 = arith.constant dense<0.000000e+00> : vector<256x8xf32>
    %44 = tpu.matmul %41, %43, %cst_45 {dimension_numbers = #tpu.dot_dimension_numbers<[1], [0], [0], [1], [0, 0, 1, 1], [], []>} : vector<256x8xf32>, vector<8x8xf32>, vector<256x8xf32> -> vector<256x8xf32>
    %c0_46 = arith.constant 0 : index
    %c1_47 = arith.constant 1 : index
    %c0_48 = arith.constant 0 : index
    %45 = vector.load %arg12[%c0_46, %c1_47, %c0_48] : memref<18x18x8xf32, #tpu.memory_space<vmem>>, vector<16x16x8xf32>
    %46 = vector.shape_cast %45 : vector<16x16x8xf32> to vector<256x8xf32>
    %c1_49 = arith.constant 1 : index
    %c0_50 = arith.constant 0 : index
    %c0_51 = arith.constant 0 : index
    %47 = vector.load %arg5[%c1_49, %c0_50, %c0_51] : memref<9x8x8xf32, #tpu.memory_space<vmem>>, vector<1x8x8xf32>
    %48 = vector.shape_cast %47 : vector<1x8x8xf32> to vector<8x8xf32>
    %cst_52 = arith.constant dense<0.000000e+00> : vector<256x8xf32>
    %49 = tpu.matmul %46, %48, %cst_52 {dimension_numbers = #tpu.dot_dimension_numbers<[1], [0], [0], [1], [0, 0, 1, 1], [], []>} : vector<256x8xf32>, vector<8x8xf32>, vector<256x8xf32> -> vector<256x8xf32>
    %50 = arith.addf %44, %49 : vector<256x8xf32>
    %c0_53 = arith.constant 0 : index
    %c2_54 = arith.constant 2 : index
    %c0_55 = arith.constant 0 : index
    %51 = vector.load %arg12[%c0_53, %c2_54, %c0_55] : memref<18x18x8xf32, #tpu.memory_space<vmem>>, vector<16x16x8xf32>
    %52 = vector.shape_cast %51 : vector<16x16x8xf32> to vector<256x8xf32>
    %c2_56 = arith.constant 2 : index
    %c0_57 = arith.constant 0 : index
    %c0_58 = arith.constant 0 : index
    %53 = vector.load %arg5[%c2_56, %c0_57, %c0_58] : memref<9x8x8xf32, #tpu.memory_space<vmem>>, vector<1x8x8xf32>
    %54 = vector.shape_cast %53 : vector<1x8x8xf32> to vector<8x8xf32>
    %cst_59 = arith.constant dense<0.000000e+00> : vector<256x8xf32>
    %55 = tpu.matmul %52, %54, %cst_59 {dimension_numbers = #tpu.dot_dimension_numbers<[1], [0], [0], [1], [0, 0, 1, 1], [], []>} : vector<256x8xf32>, vector<8x8xf32>, vector<256x8xf32> -> vector<256x8xf32>
    %56 = arith.addf %50, %55 : vector<256x8xf32>
    %c1_60 = arith.constant 1 : index
    %c0_61 = arith.constant 0 : index
    %c0_62 = arith.constant 0 : index
    %57 = vector.load %arg12[%c1_60, %c0_61, %c0_62] : memref<18x18x8xf32, #tpu.memory_space<vmem>>, vector<16x16x8xf32>
    %58 = vector.shape_cast %57 : vector<16x16x8xf32> to vector<256x8xf32>
    %c3 = arith.constant 3 : index
    %c0_63 = arith.constant 0 : index
    %c0_64 = arith.constant 0 : index
    %59 = vector.load %arg5[%c3, %c0_63, %c0_64] : memref<9x8x8xf32, #tpu.memory_space<vmem>>, vector<1x8x8xf32>
    %60 = vector.shape_cast %59 : vector<1x8x8xf32> to vector<8x8xf32>
    %cst_65 = arith.constant dense<0.000000e+00> : vector<256x8xf32>
    %61 = tpu.matmul %58, %60, %cst_65 {dimension_numbers = #tpu.dot_dimension_numbers<[1], [0], [0], [1], [0, 0, 1, 1], [], []>} : vector<256x8xf32>, vector<8x8xf32>, vector<256x8xf32> -> vector<256x8xf32>
    %62 = arith.addf %56, %61 : vector<256x8xf32>
    %c1_66 = arith.constant 1 : index
    %c1_67 = arith.constant 1 : index
    %c0_68 = arith.constant 0 : index
    %63 = vector.load %arg12[%c1_66, %c1_67, %c0_68] : memref<18x18x8xf32, #tpu.memory_space<vmem>>, vector<16x16x8xf32>
    %64 = vector.shape_cast %63 : vector<16x16x8xf32> to vector<256x8xf32>
    %c4 = arith.constant 4 : index
    %c0_69 = arith.constant 0 : index
    %c0_70 = arith.constant 0 : index
    %65 = vector.load %arg5[%c4, %c0_69, %c0_70] : memref<9x8x8xf32, #tpu.memory_space<vmem>>, vector<1x8x8xf32>
    %66 = vector.shape_cast %65 : vector<1x8x8xf32> to vector<8x8xf32>
    %cst_71 = arith.constant dense<0.000000e+00> : vector<256x8xf32>
    %67 = tpu.matmul %64, %66, %cst_71 {dimension_numbers = #tpu.dot_dimension_numbers<[1], [0], [0], [1], [0, 0, 1, 1], [], []>} : vector<256x8xf32>, vector<8x8xf32>, vector<256x8xf32> -> vector<256x8xf32>
    %68 = arith.addf %62, %67 : vector<256x8xf32>
    %c1_72 = arith.constant 1 : index
    %c2_73 = arith.constant 2 : index
    %c0_74 = arith.constant 0 : index
    %69 = vector.load %arg12[%c1_72, %c2_73, %c0_74] : memref<18x18x8xf32, #tpu.memory_space<vmem>>, vector<16x16x8xf32>
    %70 = vector.shape_cast %69 : vector<16x16x8xf32> to vector<256x8xf32>
    %c5 = arith.constant 5 : index
    %c0_75 = arith.constant 0 : index
    %c0_76 = arith.constant 0 : index
    %71 = vector.load %arg5[%c5, %c0_75, %c0_76] : memref<9x8x8xf32, #tpu.memory_space<vmem>>, vector<1x8x8xf32>
    %72 = vector.shape_cast %71 : vector<1x8x8xf32> to vector<8x8xf32>
    %cst_77 = arith.constant dense<0.000000e+00> : vector<256x8xf32>
    %73 = tpu.matmul %70, %72, %cst_77 {dimension_numbers = #tpu.dot_dimension_numbers<[1], [0], [0], [1], [0, 0, 1, 1], [], []>} : vector<256x8xf32>, vector<8x8xf32>, vector<256x8xf32> -> vector<256x8xf32>
    %74 = arith.addf %68, %73 : vector<256x8xf32>
    %c2_78 = arith.constant 2 : index
    %c0_79 = arith.constant 0 : index
    %c0_80 = arith.constant 0 : index
    %75 = vector.load %arg12[%c2_78, %c0_79, %c0_80] : memref<18x18x8xf32, #tpu.memory_space<vmem>>, vector<16x16x8xf32>
    %76 = vector.shape_cast %75 : vector<16x16x8xf32> to vector<256x8xf32>
    %c6 = arith.constant 6 : index
    %c0_81 = arith.constant 0 : index
    %c0_82 = arith.constant 0 : index
    %77 = vector.load %arg5[%c6, %c0_81, %c0_82] : memref<9x8x8xf32, #tpu.memory_space<vmem>>, vector<1x8x8xf32>
    %78 = vector.shape_cast %77 : vector<1x8x8xf32> to vector<8x8xf32>
    %cst_83 = arith.constant dense<0.000000e+00> : vector<256x8xf32>
    %79 = tpu.matmul %76, %78, %cst_83 {dimension_numbers = #tpu.dot_dimension_numbers<[1], [0], [0], [1], [0, 0, 1, 1], [], []>} : vector<256x8xf32>, vector<8x8xf32>, vector<256x8xf32> -> vector<256x8xf32>
    %80 = arith.addf %74, %79 : vector<256x8xf32>
    %c2_84 = arith.constant 2 : index
    %c1_85 = arith.constant 1 : index
    %c0_86 = arith.constant 0 : index
    %81 = vector.load %arg12[%c2_84, %c1_85, %c0_86] : memref<18x18x8xf32, #tpu.memory_space<vmem>>, vector<16x16x8xf32>
    %82 = vector.shape_cast %81 : vector<16x16x8xf32> to vector<256x8xf32>
    %c7 = arith.constant 7 : index
    %c0_87 = arith.constant 0 : index
    %c0_88 = arith.constant 0 : index
    %83 = vector.load %arg5[%c7, %c0_87, %c0_88] : memref<9x8x8xf32, #tpu.memory_space<vmem>>, vector<1x8x8xf32>
    %84 = vector.shape_cast %83 : vector<1x8x8xf32> to vector<8x8xf32>
    %cst_89 = arith.constant dense<0.000000e+00> : vector<256x8xf32>
    %85 = tpu.matmul %82, %84, %cst_89 {dimension_numbers = #tpu.dot_dimension_numbers<[1], [0], [0], [1], [0, 0, 1, 1], [], []>} : vector<256x8xf32>, vector<8x8xf32>, vector<256x8xf32> -> vector<256x8xf32>
    %86 = arith.addf %80, %85 : vector<256x8xf32>
    %c2_90 = arith.constant 2 : index
    %c2_91 = arith.constant 2 : index
    %c0_92 = arith.constant 0 : index
    %87 = vector.load %arg12[%c2_90, %c2_91, %c0_92] : memref<18x18x8xf32, #tpu.memory_space<vmem>>, vector<16x16x8xf32>
    %88 = vector.shape_cast %87 : vector<16x16x8xf32> to vector<256x8xf32>
    %c8 = arith.constant 8 : index
    %c0_93 = arith.constant 0 : index
    %c0_94 = arith.constant 0 : index
    %89 = vector.load %arg5[%c8, %c0_93, %c0_94] : memref<9x8x8xf32, #tpu.memory_space<vmem>>, vector<1x8x8xf32>
    %90 = vector.shape_cast %89 : vector<1x8x8xf32> to vector<8x8xf32>
    %cst_95 = arith.constant dense<0.000000e+00> : vector<256x8xf32>
    %91 = tpu.matmul %88, %90, %cst_95 {dimension_numbers = #tpu.dot_dimension_numbers<[1], [0], [0], [1], [0, 0, 1, 1], [], []>} : vector<256x8xf32>, vector<8x8xf32>, vector<256x8xf32> -> vector<256x8xf32>
    %92 = arith.addf %86, %91 : vector<256x8xf32>
    %c0_96 = arith.constant 0 : index
    %c0_97 = arith.constant 0 : index
    %93 = vector.load %arg6[%c0_96, %c0_97] : memref<1x8xf32, #tpu.memory_space<vmem>>, vector<1x8xf32>
    %94 = vector.broadcast %93 : vector<1x8xf32> to vector<256x8xf32>
    %95 = arith.mulf %92, %94 : vector<256x8xf32>
    %c0_98 = arith.constant 0 : index
    %c0_99 = arith.constant 0 : index
    %96 = vector.load %arg7[%c0_98, %c0_99] : memref<1x8xf32, #tpu.memory_space<vmem>>, vector<1x8xf32>
    %97 = vector.broadcast %96 : vector<1x8xf32> to vector<256x8xf32>
    %98 = arith.addf %95, %97 : vector<256x8xf32>
    %cst_100 = arith.constant 0.000000e+00 : f32
    %99 = vector.broadcast %cst_100 : f32 to vector<256x8xf32>
    %100 = arith.maximumf %98, %99 : vector<256x8xf32>
    %101 = arith.addf %100, %35 : vector<256x8xf32>
    %cst_101 = arith.constant 0.000000e+00 : f32
    %102 = vector.broadcast %cst_101 : f32 to vector<256x8xf32>
    %103 = arith.maximumf %101, %102 : vector<256x8xf32>
    %104 = vector.shape_cast %103 : vector<256x8xf32> to vector<1x16x16x8xf32>
    %c0_102 = arith.constant 0 : index
    %c0_103 = arith.constant 0 : index
    %c0_104 = arith.constant 0 : index
    %c0_105 = arith.constant 0 : index
    %105 = vector.load %arg11[%c0_102, %c0_103, %c0_104, %c0_105] : memref<1x16x16x8xf32, #tpu.memory_space<vmem>>, vector<1x16x16x8xf32>
    tpu.vector_store %arg11[%c0_102, %c0_103, %c0_104, %c0_105], %104 {strides = array<i32>} : memref<1x16x16x8xf32, #tpu.memory_space<vmem>>, vector<1x16x16x8xf32>,
    return
  }
  func.func @transform_0(%arg0: i32) -> (i32, i32, i32, i32) {
    %c0_i32 = arith.constant 0 : i32
    %c0_i32_0 = arith.constant 0 : i32
    %c0_i32_1 = arith.constant 0 : i32
    %c0_i32_2 = arith.constant 0 : i32
    return %arg0, %c0_i32, %c0_i32_0, %c0_i32_1 : i32, i32, i32, i32
  }
  func.func @transform_1(%arg0: i32) -> (i32, i32, i32) {
    %c0_i32 = arith.constant 0 : i32
    %c0_i32_0 = arith.constant 0 : i32
    %c0_i32_1 = arith.constant 0 : i32
    %c0_i32_2 = arith.constant 0 : i32
    return %c0_i32, %c0_i32_0, %c0_i32_1 : i32, i32, i32
  }
  func.func @transform_2(%arg0: i32) -> (i32, i32) {
    %c0_i32 = arith.constant 0 : i32
    %c0_i32_0 = arith.constant 0 : i32
    %c0_i32_1 = arith.constant 0 : i32
    return %c0_i32, %c0_i32_0 : i32, i32
  }
  func.func @transform_3(%arg0: i32) -> (i32, i32) {
    %c0_i32 = arith.constant 0 : i32
    %c0_i32_0 = arith.constant 0 : i32
    %c0_i32_1 = arith.constant 0 : i32
    return %c0_i32, %c0_i32_0 : i32, i32
  }
  func.func @transform_4(%arg0: i32) -> (i32, i32, i32) {
    %c0_i32 = arith.constant 0 : i32
    %c0_i32_0 = arith.constant 0 : i32
    %c0_i32_1 = arith.constant 0 : i32
    %c0_i32_2 = arith.constant 0 : i32
    return %c0_i32, %c0_i32_0, %c0_i32_1 : i32, i32, i32
  }
  func.func @transform_5(%arg0: i32) -> (i32, i32) {
    %c0_i32 = arith.constant 0 : i32
    %c0_i32_0 = arith.constant 0 : i32
    %c0_i32_1 = arith.constant 0 : i32
    return %c0_i32, %c0_i32_0 : i32, i32
  }
  func.func @transform_6(%arg0: i32) -> (i32, i32) {
    %c0_i32 = arith.constant 0 : i32
    %c0_i32_0 = arith.constant 0 : i32
    %c0_i32_1 = arith.constant 0 : i32
    return %c0_i32, %c0_i32_0 : i32, i32
  }
  func.func @transform_7(%arg0: i32) -> (i32, i32) {
    %c0_i32 = arith.constant 0 : i32
    %c0_i32_0 = arith.constant 0 : i32
    %c0_i32_1 = arith.constant 0 : i32
    return %c0_i32, %c0_i32_0 : i32, i32
  }
  func.func @transform_8(%arg0: i32) -> (i32, i32) {
    %c0_i32 = arith.constant 0 : i32
    %c0_i32_0 = arith.constant 0 : i32
    %c0_i32_1 = arith.constant 0 : i32
    return %c0_i32, %c0_i32_0 : i32, i32
  }
  func.func @transform_9(%arg0: i32) -> (i32, i32) {
    %c0_i32 = arith.constant 0 : i32
    %c0_i32_0 = arith.constant 0 : i32
    %c0_i32_1 = arith.constant 0 : i32
    return %c0_i32, %c0_i32_0 : i32, i32
  }
  func.func @transform_10(%arg0: i32) -> (i32, i32, i32, i32) {
    %c0_i32 = arith.constant 0 : i32
    %c0_i32_0 = arith.constant 0 : i32
    %c0_i32_1 = arith.constant 0 : i32
    %c0_i32_2 = arith.constant 0 : i32
    return %arg0, %c0_i32, %c0_i32_0, %c0_i32_1 : i32, i32, i32, i32
  }
}

</mosaic_0001>

<llo_original>
// kernel: resblock_forward.1
$region0: #{resblock_forward.1}
  #allocation0 [shape = 'u32[]', space=smem, size = 0x4, offset = 0x4, fixed_abs, tag = 'smem constant byte address 0x4 - core index']
  #allocation1 [shape = 'u32[72,128]{1,0:T(1,128)}', space=vmem, size = 0x9000, scoped, tag = 'internal scratch']
  #allocation2 [shape = 'f32[18,18,8]{2,1,0:T(8,128)}', space=vmem, size = 0x36000, scoped, tag = 'scratch operand']
  %s0 = inlined_call_operand.vmem [shape: f32[2,18,16,12], index: 0, kind: input, shape index: {}]
  %s1 = inlined_call_operand.vmem [shape: f32[3,12,8], index: 1, kind: input, shape index: {}]
  %s2 = inlined_call_operand.vmem [shape: f32[1,8], index: 2, kind: input, shape index: {}]
  %s3 = inlined_call_operand.vmem [shape: f32[1,8], index: 3, kind: input, shape index: {}]
  %s4 = inlined_call_operand.vmem [shape: f32[9,8,8], index: 4, kind: input, shape index: {}]
  %s5 = inlined_call_operand.vmem [shape: f32[1,8], index: 5, kind: input, shape index: {}]
  %s6 = inlined_call_operand.vmem [shape: f32[1,8], index: 6, kind: input, shape index: {}]
  %s7 = inlined_call_operand.vmem [shape: f32[12,8], index: 7, kind: input, shape index: {}]
  %s8 = inlined_call_operand.vmem [shape: f32[1,8], index: 8, kind: input, shape index: {}]
  %s9 = inlined_call_operand.vmem [shape: f32[1,8], index: 9, kind: input, shape index: {}]
  %s10 = inlined_call_operand.vmem [shape: f32[2,16,16,8], index: 10, kind: output, shape index: {}]
  %s11 = sld [smem:[#allocation0]]
  $region73: #{resblock_forward.1} parent=0
    _
  %s13 = ssub.s32 1, %s11
  %s14 = scalar_select 0, %s13, %s11
  loop: start=0, step=1, limit=4
  $region2: #{resblock_forward.1} parent=0 // loop_pre_header
    _
  $region3: #{resblock_forward.1} parent=0 // loop_header
    %s16 = sphi 0, %s20
    %p17 = scmp.ge.s32.totalorder %s16, 4
    %s26 = sphi 0, %s28
    %s29 = sphi 0, %s26
    %s30 = sphi 0, %s29
    %s46 = sphi 0, %s30
    %s50 = sphi 0, %s50
    %s52 = sphi 0, %s50
    %s53 = sphi 0, %s52
    %s67 = sphi 0, %s53
    %s71 = sphi 0, %s71
    %s73 = sphi 0, %s71
    %s74 = sphi 0, %s73
    %s88 = sphi 0, %s74
    %s92 = sphi 0, %s92
    %s94 = sphi 0, %s92
    %s95 = sphi 0, %s94
    %s109 = sphi 0, %s95
    %s113 = sphi 0, %s113
    %s115 = sphi 0, %s113
    %s116 = sphi 0, %s115
    %s130 = sphi 0, %s116
    %s134 = sphi 0, %s134
    %s136 = sphi 0, %s134
    %s137 = sphi 0, %s136
    %s151 = sphi 0, %s137
    %s155 = sphi 0, %s155
    %s157 = sphi 0, %s155
    %s158 = sphi 0, %s157
    %s172 = sphi 0, %s158
    %s176 = sphi 0, %s176
    %s178 = sphi 0, %s176
    %s179 = sphi 0, %s178
    %s193 = sphi 0, %s179
    %s197 = sphi 0, %s197
    %s199 = sphi 0, %s197
    %s200 = sphi 0, %s199
    %s214 = sphi 0, %s200
    %s218 = sphi 0, %s218
    %s220 = sphi 0, %s218
    %s221 = sphi 0, %s220
    %s235 = sphi 0, %s221
    %s241 = sphi 0, %s243
    %s244 = sphi 0, %s241
    %s245 = sphi 0, %s244
    %s261 = sphi 0, %s245
  $region4: #{resblock_forward.1} parent=0 // loop_header_branch
    %19 = sbr.rel (%p17) target = $region8
  $region5: #{resblock_forward.1} parent=0 // loop_body
    %s21 = ssub.s32 %s16, 1
    %s22 = ssub.s32 %s16, 2
    %s23 = sadd.s32 %s16, 1
    %s24 = ssub.s32 %s16, %s23
    %p25 = scmp.eq.s32.totalorder %s24, 0
    %s27 = sadd.s32 %s26, 1
    %s28 = scalar_select %p25, %s26, %s27
    %p31 = pneg %p25
    %p32 = scmp.eq.s32.totalorder %s16, 1
    %p33 = por %p31, %p32
    %p34 = scmp.ne.s32.totalorder %s26, %s29
    %p35 = scmp.eq.s32.totalorder %s16, 0
    %p36 = por %p34, %p35
    %p37 = scmp.ne.s32.totalorder %s26, %s29
    %p38 = scmp.eq.s32.totalorder %s21, 1
    %p39 = por %p37, %p38
    %p40 = scmp.ne.s32.totalorder %s29, %s30
    %p41 = scmp.eq.s32.totalorder %s21, 0
    %p42 = por %p40, %p41
    %p43 = scmp.ne.s32.totalorder %s29, %s30
    %p44 = scmp.eq.s32.totalorder %s22, 1
    %p45 = por %p43, %p44
    %p47 = scmp.ne.s32.totalorder %s30, %s46
    %p48 = scmp.eq.s32.totalorder %s22, 0
    %p49 = por %p47, %p48
    %s51 = sadd.s32 %s50, 1
    %p54 = scmp.eq.s32.totalorder %s16, 1
    %p55 = scmp.ne.s32.totalorder %s50, %s52
    %p56 = scmp.eq.s32.totalorder %s16, 0
    %p57 = por %p55, %p56
    %p58 = scmp.ne.s32.totalorder %s50, %s52
    %p59 = scmp.eq.s32.totalorder %s21, 1
    %p60 = por %p58, %p59
    %p61 = scmp.ne.s32.totalorder %s52, %s53
    %p62 = scmp.eq.s32.totalorder %s21, 0
    %p63 = por %p61, %p62
    %p64 = scmp.ne.s32.totalorder %s52, %s53
    %p65 = scmp.eq.s32.totalorder %s22, 1
    %p66 = por %p64, %p65
    %p68 = scmp.ne.s32.totalorder %s53, %s67
    %p69 = scmp.eq.s32.totalorder %s22, 0
    %p70 = por %p68, %p69
    %s72 = sadd.s32 %s71, 1
    %p75 = scmp.eq.s32.totalorder %s16, 1
    %p76 = scmp.ne.s32.totalorder %s71, %s73
    %p77 = scmp.eq.s32.totalorder %s16, 0
    %p78 = por %p76, %p77
    %p79 = scmp.ne.s32.totalorder %s71, %s73
    %p80 = scmp.eq.s32.totalorder %s21, 1
    %p81 = por %p79, %p80
    %p82 = scmp.ne.s32.totalorder %s73, %s74
    %p83 = scmp.eq.s32.totalorder %s21, 0
    %p84 = por %p82, %p83
    %p85 = scmp.ne.s32.totalorder %s73, %s74
    %p86 = scmp.eq.s32.totalorder %s22, 1
    %p87 = por %p85, %p86
    %p89 = scmp.ne.s32.totalorder %s74, %s88
    %p90 = scmp.eq.s32.totalorder %s22, 0
    %p91 = por %p89, %p90
    %s93 = sadd.s32 %s92, 1
    %p96 = scmp.eq.s32.totalorder %s16, 1
    %p97 = scmp.ne.s32.totalorder %s92, %s94
    %p98 = scmp.eq.s32.totalorder %s16, 0
    %p99 = por %p97, %p98
    %p100 = scmp.ne.s32.totalorder %s92, %s94
    %p101 = scmp.eq.s32.totalorder %s21, 1
    %p102 = por %p100, %p101
    %p103 = scmp.ne.s32.totalorder %s94, %s95
    %p104 = scmp.eq.s32.totalorder %s21, 0
    %p105 = por %p103, %p104
    %p106 = scmp.ne.s32.totalorder %s94, %s95
    %p107 = scmp.eq.s32.totalorder %s22, 1
    %p108 = por %p106, %p107
    %p110 = scmp.ne.s32.totalorder %s95, %s109
    %p111 = scmp.eq.s32.totalorder %s22, 0
    %p112 = por %p110, %p111
    %s114 = sadd.s32 %s113, 1
    %p117 = scmp.eq.s32.totalorder %s16, 1
    %p118 = scmp.ne.s32.totalorder %s113, %s115
    %p119 = scmp.eq.s32.totalorder %s16, 0
    %p120 = por %p118, %p119
    %p121 = scmp.ne.s32.totalorder %s113, %s115
    %p122 = scmp.eq.s32.totalorder %s21, 1
    %p123 = por %p121, %p122
    %p124 = scmp.ne.s32.totalorder %s115, %s116
    %p125 = scmp.eq.s32.totalorder %s21, 0
    %p126 = por %p124, %p125
    %p127 = scmp.ne.s32.totalorder %s115, %s116
    %p128 = scmp.eq.s32.totalorder %s22, 1
    %p129 = por %p127, %p128
    %p131 = scmp.ne.s32.totalorder %s116, %s130
    %p132 = scmp.eq.s32.totalorder %s22, 0
    %p133 = por %p131, %p132
    %s135 = sadd.s32 %s134, 1
    %p138 = scmp.eq.s32.totalorder %s16, 1
    %p139 = scmp.ne.s32.totalorder %s134, %s136
    %p140 = scmp.eq.s32.totalorder %s16, 0
    %p141 = por %p139, %p140
    %p142 = scmp.ne.s32.totalorder %s134, %s136
    %p143 = scmp.eq.s32.totalorder %s21, 1
    %p144 = por %p142, %p143
    %p145 = scmp.ne.s32.totalorder %s136, %s137
    %p146 = scmp.eq.s32.totalorder %s21, 0
    %p147 = por %p145, %p146
    %p148 = scmp.ne.s32.totalorder %s136, %s137
    %p149 = scmp.eq.s32.totalorder %s22, 1
    %p150 = por %p148, %p149
    %p152 = scmp.ne.s32.totalorder %s137, %s151
    %p153 = scmp.eq.s32.totalorder %s22, 0
    %p154 = por %p152, %p153
    %s156 = sadd.s32 %s155, 1
    %p159 = scmp.eq.s32.totalorder %s16, 1
    %p160 = scmp.ne.s32.totalorder %s155, %s157
    %p161 = scmp.eq.s32.totalorder %s16, 0
    %p162 = por %p160, %p161
    %p163 = scmp.ne.s32.totalorder %s155, %s157
    %p164 = scmp.eq.s32.totalorder %s21, 1
    %p165 = por %p163, %p164
    %p166 = scmp.ne.s32.totalorder %s157, %s158
    %p167 = scmp.eq.s32.totalorder %s21, 0
    %p168 = por %p166, %p167
    %p169 = scmp.ne.s32.totalorder %s157, %s158
    %p170 = scmp.eq.s32.totalorder %s22, 1
    %p171 = por %p169, %p170
    %p173 = scmp.ne.s32.totalorder %s158, %s172
    %p174 = scmp.eq.s32.totalorder %s22, 0
    %p175 = por %p173, %p174
    %s177 = sadd.s32 %s176, 1
    %p180 = scmp.eq.s32.totalorder %s16, 1
    %p181 = scmp.ne.s32.totalorder %s176, %s178
    %p182 = scmp.eq.s32.totalorder %s16, 0
    %p183 = por %p181, %p182
    %p184 = scmp.ne.s32.totalorder %s176, %s178
    %p185 = scmp.eq.s32.totalorder %s21, 1
    %p186 = por %p184, %p185
    %p187 = scmp.ne.s32.totalorder %s178, %s179
    %p188 = scmp.eq.s32.totalorder %s21, 0
    %p189 = por %p187, %p188
    %p190 = scmp.ne.s32.totalorder %s178, %s179
    %p191 = scmp.eq.s32.totalorder %s22, 1
    %p192 = por %p190, %p191
    %p194 = scmp.ne.s32.totalorder %s179, %s193
    %p195 = scmp.eq.s32.totalorder %s22, 0
    %p196 = por %p194, %p195
    %s198 = sadd.s32 %s197, 1
    %p201 = scmp.eq.s32.totalorder %s16, 1
    %p202 = scmp.ne.s32.totalorder %s197, %s199
    %p203 = scmp.eq.s32.totalorder %s16, 0
    %p204 = por %p202, %p203
    %p205 = scmp.ne.s32.totalorder %s197, %s199
    %p206 = scmp.eq.s32.totalorder %s21, 1
    %p207 = por %p205, %p206
    %p208 = scmp.ne.s32.totalorder %s199, %s200
    %p209 = scmp.eq.s32.totalorder %s21, 0
    %p210 = por %p208, %p209
    %p211 = scmp.ne.s32.totalorder %s199, %s200
    %p212 = scmp.eq.s32.totalorder %s22, 1
    %p213 = por %p211, %p212
    %p215 = scmp.ne.s32.totalorder %s200, %s214
    %p216 = scmp.eq.s32.totalorder %s22, 0
    %p217 = por %p215, %p216
    %s219 = sadd.s32 %s218, 1
    %p222 = scmp.eq.s32.totalorder %s16, 1
    %p223 = scmp.ne.s32.totalorder %s218, %s220
    %p224 = scmp.eq.s32.totalorder %s16, 0
    %p225 = por %p223, %p224
    %p226 = scmp.ne.s32.totalorder %s218, %s220
    %p227 = scmp.eq.s32.totalorder %s21, 1
    %p228 = por %p226, %p227
    %p229 = scmp.ne.s32.totalorder %s220, %s221
    %p230 = scmp.eq.s32.totalorder %s21, 0
    %p231 = por %p229, %p230
    %p232 = scmp.ne.s32.totalorder %s220, %s221
    %p233 = scmp.eq.s32.totalorder %s22, 1
    %p234 = por %p232, %p233
    %p236 = scmp.ne.s32.totalorder %s221, %s235
    %p237 = scmp.eq.s32.totalorder %s22, 0
    %p238 = por %p236, %p237
    %s239 = ssub.s32 %s16, %s23
    %p240 = scmp.eq.s32.totalorder %s239, 0
    %s242 = sadd.s32 %s241, 1
    %s243 = scalar_select %p240, %s241, %s242
    %p246 = pneg %p240
    %p247 = scmp.eq.s32.totalorder %s16, 1
    %p248 = por %p246, %p247
    %p249 = scmp.ne.s32.totalorder %s241, %s244
    %p250 = scmp.eq.s32.totalorder %s16, 0
    %p251 = por %p249, %p250
    %p252 = scmp.ne.s32.totalorder %s241, %s244
    %p253 = scmp.eq.s32.totalorder %s21, 1
    %p254 = por %p252, %p253
    %p255 = scmp.ne.s32.totalorder %s244, %s245
    %p256 = scmp.eq.s32.totalorder %s21, 0
    %p257 = por %p255, %p256
    %p258 = scmp.ne.s32.totalorder %s244, %s245
    %p259 = scmp.eq.s32.totalorder %s22, 1
    %p260 = por %p258, %p259
    %p262 = scmp.ne.s32.totalorder %s245, %s261
    %p263 = scmp.eq.s32.totalorder %s22, 0
    %p264 = por %p262, %p263
    %p265 = scmp.le.s32.totalorder 1, %s16
    %p266 = scmp.lt.s32.totalorder %s16, 3
    %p267 = pnand %p265, %p266
    %p268 = pneg %p267
    // Predicated region
    $region9: #{resblock_forward.1} parent=5 // pred_check
      _
    $region10: #{resblock_forward.1} parent=5 // pred_check_branch
      %270 = sbr.rel (%p267) target = $region12
    $region11: #{resblock_forward.1} parent=5 // pred_region
      %s271 = ssub.s32 %s16, 1
      // Predicated region
      $region13: #{resblock_forward.1} parent=11 // pred_check
        %p272 = pneg %p63
      $region14: #{resblock_forward.1} parent=11 // pred_check_branch
        %274 = sbr.rel (%p272) target = $region16
      $region15: #{resblock_forward.1} parent=11 // pred_region
        _
      $region16: #{resblock_forward.1} parent=11 // pred_fallthru
        _
      // Predicated region
      $region17: #{resblock_forward.1} parent=11 // pred_check
        %p275 = pneg %p84
      $region18: #{resblock_forward.1} parent=11 // pred_check_branch
        %277 = sbr.rel (%p275) target = $region20
      $region19: #{resblock_forward.1} parent=11 // pred_region
        _
      $region20: #{resblock_forward.1} parent=11 // pred_fallthru
        _
      // Predicated region
      $region21: #{resblock_forward.1} parent=11 // pred_check
        %p278 = pneg %p105
      $region22: #{resblock_forward.1} parent=11 // pred_check_branch
        %280 = sbr.rel (%p278) target = $region24
      $region23: #{resblock_forward.1} parent=11 // pred_region
        _
      $region24: #{resblock_forward.1} parent=11 // pred_fallthru
        _
      // Predicated region
      $region25: #{resblock_forward.1} parent=11 // pred_check
        %p281 = pneg %p126
      $region26: #{resblock_forward.1} parent=11 // pred_check_branch
        %283 = sbr.rel (%p281) target = $region28
      $region27: #{resblock_forward.1} parent=11 // pred_region
        _
      $region28: #{resblock_forward.1} parent=11 // pred_fallthru
        _
      // Predicated region
      $region29: #{resblock_forward.1} parent=11 // pred_check
        %p284 = pneg %p147
      $region30: #{resblock_forward.1} parent=11 // pred_check_branch
        %286 = sbr.rel (%p284) target = $region32
      $region31: #{resblock_forward.1} parent=11 // pred_region
        _
      $region32: #{resblock_forward.1} parent=11 // pred_fallthru
        _
      // Predicated region
      $region33: #{resblock_forward.1} parent=11 // pred_check
        %p287 = pneg %p168
      $region34: #{resblock_forward.1} parent=11 // pred_check_branch
        %289 = sbr.rel (%p287) target = $region36
      $region35: #{resblock_forward.1} parent=11 // pred_region
        _
      $region36: #{resblock_forward.1} parent=11 // pred_fallthru
        _
      // Predicated region
      $region37: #{resblock_forward.1} parent=11 // pred_check
        %p290 = pneg %p189
      $region38: #{resblock_forward.1} parent=11 // pred_check_branch
        %292 = sbr.rel (%p290) target = $region40
      $region39: #{resblock_forward.1} parent=11 // pred_region
        _
      $region40: #{resblock_forward.1} parent=11 // pred_fallthru
        _
      // Predicated region
      $region41: #{resblock_forward.1} parent=11 // pred_check
        %p293 = pneg %p210
      $region42: #{resblock_forward.1} parent=11 // pred_check_branch
        %295 = sbr.rel (%p293) target = $region44
      $region43: #{resblock_forward.1} parent=11 // pred_region
        _
      $region44: #{resblock_forward.1} parent=11 // pred_fallthru
        _
      // Predicated region
      $region45: #{resblock_forward.1} parent=11 // pred_check
        %p296 = pneg %p231
      $region46: #{resblock_forward.1} parent=11 // pred_check_branch
        %298 = sbr.rel (%p296) target = $region48
      $region47: #{resblock_forward.1} parent=11 // pred_region
        _
      $region48: #{resblock_forward.1} parent=11 // pred_fallthru
        _
    $region12: #{resblock_forward.1} parent=5 // pred_fallthru
      _
    %p299 = scmp.lt.s32.totalorder %s16, 2
    // Predicated region
    $region49: #{resblock_forward.1} parent=5 // pred_check
      %p300 = pneg %p299
    $region50: #{resblock_forward.1} parent=5 // pred_check_branch
      %302 = sbr.rel (%p300) target = $region52
    $region51: #{resblock_forward.1} parent=5 // pred_region
      // Predicated region
      $region53: #{resblock_forward.1} parent=51 // pred_check
        %p303 = pneg %p36
      $region54: #{resblock_forward.1} parent=51 // pred_check_branch
        %305 = sbr.rel (%p303) target = $region56
      $region55: #{resblock_forward.1} parent=51 // pred_region
        %p306 = scmp.lt.s32.totalorder %s16, 1
        %s307 = scalar_select %p306, %s16, 1
        %s308 = smul.addr %s307, 36
        %s309 = smul.addr %s308, 8
        %s310 = scalar_lea.vmem %s0, %s309
      $region56: #{resblock_forward.1} parent=51 // pred_fallthru
        _
    $region52: #{resblock_forward.1} parent=5 // pred_fallthru
      _
    %p311 = scmp.le.s32.totalorder 1, %s16
    %p312 = scmp.lt.s32.totalorder %s16, 3
    %p313 = pnand %p311, %p312
    %p314 = pneg %p313
    // Predicated region
    $region57: #{resblock_forward.1} parent=5 // pred_check
      _
    $region58: #{resblock_forward.1} parent=5 // pred_check_branch
      %316 = sbr.rel (%p313) target = $region60
    $region59: #{resblock_forward.1} parent=5 // pred_region
      %s317 = ssub.s32 %s16, 1
      %p318 = scmp.lt.s32.totalorder %s21, 1
      %s319 = scalar_select %p318, %s21, 1
      %s320 = smul.addr %s319, 36
      %s321 = smul.addr %s320, 8
      %s322 = scalar_lea.vmem %s0, %s321
      %p323 = pneg %p42
      %p324 = pneg %p39
      %p325 = pneg %p63
      %p326 = pneg %p60
      %p327 = pneg %p84
      %p328 = pneg %p81
      %p329 = pneg %p105
      %p330 = pneg %p102
      %p331 = pneg %p126
      %p332 = pneg %p123
      %p333 = pneg %p147
      %p334 = pneg %p144
      %p335 = pneg %p168
      %p336 = pneg %p165
      %p337 = pneg %p189
      %p338 = pneg %p186
      %p339 = pneg %p210
      %p340 = pneg %p207
      %p341 = pneg %p231
      %p342 = pneg %p228
      %p343 = pneg %p257
      %p344 = pneg %p254
      %p345 = scmp.lt.s32.totalorder %s21, 1
      %s346 = scalar_select %p345, %s21, 1
      %s347 = smul.addr %s346, 32
      %s348 = smul.addr %s347, 8
      %s349 = scalar_lea.vmem %s10, %s348
      %p350 = scmp.lt.s32.totalorder %s21, 1
      %s351 = scalar_select %p350, %s21, 1
      %s352 = smul.addr %s351, 36
      %s353 = smul.addr %s352, 8
      %s354 = scalar_lea.vmem %s0, %s353
      %p355 = scmp.lt.s32.totalorder %s21, 1
      %s356 = scalar_select %p355, %s21, 1
      %s357 = smul.addr %s356, 32
      %s358 = smul.addr %s357, 8
      %s359 = scalar_lea.vmem %s10, %s358
      %v360 = vld [vmem:[%s354] sm:$0xff]
      %v361 = vld [vmem:[%s354 + $0x8] sm:$0xff]
      %v362 = vld [vmem:[%s354 + $0x10] sm:$0xff]
      %v363 = vld [vmem:[%s354 + $0x18] sm:$0xff]
      %v364 = vld [vmem:[%s354 + $0x20] sm:$0xff]
      %v365 = vld [vmem:[%s354 + $0x28] sm:$0xff]
      %v366 = vld [vmem:[%s354 + $0x30] sm:$0xff]
      %v367 = vld [vmem:[%s354 + $0x38] sm:$0xff]
      %v368 = vld [vmem:[%s354 + $0x40] sm:$0xff]
      %v369 = vld [vmem:[%s354 + $0x48] sm:$0xff]
      %v370 = vld [vmem:[%s354 + $0x50] sm:$0xff]
      %v371 = vld [vmem:[%s354 + $0x58] sm:$0xff]
      %v372 = vld [vmem:[%s354 + $0x60] sm:$0xff]
      %v373 = vld [vmem:[%s354 + $0x68] sm:$0xff]
      %v374 = vld [vmem:[%s354 + $0x70] sm:$0xff]
      %v375 = vld [vmem:[%s354 + $0x78] sm:$0xff]
      %v376 = vld [vmem:[%s354 + $0x80] sm:$0xff]
      %v377 = vld [vmem:[%s354 + $0x88] sm:$0xff]
      %v378 = vld [vmem:[%s354 + $0x90] sm:$0xff]
      %v379 = vld [vmem:[%s354 + $0x98] sm:$0xff]
      %v380 = vld [vmem:[%s354 + $0xa0] sm:$0xff]
      %v381 = vld [vmem:[%s354 + $0xa8] sm:$0xff]
      %v382 = vld [vmem:[%s354 + $0xb0] sm:$0xff]
      %v383 = vld [vmem:[%s354 + $0xb8] sm:$0xff]
      %v384 = vld [vmem:[%s354 + $0xc0] sm:$0xff]
      %v385 = vld [vmem:[%s354 + $0xc8] sm:$0xff]
      %v386 = vld [vmem:[%s354 + $0xd0] sm:$0xff]
      %v387 = vld [vmem:[%s354 + $0xd8] sm:$0xff]
      %v388 = vld [vmem:[%s354 + $0xe0] sm:$0xff]
      %v389 = vld [vmem:[%s354 + $0xe8] sm:$0xff]
      %v390 = vld [vmem:[%s354 + $0xf0] sm:$0xff]
      %v391 = vld [vmem:[%s354 + $0xf8] sm:$0xff]
      %s392 = scalar_lea.vmem %s354, 16
      %v393 = vld [vmem:[%s392] sm:$0xff]
      %v394 = vld [vmem:[%s392 + $0x8] sm:$0xff]
      %v395 = vld [vmem:[%s392 + $0x10] sm:$0xff]
      %v396 = vld [vmem:[%s392 + $0x18] sm:$0xff]
      %v397 = vld [vmem:[%s392 + $0x20] sm:$0xff]
      %v398 = vld [vmem:[%s392 + $0x28] sm:$0xff]
      %v399 = vld [vmem:[%s392 + $0x30] sm:$0xff]
      %v400 = vld [vmem:[%s392 + $0x38] sm:$0xff]
      %v401 = vld [vmem:[%s392 + $0x40] sm:$0xff]
      %v402 = vld [vmem:[%s392 + $0x48] sm:$0xff]
      %v403 = vld [vmem:[%s392 + $0x50] sm:$0xff]
      %v404 = vld [vmem:[%s392 + $0x58] sm:$0xff]
      %v405 = vld [vmem:[%s392 + $0x60] sm:$0xff]
      %v406 = vld [vmem:[%s392 + $0x68] sm:$0xff]
      %v407 = vld [vmem:[%s392 + $0x70] sm:$0xff]
      %v408 = vld [vmem:[%s392 + $0x78] sm:$0xff]
      %v409 = vld [vmem:[%s392 + $0x80] sm:$0xff]
      %v410 = vld [vmem:[%s392 + $0x88] sm:$0xff]
      %v411 = vld [vmem:[%s392 + $0x90] sm:$0xff]
      %v412 = vld [vmem:[%s392 + $0x98] sm:$0xff]
      %v413 = vld [vmem:[%s392 + $0xa0] sm:$0xff]
      %v414 = vld [vmem:[%s392 + $0xa8] sm:$0xff]
      %v415 = vld [vmem:[%s392 + $0xb0] sm:$0xff]
      %v416 = vld [vmem:[%s392 + $0xb8] sm:$0xff]
      %v417 = vld [vmem:[%s392 + $0xc0] sm:$0xff]
      %v418 = vld [vmem:[%s392 + $0xc8] sm:$0xff]
      %v419 = vld [vmem:[%s392 + $0xd0] sm:$0xff]
      %v420 = vld [vmem:[%s392 + $0xd8] sm:$0xff]
      %v421 = vld [vmem:[%s392 + $0xe0] sm:$0xff]
      %v422 = vld [vmem:[%s392 + $0xe8] sm:$0xff]
      %v423 = vld [vmem:[%s392 + $0xf0] sm:$0xff]
      %v424 = vld [vmem:[%s392 + $0xf8] sm:$0xff]
      %s425 = scalar_lea.vmem %s354, 32
      %v426 = vld [vmem:[%s425] sm:$0xff]
      %v427 = vld [vmem:[%s425 + $0x8] sm:$0xff]
      %v428 = vld [vmem:[%s425 + $0x10] sm:$0xff]
      %v429 = vld [vmem:[%s425 + $0x18] sm:$0xff]
      %v430 = vld [vmem:[%s425 + $0x20] sm:$0xff]
      %v431 = vld [vmem:[%s425 + $0x28] sm:$0xff]
      %v432 = vld [vmem:[%s425 + $0x30] sm:$0xff]
      %v433 = vld [vmem:[%s425 + $0x38] sm:$0xff]
      %v434 = vld [vmem:[%s425 + $0x40] sm:$0xff]
      %v435 = vld [vmem:[%s425 + $0x48] sm:$0xff]
      %v436 = vld [vmem:[%s425 + $0x50] sm:$0xff]
      %v437 = vld [vmem:[%s425 + $0x58] sm:$0xff]
      %v438 = vld [vmem:[%s425 + $0x60] sm:$0xff]
      %v439 = vld [vmem:[%s425 + $0x68] sm:$0xff]
      %v440 = vld [vmem:[%s425 + $0x70] sm:$0xff]
      %v441 = vld [vmem:[%s425 + $0x78] sm:$0xff]
      %v442 = vld [vmem:[%s425 + $0x80] sm:$0xff]
      %v443 = vld [vmem:[%s425 + $0x88] sm:$0xff]
      %v444 = vld [vmem:[%s425 + $0x90] sm:$0xff]
      %v445 = vld [vmem:[%s425 + $0x98] sm:$0xff]
      %v446 = vld [vmem:[%s425 + $0xa0] sm:$0xff]
      %v447 = vld [vmem:[%s425 + $0xa8] sm:$0xff]
      %v448 = vld [vmem:[%s425 + $0xb0] sm:$0xff]
      %v449 = vld [vmem:[%s425 + $0xb8] sm:$0xff]
      %v450 = vld [vmem:[%s425 + $0xc0] sm:$0xff]
      %v451 = vld [vmem:[%s425 + $0xc8] sm:$0xff]
      %v452 = vld [vmem:[%s425 + $0xd0] sm:$0xff]
      %v453 = vld [vmem:[%s425 + $0xd8] sm:$0xff]
      %v454 = vld [vmem:[%s425 + $0xe0] sm:$0xff]
      %v455 = vld [vmem:[%s425 + $0xe8] sm:$0xff]
      %v456 = vld [vmem:[%s425 + $0xf0] sm:$0xff]
      %v457 = vld [vmem:[%s425 + $0xf8] sm:$0xff]
      %v458 = vld [vmem:[%s1] sm:$0xff]
      %v459 = vld [vmem:[%s1 + $0x8] sm:$0xf]
      %s460 = scalar_lea.vmem %s1, 16
      %v461 = vld [vmem:[%s460] sm:$0xff]
      %v462 = vld [vmem:[%s460 + $0x8] sm:$0xf]
      %vm463 = vcmask 97280
      %v465 = vsel %vm463, %v393, 0
      %v468 = vsel %vm463, %v394, 0
      %v471 = vsel %vm463, %v395, 0
      %v474 = vsel %vm463, %v396, 0
      %v477 = vsel %vm463, %v397, 0
      %v480 = vsel %vm463, %v398, 0
      %v483 = vsel %vm463, %v399, 0
      %v486 = vsel %vm463, %v400, 0
      %v489 = vsel %vm463, %v401, 0
      %v492 = vsel %vm463, %v402, 0
      %v495 = vsel %vm463, %v403, 0
      %v498 = vsel %vm463, %v404, 0
      %v501 = vsel %vm463, %v405, 0
      %v504 = vsel %vm463, %v406, 0
      %v507 = vsel %vm463, %v407, 0
      %v510 = vsel %vm463, %v408, 0
      %v513 = vsel %vm463, %v409, 0
      %v516 = vsel %vm463, %v410, 0
      %v519 = vsel %vm463, %v411, 0
      %v522 = vsel %vm463, %v412, 0
      %v525 = vsel %vm463, %v413, 0
      %v528 = vsel %vm463, %v414, 0
      %v531 = vsel %vm463, %v415, 0
      %v534 = vsel %vm463, %v416, 0
      %v537 = vsel %vm463, %v417, 0
      %v540 = vsel %vm463, %v418, 0
      %v543 = vsel %vm463, %v419, 0
      %v546 = vsel %vm463, %v420, 0
      %v549 = vsel %vm463, %v421, 0
      %v552 = vsel %vm463, %v422, 0
      %v555 = vsel %vm463, %v423, 0
      %v558 = vsel %vm463, %v424, 0
      %vm560 = vcmask 1043456
      %v562 = vsel %vm560, %v462, 0
      %564 = vmatpush.msra.mxu0 0.0
      %565 = vmatpush.msra.mxu0 0.0
      %566 = vmatpush.msra.mxu0 0.0
      %567 = vmatpush.msra.mxu0 0.0
      %568 = vmatpush.msra.mxu0 0.0
      %569 = vmatpush.msra.mxu0 0.0
      %570 = vmatpush.msra.mxu0 0.0
      %571 = vmatpush.msra.mxu0 0.0
      %572 = vmatpush.msra.mxu0 0.0
      %573 = vmatpush.msra.mxu0 0.0
      %574 = vmatpush.msra.mxu0 0.0
      %575 = vmatpush.msra.mxu0 0.0
      %576 = vmatpush.msra.mxu0 0.0
      %577 = vmatpush.msra.mxu0 0.0
      %578 = vmatpush.msra.mxu0 %v562
      %579 = vmatpush.msra.mxu0 %v461
      %580 = vmatmul.f32.gmra.mxu0 %v465
      %v581 = vpop.f32.mrf.mxu0
      %v582 = vadd.f32 0.0, %v581
      %583 = vmatmul.f32.gmra.mxu0 %v468
      %v584 = vpop.f32.mrf.mxu0
      %v585 = vadd.f32 0.0, %v584
      %586 = vmatmul.f32.gmra.mxu0 %v471
      %v587 = vpop.f32.mrf.mxu0
      %v588 = vadd.f32 0.0, %v587
      %589 = vmatmul.f32.gmra.mxu0 %v474
      %v590 = vpop.f32.mrf.mxu0
      %v591 = vadd.f32 0.0, %v590
      %592 = vmatmul.f32.gmra.mxu0 %v477
      %v593 = vpop.f32.mrf.mxu0
      %v594 = vadd.f32 0.0, %v593
      %595 = vmatmul.f32.gmra.mxu0 %v480
      %v596 = vpop.f32.mrf.mxu0
      %v597 = vadd.f32 0.0, %v596
      %598 = vmatmul.f32.gmra.mxu0 %v483
      %v599 = vpop.f32.mrf.mxu0
      %v600 = vadd.f32 0.0, %v599
      %601 = vmatmul.f32.gmra.mxu0 %v486
      %v602 = vpop.f32.mrf.mxu0
      %v603 = vadd.f32 0.0, %v602
      %604 = vmatmul.f32.gmra.mxu0 %v489
      %v605 = vpop.f32.mrf.mxu0
      %v606 = vadd.f32 0.0, %v605
      %607 = vmatmul.f32.gmra.mxu0 %v492
      %v608 = vpop.f32.mrf.mxu0
      %v609 = vadd.f32 0.0, %v608
      %610 = vmatmul.f32.gmra.mxu0 %v495
      %v611 = vpop.f32.mrf.mxu0
      %v612 = vadd.f32 0.0, %v611
      %613 = vmatmul.f32.gmra.mxu0 %v498
      %v614 = vpop.f32.mrf.mxu0
      %v615 = vadd.f32 0.0, %v614
      %616 = vmatmul.f32.gmra.mxu0 %v501
      %v617 = vpop.f32.mrf.mxu0
      %v618 = vadd.f32 0.0, %v617
      %619 = vmatmul.f32.gmra.mxu0 %v504
      %v620 = vpop.f32.mrf.mxu0
      %v621 = vadd.f32 0.0, %v620
      %622 = vmatmul.f32.gmra.mxu0 %v507
      %v623 = vpop.f32.mrf.mxu0
      %v624 = vadd.f32 0.0, %v623
      %625 = vmatmul.f32.gmra.mxu0 %v510
      %v626 = vpop.f32.mrf.mxu0
      %v627 = vadd.f32 0.0, %v626
      %628 = vmatmul.f32.gmra.mxu0 %v513
      %v629 = vpop.f32.mrf.mxu0
      %v630 = vadd.f32 0.0, %v629
      %631 = vmatmul.f32.gmra.mxu0 %v516
      %v632 = vpop.f32.mrf.mxu0
      %v633 = vadd.f32 0.0, %v632
      %634 = vmatmul.f32.gmra.mxu0 %v519
      %v635 = vpop.f32.mrf.mxu0
      %v636 = vadd.f32 0.0, %v635
      %637 = vmatmul.f32.gmra.mxu0 %v522
      %v638 = vpop.f32.mrf.mxu0
      %v639 = vadd.f32 0.0, %v638
      %640 = vmatmul.f32.gmra.mxu0 %v525
      %v641 = vpop.f32.mrf.mxu0
      %v642 = vadd.f32 0.0, %v641
      %643 = vmatmul.f32.gmra.mxu0 %v528
      %v644 = vpop.f32.mrf.mxu0
      %v645 = vadd.f32 0.0, %v644
      %646 = vmatmul.f32.gmra.mxu0 %v531
      %v647 = vpop.f32.mrf.mxu0
      %v648 = vadd.f32 0.0, %v647
      %649 = vmatmul.f32.gmra.mxu0 %v534
      %v650 = vpop.f32.mrf.mxu0
      %v651 = vadd.f32 0.0, %v650
      %652 = vmatmul.f32.gmra.mxu0 %v537
      %v653 = vpop.f32.mrf.mxu0
      %v654 = vadd.f32 0.0, %v653
      %655 = vmatmul.f32.gmra.mxu0 %v540
      %v656 = vpop.f32.mrf.mxu0
      %v657 = vadd.f32 0.0, %v656
      %658 = vmatmul.f32.gmra.mxu0 %v543
      %v659 = vpop.f32.mrf.mxu0
      %v660 = vadd.f32 0.0, %v659
      %661 = vmatmul.f32.gmra.mxu0 %v546
      %v662 = vpop.f32.mrf.mxu0
      %v663 = vadd.f32 0.0, %v662
      %664 = vmatmul.f32.gmra.mxu0 %v549
      %v665 = vpop.f32.mrf.mxu0
      %v666 = vadd.f32 0.0, %v665
      %667 = vmatmul.f32.gmra.mxu0 %v552
      %v668 = vpop.f32.mrf.mxu0
      %v669 = vadd.f32 0.0, %v668
      %670 = vmatmul.f32.gmra.mxu0 %v555
      %v671 = vpop.f32.mrf.mxu0
      %v672 = vadd.f32 0.0, %v671
      %673 = vmatmul.f32.gmra.mxu0 %v558
      %v674 = vpop.f32.mrf.mxu0
      %v675 = vadd.f32 0.0, %v674
      %676 = vdwg.mxu0
      %v678 = vsel %vm463, %v360, 0
      %v681 = vsel %vm463, %v361, 0
      %v684 = vsel %vm463, %v362, 0
      %v687 = vsel %vm463, %v363, 0
      %v690 = vsel %vm463, %v364, 0
      %v693 = vsel %vm463, %v365, 0
      %v696 = vsel %vm463, %v366, 0
      %v699 = vsel %vm463, %v367, 0
      %v702 = vsel %vm463, %v368, 0
      %v705 = vsel %vm463, %v369, 0
      %v708 = vsel %vm463, %v370, 0
      %v711 = vsel %vm463, %v371, 0
      %v714 = vsel %vm463, %v372, 0
      %v717 = vsel %vm463, %v373, 0
      %v720 = vsel %vm463, %v374, 0
      %v723 = vsel %vm463, %v375, 0
      %v726 = vsel %vm463, %v376, 0
      %v729 = vsel %vm463, %v377, 0
      %v732 = vsel %vm463, %v378, 0
      %v735 = vsel %vm463, %v379, 0
      %v738 = vsel %vm463, %v380, 0
      %v741 = vsel %vm463, %v381, 0
      %v744 = vsel %vm463, %v382, 0
      %v747 = vsel %vm463, %v383, 0
      %v750 = vsel %vm463, %v384, 0
      %v753 = vsel %vm463, %v385, 0
      %v756 = vsel %vm463, %v386, 0
      %v759 = vsel %vm463, %v387, 0
      %v762 = vsel %vm463, %v388, 0
      %v765 = vsel %vm463, %v389, 0
      %v768 = vsel %vm463, %v390, 0
      %v771 = vsel %vm463, %v391, 0
      %v774 = vsel %vm560, %v459, 0
      %776 = vmatpush.msra.mxu0 0.0
      %777 = vmatpush.msra.mxu0 0.0
      %778 = vmatpush.msra.mxu0 0.0
      %779 = vmatpush.msra.mxu0 0.0
      %780 = vmatpush.msra.mxu0 0.0
      %781 = vmatpush.msra.mxu0 0.0
      %782 = vmatpush.msra.mxu0 0.0
      %783 = vmatpush.msra.mxu0 0.0
      %784 = vmatpush.msra.mxu0 0.0
      %785 = vmatpush.msra.mxu0 0.0
      %786 = vmatpush.msra.mxu0 0.0
      %787 = vmatpush.msra.mxu0 0.0
      %788 = vmatpush.msra.mxu0 0.0
      %789 = vmatpush.msra.mxu0 0.0
      %790 = vmatpush.msra.mxu0 %v774
      %791 = vmatpush.msra.mxu0 %v458
      %792 = vmatmul.f32.gmra.mxu0 %v678
      %v793 = vpop.f32.mrf.mxu0
      %v794 = vadd.f32 %v582, %v793
      %795 = vmatmul.f32.gmra.mxu0 %v681
      %v796 = vpop.f32.mrf.mxu0
      %v797 = vadd.f32 %v585, %v796
      %798 = vmatmul.f32.gmra.mxu0 %v684
      %v799 = vpop.f32.mrf.mxu0
      %v800 = vadd.f32 %v588, %v799
      %801 = vmatmul.f32.gmra.mxu0 %v687
      %v802 = vpop.f32.mrf.mxu0
      %v803 = vadd.f32 %v591, %v802
      %804 = vmatmul.f32.gmra.mxu0 %v690
      %v805 = vpop.f32.mrf.mxu0
      %v806 = vadd.f32 %v594, %v805
      %807 = vmatmul.f32.gmra.mxu0 %v693
      %v808 = vpop.f32.mrf.mxu0
      %v809 = vadd.f32 %v597, %v808
      %810 = vmatmul.f32.gmra.mxu0 %v696
      %v811 = vpop.f32.mrf.mxu0
      %v812 = vadd.f32 %v600, %v811
      %813 = vmatmul.f32.gmra.mxu0 %v699
      %v814 = vpop.f32.mrf.mxu0
      %v815 = vadd.f32 %v603, %v814
      %816 = vmatmul.f32.gmra.mxu0 %v702
      %v817 = vpop.f32.mrf.mxu0
      %v818 = vadd.f32 %v606, %v817
      %819 = vmatmul.f32.gmra.mxu0 %v705
      %v820 = vpop.f32.mrf.mxu0
      %v821 = vadd.f32 %v609, %v820
      %822 = vmatmul.f32.gmra.mxu0 %v708
      %v823 = vpop.f32.mrf.mxu0
      %v824 = vadd.f32 %v612, %v823
      %825 = vmatmul.f32.gmra.mxu0 %v711
      %v826 = vpop.f32.mrf.mxu0
      %v827 = vadd.f32 %v615, %v826
      %828 = vmatmul.f32.gmra.mxu0 %v714
      %v829 = vpop.f32.mrf.mxu0
      %v830 = vadd.f32 %v618, %v829
      %831 = vmatmul.f32.gmra.mxu0 %v717
      %v832 = vpop.f32.mrf.mxu0
      %v833 = vadd.f32 %v621, %v832
      %834 = vmatmul.f32.gmra.mxu0 %v720
      %v835 = vpop.f32.mrf.mxu0
      %v836 = vadd.f32 %v624, %v835
      %837 = vmatmul.f32.gmra.mxu0 %v723
      %v838 = vpop.f32.mrf.mxu0
      %v839 = vadd.f32 %v627, %v838
      %840 = vmatmul.f32.gmra.mxu0 %v726
      %v841 = vpop.f32.mrf.mxu0
      %v842 = vadd.f32 %v630, %v841
      %843 = vmatmul.f32.gmra.mxu0 %v729
      %v844 = vpop.f32.mrf.mxu0
      %v845 = vadd.f32 %v633, %v844
      %846 = vmatmul.f32.gmra.mxu0 %v732
      %v847 = vpop.f32.mrf.mxu0
      %v848 = vadd.f32 %v636, %v847
      %849 = vmatmul.f32.gmra.mxu0 %v735
      %v850 = vpop.f32.mrf.mxu0
      %v851 = vadd.f32 %v639, %v850
      %852 = vmatmul.f32.gmra.mxu0 %v738
      %v853 = vpop.f32.mrf.mxu0
      %v854 = vadd.f32 %v642, %v853
      %855 = vmatmul.f32.gmra.mxu0 %v741
      %v856 = vpop.f32.mrf.mxu0
      %v857 = vadd.f32 %v645, %v856
      %858 = vmatmul.f32.gmra.mxu0 %v744
      %v859 = vpop.f32.mrf.mxu0
      %v860 = vadd.f32 %v648, %v859
      %861 = vmatmul.f32.gmra.mxu0 %v747
      %v862 = vpop.f32.mrf.mxu0
      %v863 = vadd.f32 %v651, %v862
      %864 = vmatmul.f32.gmra.mxu0 %v750
      %v865 = vpop.f32.mrf.mxu0
      %v866 = vadd.f32 %v654, %v865
      %867 = vmatmul.f32.gmra.mxu0 %v753
      %v868 = vpop.f32.mrf.mxu0
      %v869 = vadd.f32 %v657, %v868
      %870 = vmatmul.f32.gmra.mxu0 %v756
      %v871 = vpop.f32.mrf.mxu0
      %v872 = vadd.f32 %v660, %v871
      %873 = vmatmul.f32.gmra.mxu0 %v759
      %v874 = vpop.f32.mrf.mxu0
      %v875 = vadd.f32 %v663, %v874
      %876 = vmatmul.f32.gmra.mxu0 %v762
      %v877 = vpop.f32.mrf.mxu0
      %v878 = vadd.f32 %v666, %v877
      %879 = vmatmul.f32.gmra.mxu0 %v765
      %v880 = vpop.f32.mrf.mxu0
      %v881 = vadd.f32 %v669, %v880
      %882 = vmatmul.f32.gmra.mxu0 %v768
      %v883 = vpop.f32.mrf.mxu0
      %v884 = vadd.f32 %v672, %v883
      %885 = vmatmul.f32.gmra.mxu0 %v771
      %v886 = vpop.f32.mrf.mxu0
      %v887 = vadd.f32 %v675, %v886
      %888 = vdwg.mxu0
      %s889 = scalar_lea.vmem %s1, 32
      %v890 = vld [vmem:[%s889] sm:$0xff]
      %v891 = vld [vmem:[%s889 + $0x8] sm:$0xf]
      %v893 = vsel %vm463, %v426, 0
      %v896 = vsel %vm463, %v427, 0
      %v899 = vsel %vm463, %v428, 0
      %v902 = vsel %vm463, %v429, 0
      %v905 = vsel %vm463, %v430, 0
      %v908 = vsel %vm463, %v431, 0
      %v911 = vsel %vm463, %v432, 0
      %v914 = vsel %vm463, %v433, 0
      %v917 = vsel %vm463, %v434, 0
      %v920 = vsel %vm463, %v435, 0
      %v923 = vsel %vm463, %v436, 0
      %v926 = vsel %vm463, %v437, 0
      %v929 = vsel %vm463, %v438, 0
      %v932 = vsel %vm463, %v439, 0
      %v935 = vsel %vm463, %v440, 0
      %v938 = vsel %vm463, %v441, 0
      %v941 = vsel %vm463, %v442, 0
      %v944 = vsel %vm463, %v443, 0
      %v947 = vsel %vm463, %v444, 0
      %v950 = vsel %vm463, %v445, 0
      %v953 = vsel %vm463, %v446, 0
      %v956 = vsel %vm463, %v447, 0
      %v959 = vsel %vm463, %v448, 0
      %v962 = vsel %vm463, %v449, 0
      %v965 = vsel %vm463, %v450, 0
      %v968 = vsel %vm463, %v451, 0
      %v971 = vsel %vm463, %v452, 0
      %v974 = vsel %vm463, %v453, 0
      %v977 = vsel %vm463, %v454, 0
      %v980 = vsel %vm463, %v455, 0
      %v983 = vsel %vm463, %v456, 0
      %v986 = vsel %vm463, %v457, 0
      %v989 = vsel %vm560, %v891, 0
      %991 = vmatpush.msra.mxu0 0.0
      %992 = vmatpush.msra.mxu0 0.0
      %993 = vmatpush.msra.mxu0 0.0
      %994 = vmatpush.msra.mxu0 0.0
      %995 = vmatpush.msra.mxu0 0.0
      %996 = vmatpush.msra.mxu0 0.0
      %997 = vmatpush.msra.mxu0 0.0
      %998 = vmatpush.msra.mxu0 0.0
      %999 = vmatpush.msra.mxu0 0.0
      %1000 = vmatpush.msra.mxu0 0.0
      %1001 = vmatpush.msra.mxu0 0.0
      %1002 = vmatpush.msra.mxu0 0.0
      %1003 = vmatpush.msra.mxu0 0.0
      %1004 = vmatpush.msra.mxu0 0.0
      %1005 = vmatpush.msra.mxu0 %v989
      %1006 = vmatpush.msra.mxu0 %v890
      %1007 = vmatmul.f32.gmra.mxu0 %v893
      %v1008 = vpop.f32.mrf.mxu0
      %v1009 = vadd.f32 0.0, %v1008
      %1010 = vmatmul.f32.gmra.mxu0 %v896
      %v1011 = vpop.f32.mrf.mxu0
      %v1012 = vadd.f32 0.0, %v1011
      %1013 = vmatmul.f32.gmra.mxu0 %v899
      %v1014 = vpop.f32.mrf.mxu0
      %v1015 = vadd.f32 0.0, %v1014
      %1016 = vmatmul.f32.gmra.mxu0 %v902
      %v1017 = vpop.f32.mrf.mxu0
      %v1018 = vadd.f32 0.0, %v1017
      %1019 = vmatmul.f32.gmra.mxu0 %v905
      %v1020 = vpop.f32.mrf.mxu0
      %v1021 = vadd.f32 0.0, %v1020
      %1022 = vmatmul.f32.gmra.mxu0 %v908
      %v1023 = vpop.f32.mrf.mxu0
      %v1024 = vadd.f32 0.0, %v1023
      %1025 = vmatmul.f32.gmra.mxu0 %v911
      %v1026 = vpop.f32.mrf.mxu0
      %v1027 = vadd.f32 0.0, %v1026
      %1028 = vmatmul.f32.gmra.mxu0 %v914
      %v1029 = vpop.f32.mrf.mxu0
      %v1030 = vadd.f32 0.0, %v1029
      %1031 = vmatmul.f32.gmra.mxu0 %v917
      %v1032 = vpop.f32.mrf.mxu0
      %v1033 = vadd.f32 0.0, %v1032
      %1034 = vmatmul.f32.gmra.mxu0 %v920
      %v1035 = vpop.f32.mrf.mxu0
      %v1036 = vadd.f32 0.0, %v1035
      %1037 = vmatmul.f32.gmra.mxu0 %v923
      %v1038 = vpop.f32.mrf.mxu0
      %v1039 = vadd.f32 0.0, %v1038
      %1040 = vmatmul.f32.gmra.mxu0 %v926
      %v1041 = vpop.f32.mrf.mxu0
      %v1042 = vadd.f32 0.0, %v1041
      %1043 = vmatmul.f32.gmra.mxu0 %v929
      %v1044 = vpop.f32.mrf.mxu0
      %v1045 = vadd.f32 0.0, %v1044
      %1046 = vmatmul.f32.gmra.mxu0 %v932
      %v1047 = vpop.f32.mrf.mxu0
      %v1048 = vadd.f32 0.0, %v1047
      %1049 = vmatmul.f32.gmra.mxu0 %v935
      %v1050 = vpop.f32.mrf.mxu0
      %v1051 = vadd.f32 0.0, %v1050
      %1052 = vmatmul.f32.gmra.mxu0 %v938
      %v1053 = vpop.f32.mrf.mxu0
      %v1054 = vadd.f32 0.0, %v1053
      %1055 = vmatmul.f32.gmra.mxu0 %v941
      %v1056 = vpop.f32.mrf.mxu0
      %v1057 = vadd.f32 0.0, %v1056
      %1058 = vmatmul.f32.gmra.mxu0 %v944
      %v1059 = vpop.f32.mrf.mxu0
      %v1060 = vadd.f32 0.0, %v1059
      %1061 = vmatmul.f32.gmra.mxu0 %v947
      %v1062 = vpop.f32.mrf.mxu0
      %v1063 = vadd.f32 0.0, %v1062
      %1064 = vmatmul.f32.gmra.mxu0 %v950
      %v1065 = vpop.f32.mrf.mxu0
      %v1066 = vadd.f32 0.0, %v1065
      %1067 = vmatmul.f32.gmra.mxu0 %v953
      %v1068 = vpop.f32.mrf.mxu0
      %v1069 = vadd.f32 0.0, %v1068
      %1070 = vmatmul.f32.gmra.mxu0 %v956
      %v1071 = vpop.f32.mrf.mxu0
      %v1072 = vadd.f32 0.0, %v1071
      %1073 = vmatmul.f32.gmra.mxu0 %v959
      %v1074 = vpop.f32.mrf.mxu0
      %v1075 = vadd.f32 0.0, %v1074
      %1076 = vmatmul.f32.gmra.mxu0 %v962
      %v1077 = vpop.f32.mrf.mxu0
      %v1078 = vadd.f32 0.0, %v1077
      %1079 = vmatmul.f32.gmra.mxu0 %v965
      %v1080 = vpop.f32.mrf.mxu0
      %v1081 = vadd.f32 0.0, %v1080
      %1082 = vmatmul.f32.gmra.mxu0 %v968
      %v1083 = vpop.f32.mrf.mxu0
      %v1084 = vadd.f32 0.0, %v1083
      %1085 = vmatmul.f32.gmra.mxu0 %v971
      %v1086 = vpop.f32.mrf.mxu0
      %v1087 = vadd.f32 0.0, %v1086
      %1088 = vmatmul.f32.gmra.mxu0 %v974
      %v1089 = vpop.f32.mrf.mxu0
      %v1090 = vadd.f32 0.0, %v1089
      %1091 = vmatmul.f32.gmra.mxu0 %v977
      %v1092 = vpop.f32.mrf.mxu0
      %v1093 = vadd.f32 0.0, %v1092
      %1094 = vmatmul.f32.gmra.mxu0 %v980
      %v1095 = vpop.f32.mrf.mxu0
      %v1096 = vadd.f32 0.0, %v1095
      %1097 = vmatmul.f32.gmra.mxu0 %v983
      %v1098 = vpop.f32.mrf.mxu0
      %v1099 = vadd.f32 0.0, %v1098
      %1100 = vmatmul.f32.gmra.mxu0 %v986
      %v1101 = vpop.f32.mrf.mxu0
      %v1102 = vadd.f32 0.0, %v1101
      %1103 = vdwg.mxu0
      %v1104 = vadd.f32 %v794, %v1009
      %v1105 = vadd.f32 %v797, %v1012
      %v1106 = vadd.f32 %v800, %v1015
      %v1107 = vadd.f32 %v803, %v1018
      %v1108 = vadd.f32 %v806, %v1021
      %v1109 = vadd.f32 %v809, %v1024
      %v1110 = vadd.f32 %v812, %v1027
      %v1111 = vadd.f32 %v815, %v1030
      %v1112 = vadd.f32 %v818, %v1033
      %v1113 = vadd.f32 %v821, %v1036
      %v1114 = vadd.f32 %v824, %v1039
      %v1115 = vadd.f32 %v827, %v1042
      %v1116 = vadd.f32 %v830, %v1045
      %v1117 = vadd.f32 %v833, %v1048
      %v1118 = vadd.f32 %v836, %v1051
      %v1119 = vadd.f32 %v839, %v1054
      %v1120 = vadd.f32 %v842, %v1057
      %v1121 = vadd.f32 %v845, %v1060
      %v1122 = vadd.f32 %v848, %v1063
      %v1123 = vadd.f32 %v851, %v1066
      %v1124 = vadd.f32 %v854, %v1069
      %v1125 = vadd.f32 %v857, %v1072
      %v1126 = vadd.f32 %v860, %v1075
      %v1127 = vadd.f32 %v863, %v1078
      %v1128 = vadd.f32 %v866, %v1081
      %v1129 = vadd.f32 %v869, %v1084
      %v1130 = vadd.f32 %v872, %v1087
      %v1131 = vadd.f32 %v875, %v1090
      %v1132 = vadd.f32 %v878, %v1093
      %v1133 = vadd.f32 %v881, %v1096
      %v1134 = vadd.f32 %v884, %v1099
      %v1135 = vadd.f32 %v887, %v1102
      %v1136 = vld [vmem:[%s2] sm:$0x1]
      %v1138 = vperm.slane %v1136, 0
      %v1140 = vmul.f32 %v1104, %v1138
      %v1141 = vmul.f32 %v1105, %v1138
      %v1142 = vmul.f32 %v1106, %v1138
      %v1143 = vmul.f32 %v1107, %v1138
      %v1144 = vmul.f32 %v1108, %v1138
      %v1145 = vmul.f32 %v1109, %v1138
      %v1146 = vmul.f32 %v1110, %v1138
      %v1147 = vmul.f32 %v1111, %v1138
      %v1148 = vmul.f32 %v1112, %v1138
      %v1149 = vmul.f32 %v1113, %v1138
      %v1150 = vmul.f32 %v1114, %v1138
      %v1151 = vmul.f32 %v1115, %v1138
      %v1152 = vmul.f32 %v1116, %v1138
      %v1153 = vmul.f32 %v1117, %v1138
      %v1154 = vmul.f32 %v1118, %v1138
      %v1155 = vmul.f32 %v1119, %v1138
      %v1156 = vmul.f32 %v1120, %v1138
      %v1157 = vmul.f32 %v1121, %v1138
      %v1158 = vmul.f32 %v1122, %v1138
      %v1159 = vmul.f32 %v1123, %v1138
      %v1160 = vmul.f32 %v1124, %v1138
      %v1161 = vmul.f32 %v1125, %v1138
      %v1162 = vmul.f32 %v1126, %v1138
      %v1163 = vmul.f32 %v1127, %v1138
      %v1164 = vmul.f32 %v1128, %v1138
      %v1165 = vmul.f32 %v1129, %v1138
      %v1166 = vmul.f32 %v1130, %v1138
      %v1167 = vmul.f32 %v1131, %v1138
      %v1168 = vmul.f32 %v1132, %v1138
      %v1169 = vmul.f32 %v1133, %v1138
      %v1170 = vmul.f32 %v1134, %v1138
      %v1171 = vmul.f32 %v1135, %v1138
      %v1172 = vld [vmem:[%s3] sm:$0x1]
      %v1174 = vperm.slane %v1172, 0
      %v1176 = vadd.f32 %v1140, %v1174
      %v1177 = vadd.f32 %v1141, %v1174
      %v1178 = vadd.f32 %v1142, %v1174
      %v1179 = vadd.f32 %v1143, %v1174
      %v1180 = vadd.f32 %v1144, %v1174
      %v1181 = vadd.f32 %v1145, %v1174
      %v1182 = vadd.f32 %v1146, %v1174
      %v1183 = vadd.f32 %v1147, %v1174
      %v1184 = vadd.f32 %v1148, %v1174
      %v1185 = vadd.f32 %v1149, %v1174
      %v1186 = vadd.f32 %v1150, %v1174
      %v1187 = vadd.f32 %v1151, %v1174
      %v1188 = vadd.f32 %v1152, %v1174
      %v1189 = vadd.f32 %v1153, %v1174
      %v1190 = vadd.f32 %v1154, %v1174
      %v1191 = vadd.f32 %v1155, %v1174
      %v1192 = vadd.f32 %v1156, %v1174
      %v1193 = vadd.f32 %v1157, %v1174
      %v1194 = vadd.f32 %v1158, %v1174
      %v1195 = vadd.f32 %v1159, %v1174
      %v1196 = vadd.f32 %v1160, %v1174
      %v1197 = vadd.f32 %v1161, %v1174
      %v1198 = vadd.f32 %v1162, %v1174
      %v1199 = vadd.f32 %v1163, %v1174
      %v1200 = vadd.f32 %v1164, %v1174
      %v1201 = vadd.f32 %v1165, %v1174
      %v1202 = vadd.f32 %v1166, %v1174
      %v1203 = vadd.f32 %v1167, %v1174
      %v1204 = vadd.f32 %v1168, %v1174
      %v1205 = vadd.f32 %v1169, %v1174
      %v1206 = vadd.f32 %v1170, %v1174
      %v1207 = vadd.f32 %v1171, %v1174
      %v1208 = vmax.f32 %v1176, 0.0
      %v1209 = vmax.f32 %v1177, 0.0
      %v1210 = vmax.f32 %v1178, 0.0
      %v1211 = vmax.f32 %v1179, 0.0
      %v1212 = vmax.f32 %v1180, 0.0
      %v1213 = vmax.f32 %v1181, 0.0
      %v1214 = vmax.f32 %v1182, 0.0
      %v1215 = vmax.f32 %v1183, 0.0
      %v1216 = vmax.f32 %v1184, 0.0
      %v1217 = vmax.f32 %v1185, 0.0
      %v1218 = vmax.f32 %v1186, 0.0
      %v1219 = vmax.f32 %v1187, 0.0
      %v1220 = vmax.f32 %v1188, 0.0
      %v1221 = vmax.f32 %v1189, 0.0
      %v1222 = vmax.f32 %v1190, 0.0
      %v1223 = vmax.f32 %v1191, 0.0
      %v1224 = vmax.f32 %v1192, 0.0
      %v1225 = vmax.f32 %v1193, 0.0
      %v1226 = vmax.f32 %v1194, 0.0
      %v1227 = vmax.f32 %v1195, 0.0
      %v1228 = vmax.f32 %v1196, 0.0
      %v1229 = vmax.f32 %v1197, 0.0
      %v1230 = vmax.f32 %v1198, 0.0
      %v1231 = vmax.f32 %v1199, 0.0
      %v1232 = vmax.f32 %v1200, 0.0
      %v1233 = vmax.f32 %v1201, 0.0
      %v1234 = vmax.f32 %v1202, 0.0
      %v1235 = vmax.f32 %v1203, 0.0
      %v1236 = vmax.f32 %v1204, 0.0
      %v1237 = vmax.f32 %v1205, 0.0
      %v1238 = vmax.f32 %v1206, 0.0
      %v1239 = vmax.f32 %v1207, 0.0
      %v1240 = vld [vmem:[%s7] sm:$0xff]
      %v1241 = vld [vmem:[%s7 + $0x8] sm:$0xf]
      %v1243 = vsel %vm560, %v1241, 0
      %1245 = vmatpush.msra.mxu0 0.0
      %1246 = vmatpush.msra.mxu0 0.0
      %1247 = vmatpush.msra.mxu0 0.0
      %1248 = vmatpush.msra.mxu0 0.0
      %1249 = vmatpush.msra.mxu0 0.0
      %1250 = vmatpush.msra.mxu0 0.0
      %1251 = vmatpush.msra.mxu0 0.0
      %1252 = vmatpush.msra.mxu0 0.0
      %1253 = vmatpush.msra.mxu0 0.0
      %1254 = vmatpush.msra.mxu0 0.0
      %1255 = vmatpush.msra.mxu0 0.0
      %1256 = vmatpush.msra.mxu0 0.0
      %1257 = vmatpush.msra.mxu0 0.0
      %1258 = vmatpush.msra.mxu0 0.0
      %1259 = vmatpush.msra.mxu0 %v1243
      %1260 = vmatpush.msra.mxu0 %v1240
      %1261 = vmatmul.f32.gmra.mxu0 %v465
      %v1262 = vpop.f32.mrf.mxu0
      %v1263 = vadd.f32 0.0, %v1262
      %1264 = vmatmul.f32.gmra.mxu0 %v468
      %v1265 = vpop.f32.mrf.mxu0
      %v1266 = vadd.f32 0.0, %v1265
      %1267 = vmatmul.f32.gmra.mxu0 %v471
      %v1268 = vpop.f32.mrf.mxu0
      %v1269 = vadd.f32 0.0, %v1268
      %1270 = vmatmul.f32.gmra.mxu0 %v474
      %v1271 = vpop.f32.mrf.mxu0
      %v1272 = vadd.f32 0.0, %v1271
      %1273 = vmatmul.f32.gmra.mxu0 %v477
      %v1274 = vpop.f32.mrf.mxu0
      %v1275 = vadd.f32 0.0, %v1274
      %1276 = vmatmul.f32.gmra.mxu0 %v480
      %v1277 = vpop.f32.mrf.mxu0
      %v1278 = vadd.f32 0.0, %v1277
      %1279 = vmatmul.f32.gmra.mxu0 %v483
      %v1280 = vpop.f32.mrf.mxu0
      %v1281 = vadd.f32 0.0, %v1280
      %1282 = vmatmul.f32.gmra.mxu0 %v486
      %v1283 = vpop.f32.mrf.mxu0
      %v1284 = vadd.f32 0.0, %v1283
      %1285 = vmatmul.f32.gmra.mxu0 %v489
      %v1286 = vpop.f32.mrf.mxu0
      %v1287 = vadd.f32 0.0, %v1286
      %1288 = vmatmul.f32.gmra.mxu0 %v492
      %v1289 = vpop.f32.mrf.mxu0
      %v1290 = vadd.f32 0.0, %v1289
      %1291 = vmatmul.f32.gmra.mxu0 %v495
      %v1292 = vpop.f32.mrf.mxu0
      %v1293 = vadd.f32 0.0, %v1292
      %1294 = vmatmul.f32.gmra.mxu0 %v498
      %v1295 = vpop.f32.mrf.mxu0
      %v1296 = vadd.f32 0.0, %v1295
      %1297 = vmatmul.f32.gmra.mxu0 %v501
      %v1298 = vpop.f32.mrf.mxu0
      %v1299 = vadd.f32 0.0, %v1298
      %1300 = vmatmul.f32.gmra.mxu0 %v504
      %v1301 = vpop.f32.mrf.mxu0
      %v1302 = vadd.f32 0.0, %v1301
      %1303 = vmatmul.f32.gmra.mxu0 %v507
      %v1304 = vpop.f32.mrf.mxu0
      %v1305 = vadd.f32 0.0, %v1304
      %1306 = vmatmul.f32.gmra.mxu0 %v510
      %v1307 = vpop.f32.mrf.mxu0
      %v1308 = vadd.f32 0.0, %v1307
      %1309 = vmatmul.f32.gmra.mxu0 %v513
      %v1310 = vpop.f32.mrf.mxu0
      %v1311 = vadd.f32 0.0, %v1310
      %1312 = vmatmul.f32.gmra.mxu0 %v516
      %v1313 = vpop.f32.mrf.mxu0
      %v1314 = vadd.f32 0.0, %v1313
      %1315 = vmatmul.f32.gmra.mxu0 %v519
      %v1316 = vpop.f32.mrf.mxu0
      %v1317 = vadd.f32 0.0, %v1316
      %1318 = vmatmul.f32.gmra.mxu0 %v522
      %v1319 = vpop.f32.mrf.mxu0
      %v1320 = vadd.f32 0.0, %v1319
      %1321 = vmatmul.f32.gmra.mxu0 %v525
      %v1322 = vpop.f32.mrf.mxu0
      %v1323 = vadd.f32 0.0, %v1322
      %1324 = vmatmul.f32.gmra.mxu0 %v528
      %v1325 = vpop.f32.mrf.mxu0
      %v1326 = vadd.f32 0.0, %v1325
      %1327 = vmatmul.f32.gmra.mxu0 %v531
      %v1328 = vpop.f32.mrf.mxu0
      %v1329 = vadd.f32 0.0, %v1328
      %1330 = vmatmul.f32.gmra.mxu0 %v534
      %v1331 = vpop.f32.mrf.mxu0
      %v1332 = vadd.f32 0.0, %v1331
      %1333 = vmatmul.f32.gmra.mxu0 %v537
      %v1334 = vpop.f32.mrf.mxu0
      %v1335 = vadd.f32 0.0, %v1334
      %1336 = vmatmul.f32.gmra.mxu0 %v540
      %v1337 = vpop.f32.mrf.mxu0
      %v1338 = vadd.f32 0.0, %v1337
      %1339 = vmatmul.f32.gmra.mxu0 %v543
      %v1340 = vpop.f32.mrf.mxu0
      %v1341 = vadd.f32 0.0, %v1340
      %1342 = vmatmul.f32.gmra.mxu0 %v546
      %v1343 = vpop.f32.mrf.mxu0
      %v1344 = vadd.f32 0.0, %v1343
      %1345 = vmatmul.f32.gmra.mxu0 %v549
      %v1346 = vpop.f32.mrf.mxu0
      %v1347 = vadd.f32 0.0, %v1346
      %1348 = vmatmul.f32.gmra.mxu0 %v552
      %v1349 = vpop.f32.mrf.mxu0
      %v1350 = vadd.f32 0.0, %v1349
      %1351 = vmatmul.f32.gmra.mxu0 %v555
      %v1352 = vpop.f32.mrf.mxu0
      %v1353 = vadd.f32 0.0, %v1352
      %1354 = vmatmul.f32.gmra.mxu0 %v558
      %v1355 = vpop.f32.mrf.mxu0
      %v1356 = vadd.f32 0.0, %v1355
      %1357 = vdwg.mxu0
      %v1358 = vld [vmem:[%s8] sm:$0x1]
      %v1360 = vperm.slane %v1358, 0
      %v1362 = vmul.f32 %v1263, %v1360
      %v1363 = vmul.f32 %v1266, %v1360
      %v1364 = vmul.f32 %v1269, %v1360
      %v1365 = vmul.f32 %v1272, %v1360
      %v1366 = vmul.f32 %v1275, %v1360
      %v1367 = vmul.f32 %v1278, %v1360
      %v1368 = vmul.f32 %v1281, %v1360
      %v1369 = vmul.f32 %v1284, %v1360
      %v1370 = vmul.f32 %v1287, %v1360
      %v1371 = vmul.f32 %v1290, %v1360
      %v1372 = vmul.f32 %v1293, %v1360
      %v1373 = vmul.f32 %v1296, %v1360
      %v1374 = vmul.f32 %v1299, %v1360
      %v1375 = vmul.f32 %v1302, %v1360
      %v1376 = vmul.f32 %v1305, %v1360
      %v1377 = vmul.f32 %v1308, %v1360
      %v1378 = vmul.f32 %v1311, %v1360
      %v1379 = vmul.f32 %v1314, %v1360
      %v1380 = vmul.f32 %v1317, %v1360
      %v1381 = vmul.f32 %v1320, %v1360
      %v1382 = vmul.f32 %v1323, %v1360
      %v1383 = vmul.f32 %v1326, %v1360
      %v1384 = vmul.f32 %v1329, %v1360
      %v1385 = vmul.f32 %v1332, %v1360
      %v1386 = vmul.f32 %v1335, %v1360
      %v1387 = vmul.f32 %v1338, %v1360
      %v1388 = vmul.f32 %v1341, %v1360
      %v1389 = vmul.f32 %v1344, %v1360
      %v1390 = vmul.f32 %v1347, %v1360
      %v1391 = vmul.f32 %v1350, %v1360
      %v1392 = vmul.f32 %v1353, %v1360
      %v1393 = vmul.f32 %v1356, %v1360
      %v1394 = vld [vmem:[%s9] sm:$0x1]
      %v1396 = vperm.slane %v1394, 0
      %v1398 = vadd.f32 %v1362, %v1396
      %v1399 = vadd.f32 %v1363, %v1396
      %v1400 = vadd.f32 %v1364, %v1396
      %v1401 = vadd.f32 %v1365, %v1396
      %v1402 = vadd.f32 %v1366, %v1396
      %v1403 = vadd.f32 %v1367, %v1396
      %v1404 = vadd.f32 %v1368, %v1396
      %v1405 = vadd.f32 %v1369, %v1396
      %v1406 = vadd.f32 %v1370, %v1396
      %v1407 = vadd.f32 %v1371, %v1396
      %v1408 = vadd.f32 %v1372, %v1396
      %v1409 = vadd.f32 %v1373, %v1396
      %v1410 = vadd.f32 %v1374, %v1396
      %v1411 = vadd.f32 %v1375, %v1396
      %v1412 = vadd.f32 %v1376, %v1396
      %v1413 = vadd.f32 %v1377, %v1396
      %v1414 = vadd.f32 %v1378, %v1396
      %v1415 = vadd.f32 %v1379, %v1396
      %v1416 = vadd.f32 %v1380, %v1396
      %v1417 = vadd.f32 %v1381, %v1396
      %v1418 = vadd.f32 %v1382, %v1396
      %v1419 = vadd.f32 %v1383, %v1396
      %v1420 = vadd.f32 %v1384, %v1396
      %v1421 = vadd.f32 %v1385, %v1396
      %v1422 = vadd.f32 %v1386, %v1396
      %v1423 = vadd.f32 %v1387, %v1396
      %v1424 = vadd.f32 %v1388, %v1396
      %v1425 = vadd.f32 %v1389, %v1396
      %v1426 = vadd.f32 %v1390, %v1396
      %v1427 = vadd.f32 %v1391, %v1396
      %v1428 = vadd.f32 %v1392, %v1396
      %v1429 = vadd.f32 %v1393, %v1396
      %vm1430 = vcmask 64512
      %1431 = vst.msk [vmem:[#allocation2] sm:$0xff] %vm1430, 0.0
      %1432 = vst.msk [vmem:[#allocation2 + $0x8] sm:$0xff] %vm1430, 0.0
      %vm1433 = vcmask 58368
      %1434 = vst.msk [vmem:[#allocation2 + $0x10] sm:$0x3] %vm1433, 0.0
      %1435 = vst.msk [vmem:[#allocation2 + $0x18] sm:$0xff] %vm1430, 0.0
      %1436 = vst.msk [vmem:[#allocation2 + $0x20] sm:$0xff] %vm1430, 0.0
      %1437 = vst.msk [vmem:[#allocation2 + $0x28] sm:$0x3] %vm1433, 0.0
      %1438 = vst.msk [vmem:[#allocation2 + $0x30] sm:$0xff] %vm1430, 0.0
      %1439 = vst.msk [vmem:[#allocation2 + $0x38] sm:$0xff] %vm1430, 0.0
      %1440 = vst.msk [vmem:[#allocation2 + $0x40] sm:$0x3] %vm1433, 0.0
      %1441 = vst.msk [vmem:[#allocation2 + $0x48] sm:$0xff] %vm1430, 0.0
      %1442 = vst.msk [vmem:[#allocation2 + $0x50] sm:$0xff] %vm1430, 0.0
      %1443 = vst.msk [vmem:[#allocation2 + $0x58] sm:$0x3] %vm1433, 0.0
      %1444 = vst.msk [vmem:[#allocation2 + $0x60] sm:$0xff] %vm1430, 0.0
      %1445 = vst.msk [vmem:[#allocation2 + $0x68] sm:$0xff] %vm1430, 0.0
      %1446 = vst.msk [vmem:[#allocation2 + $0x70] sm:$0x3] %vm1433, 0.0
      %1447 = vst.msk [vmem:[#allocation2 + $0x78] sm:$0xff] %vm1430, 0.0
      %1448 = vst.msk [vmem:[#allocation2 + $0x80] sm:$0xff] %vm1430, 0.0
      %1449 = vst.msk [vmem:[#allocation2 + $0x88] sm:$0x3] %vm1433, 0.0
      %1450 = vst.msk [vmem:[#allocation2 + $0x90] sm:$0xff] %vm1430, 0.0
      %1451 = vst.msk [vmem:[#allocation2 + $0x98] sm:$0xff] %vm1430, 0.0
      %1452 = vst.msk [vmem:[#allocation2 + $0xa0] sm:$0x3] %vm1433, 0.0
      %1453 = vst.msk [vmem:[#allocation2 + $0xa8] sm:$0xff] %vm1430, 0.0
      %1454 = vst.msk [vmem:[#allocation2 + $0xb0] sm:$0xff] %vm1430, 0.0
      %1455 = vst.msk [vmem:[#allocation2 + $0xb8] sm:$0x3] %vm1433, 0.0
      %1456 = vst.msk [vmem:[#allocation2 + $0xc0] sm:$0xff] %vm1430, 0.0
      %1457 = vst.msk [vmem:[#allocation2 + $0xc8] sm:$0xff] %vm1430, 0.0
      %1458 = vst.msk [vmem:[#allocation2 + $0xd0] sm:$0x3] %vm1433, 0.0
      %1459 = vst.msk [vmem:[#allocation2 + $0xd8] sm:$0xff] %vm1430, 0.0
      %1460 = vst.msk [vmem:[#allocation2 + $0xe0] sm:$0xff] %vm1430, 0.0
      %1461 = vst.msk [vmem:[#allocation2 + $0xe8] sm:$0x3] %vm1433, 0.0
      %1462 = vst.msk [vmem:[#allocation2 + $0xf0] sm:$0xff] %vm1430, 0.0
      %1463 = vst.msk [vmem:[#allocation2 + $0xf8] sm:$0xff] %vm1430, 0.0
      %1464 = vst.msk [vmem:[#allocation2 + $0x100] sm:$0x3] %vm1433, 0.0
      %1465 = vst.msk [vmem:[#allocation2 + $0x108] sm:$0xff] %vm1430, 0.0
      %1466 = vst.msk [vmem:[#allocation2 + $0x110] sm:$0xff] %vm1430, 0.0
      %1467 = vst.msk [vmem:[#allocation2 + $0x118] sm:$0x3] %vm1433, 0.0
      %1468 = vst.msk [vmem:[#allocation2 + $0x120] sm:$0xff] %vm1430, 0.0
      %1469 = vst.msk [vmem:[#allocation2 + $0x128] sm:$0xff] %vm1430, 0.0
      %1470 = vst.msk [vmem:[#allocation2 + $0x130] sm:$0x3] %vm1433, 0.0
      %1471 = vst.msk [vmem:[#allocation2 + $0x138] sm:$0xff] %vm1430, 0.0
      %1472 = vst.msk [vmem:[#allocation2 + $0x140] sm:$0xff] %vm1430, 0.0
      %1473 = vst.msk [vmem:[#allocation2 + $0x148] sm:$0x3] %vm1433, 0.0
      %1474 = vst.msk [vmem:[#allocation2 + $0x150] sm:$0xff] %vm1430, 0.0
      %1475 = vst.msk [vmem:[#allocation2 + $0x158] sm:$0xff] %vm1430, 0.0
      %1476 = vst.msk [vmem:[#allocation2 + $0x160] sm:$0x3] %vm1433, 0.0
      %1477 = vst.msk [vmem:[#allocation2 + $0x168] sm:$0xff] %vm1430, 0.0
      %1478 = vst.msk [vmem:[#allocation2 + $0x170] sm:$0xff] %vm1430, 0.0
      %1479 = vst.msk [vmem:[#allocation2 + $0x178] sm:$0x3] %vm1433, 0.0
      %1480 = vst.msk [vmem:[#allocation2 + $0x180] sm:$0xff] %vm1430, 0.0
      %1481 = vst.msk [vmem:[#allocation2 + $0x188] sm:$0xff] %vm1430, 0.0
      %1482 = vst.msk [vmem:[#allocation2 + $0x190] sm:$0x3] %vm1433, 0.0
      %1483 = vst.msk [vmem:[#allocation2 + $0x198] sm:$0xff] %vm1430, 0.0
      %1484 = vst.msk [vmem:[#allocation2 + $0x1a0] sm:$0xff] %vm1430, 0.0
      %1485 = vst.msk [vmem:[#allocation2 + $0x1a8] sm:$0x3] %vm1433, 0.0
      %s1486 = scalar_lea.vmem [#allocation2], 24
      %1487 = vst.msk [vmem:[%s1486 + $0x1] sm:$0xff] %vm1430, %v1208
      %1488 = vst.msk [vmem:[%s1486 + $0x9] sm:$0xff] %vm1430, %v1209
      %1489 = vst.msk [vmem:[%s1486 + $0x19] sm:$0xff] %vm1430, %v1210
      %1490 = vst.msk [vmem:[%s1486 + $0x21] sm:$0xff] %vm1430, %v1211
      %1491 = vst.msk [vmem:[%s1486 + $0x31] sm:$0xff] %vm1430, %v1212
      %1492 = vst.msk [vmem:[%s1486 + $0x39] sm:$0xff] %vm1430, %v1213
      %1493 = vst.msk [vmem:[%s1486 + $0x49] sm:$0xff] %vm1430, %v1214
      %1494 = vst.msk [vmem:[%s1486 + $0x51] sm:$0xff] %vm1430, %v1215
      %1495 = vst.msk [vmem:[%s1486 + $0x61] sm:$0xff] %vm1430, %v1216
      %1496 = vst.msk [vmem:[%s1486 + $0x69] sm:$0xff] %vm1430, %v1217
      %1497 = vst.msk [vmem:[%s1486 + $0x79] sm:$0xff] %vm1430, %v1218
      %1498 = vst.msk [vmem:[%s1486 + $0x81] sm:$0xff] %vm1430, %v1219
      %1499 = vst.msk [vmem:[%s1486 + $0x91] sm:$0xff] %vm1430, %v1220
      %1500 = vst.msk [vmem:[%s1486 + $0x99] sm:$0xff] %vm1430, %v1221
      %1501 = vst.msk [vmem:[%s1486 + $0xa9] sm:$0xff] %vm1430, %v1222
      %1502 = vst.msk [vmem:[%s1486 + $0xb1] sm:$0xff] %vm1430, %v1223
      %1503 = vst.msk [vmem:[%s1486 + $0xc1] sm:$0xff] %vm1430, %v1224
      %1504 = vst.msk [vmem:[%s1486 + $0xc9] sm:$0xff] %vm1430, %v1225
      %1505 = vst.msk [vmem:[%s1486 + $0xd9] sm:$0xff] %vm1430, %v1226
      %1506 = vst.msk [vmem:[%s1486 + $0xe1] sm:$0xff] %vm1430, %v1227
      %1507 = vst.msk [vmem:[%s1486 + $0xf1] sm:$0xff] %vm1430, %v1228
      %1508 = vst.msk [vmem:[%s1486 + $0xf9] sm:$0xff] %vm1430, %v1229
      %1509 = vst.msk [vmem:[%s1486 + $0x109] sm:$0xff] %vm1430, %v1230
      %1510 = vst.msk [vmem:[%s1486 + $0x111] sm:$0xff] %vm1430, %v1231
      %1511 = vst.msk [vmem:[%s1486 + $0x121] sm:$0xff] %vm1430, %v1232
      %1512 = vst.msk [vmem:[%s1486 + $0x129] sm:$0xff] %vm1430, %v1233
      %1513 = vst.msk [vmem:[%s1486 + $0x139] sm:$0xff] %vm1430, %v1234
      %1514 = vst.msk [vmem:[%s1486 + $0x141] sm:$0xff] %vm1430, %v1235
      %1515 = vst.msk [vmem:[%s1486 + $0x151] sm:$0xff] %vm1430, %v1236
      %1516 = vst.msk [vmem:[%s1486 + $0x159] sm:$0xff] %vm1430, %v1237
      %1517 = vst.msk [vmem:[%s1486 + $0x169] sm:$0xff] %vm1430, %v1238
      %1518 = vst.msk [vmem:[%s1486 + $0x171] sm:$0xff] %vm1430, %v1239
      %v1519 = vld [vmem:[#allocation2] sm:$0xff]
      %v1520 = vld [vmem:[#allocation2 + $0x8] sm:$0xff]
      %v1521 = vld [vmem:[#allocation2 + $0x18] sm:$0xff]
      %v1522 = vld [vmem:[#allocation2 + $0x20] sm:$0xff]
      %v1523 = vld [vmem:[#allocation2 + $0x30] sm:$0xff]
      %v1524 = vld [vmem:[#allocation2 + $0x38] sm:$0xff]
      %v1525 = vld [vmem:[#allocation2 + $0x48] sm:$0xff]
      %v1526 = vld [vmem:[#allocation2 + $0x50] sm:$0xff]
      %v1527 = vld [vmem:[#allocation2 + $0x60] sm:$0xff]
      %v1528 = vld [vmem:[#allocation2 + $0x68] sm:$0xff]
      %v1529 = vld [vmem:[#allocation2 + $0x78] sm:$0xff]
      %v1530 = vld [vmem:[#allocation2 + $0x80] sm:$0xff]
      %v1531 = vld [vmem:[#allocation2 + $0x90] sm:$0xff]
      %v1532 = vld [vmem:[#allocation2 + $0x98] sm:$0xff]
      %v1533 = vld [vmem:[#allocation2 + $0xa8] sm:$0xff]
      %v1534 = vld [vmem:[#allocation2 + $0xb0] sm:$0xff]
      %v1535 = vld [vmem:[#allocation2 + $0xc0] sm:$0xff]
      %v1536 = vld [vmem:[#allocation2 + $0xc8] sm:$0xff]
      %v1537 = vld [vmem:[#allocation2 + $0xd8] sm:$0xff]
      %v1538 = vld [vmem:[#allocation2 + $0xe0] sm:$0xff]
      %v1539 = vld [vmem:[#allocation2 + $0xf0] sm:$0xff]
      %v1540 = vld [vmem:[#allocation2 + $0xf8] sm:$0xff]
      %v1541 = vld [vmem:[#allocation2 + $0x108] sm:$0xff]
      %v1542 = vld [vmem:[#allocation2 + $0x110] sm:$0xff]
      %v1543 = vld [vmem:[#allocation2 + $0x120] sm:$0xff]
      %v1544 = vld [vmem:[#allocation2 + $0x128] sm:$0xff]
      %v1545 = vld [vmem:[#allocation2 + $0x138] sm:$0xff]
      %v1546 = vld [vmem:[#allocation2 + $0x140] sm:$0xff]
      %v1547 = vld [vmem:[#allocation2 + $0x150] sm:$0xff]
      %v1548 = vld [vmem:[#allocation2 + $0x158] sm:$0xff]
      %v1549 = vld [vmem:[#allocation2 + $0x168] sm:$0xff]
      %v1550 = vld [vmem:[#allocation2 + $0x170] sm:$0xff]
      %v1551 = vld [vmem:[%s4] sm:$0xff]
      %v1552 = vld [vmem:[#allocation2 + $0x1] sm:$0xff]
      %v1553 = vld [vmem:[#allocation2 + $0x9] sm:$0xff]
      %v1554 = vld [vmem:[#allocation2 + $0x19] sm:$0xff]
      %v1555 = vld [vmem:[#allocation2 + $0x21] sm:$0xff]
      %v1556 = vld [vmem:[#allocation2 + $0x31] sm:$0xff]
      %v1557 = vld [vmem:[#allocation2 + $0x39] sm:$0xff]
      %v1558 = vld [vmem:[#allocation2 + $0x49] sm:$0xff]
      %v1559 = vld [vmem:[#allocation2 + $0x51] sm:$0xff]
      %v1560 = vld [vmem:[#allocation2 + $0x61] sm:$0xff]
      %v1561 = vld [vmem:[#allocation2 + $0x69] sm:$0xff]
      %v1562 = vld [vmem:[#allocation2 + $0x79] sm:$0xff]
      %v1563 = vld [vmem:[#allocation2 + $0x81] sm:$0xff]
      %v1564 = vld [vmem:[#allocation2 + $0x91] sm:$0xff]
      %v1565 = vld [vmem:[#allocation2 + $0x99] sm:$0xff]
      %v1566 = vld [vmem:[#allocation2 + $0xa9] sm:$0xff]
      %v1567 = vld [vmem:[#allocation2 + $0xb1] sm:$0xff]
      %v1568 = vld [vmem:[#allocation2 + $0xc1] sm:$0xff]
      %v1569 = vld [vmem:[#allocation2 + $0xc9] sm:$0xff]
      %v1570 = vld [vmem:[#allocation2 + $0xd9] sm:$0xff]
      %v1571 = vld [vmem:[#allocation2 + $0xe1] sm:$0xff]
      %v1572 = vld [vmem:[#allocation2 + $0xf1] sm:$0xff]
      %v1573 = vld [vmem:[#allocation2 + $0xf9] sm:$0xff]
      %v1574 = vld [vmem:[#allocation2 + $0x109] sm:$0xff]
      %v1575 = vld [vmem:[#allocation2 + $0x111] sm:$0xff]
      %v1576 = vld [vmem:[#allocation2 + $0x121] sm:$0xff]
      %v1577 = vld [vmem:[#allocation2 + $0x129] sm:$0xff]
      %v1578 = vld [vmem:[#allocation2 + $0x139] sm:$0xff]
      %v1579 = vld [vmem:[#allocation2 + $0x141] sm:$0xff]
      %v1580 = vld [vmem:[#allocation2 + $0x151] sm:$0xff]
      %v1581 = vld [vmem:[#allocation2 + $0x159] sm:$0xff]
      %v1582 = vld [vmem:[#allocation2 + $0x169] sm:$0xff]
      %v1583 = vld [vmem:[#allocation2 + $0x171] sm:$0xff]
      %s1584 = scalar_lea.vmem %s4, 8
      %v1585 = vld [vmem:[%s1584] sm:$0xff]
      %v1587 = vsel %vm1430, %v1552, 0
      %v1590 = vsel %vm1430, %v1553, 0
      %v1593 = vsel %vm1430, %v1554, 0
      %v1596 = vsel %vm1430, %v1555, 0
      %v1599 = vsel %vm1430, %v1556, 0
      %v1602 = vsel %vm1430, %v1557, 0
      %v1605 = vsel %vm1430, %v1558, 0
      %v1608 = vsel %vm1430, %v1559, 0
      %v1611 = vsel %vm1430, %v1560, 0
      %v1614 = vsel %vm1430, %v1561, 0
      %v1617 = vsel %vm1430, %v1562, 0
      %v1620 = vsel %vm1430, %v1563, 0
      %v1623 = vsel %vm1430, %v1564, 0
      %v1626 = vsel %vm1430, %v1565, 0
      %v1629 = vsel %vm1430, %v1566, 0
      %v1632 = vsel %vm1430, %v1567, 0
      %v1635 = vsel %vm1430, %v1568, 0
      %v1638 = vsel %vm1430, %v1569, 0
      %v1641 = vsel %vm1430, %v1570, 0
      %v1644 = vsel %vm1430, %v1571, 0
      %v1647 = vsel %vm1430, %v1572, 0
      %v1650 = vsel %vm1430, %v1573, 0
      %v1653 = vsel %vm1430, %v1574, 0
      %v1656 = vsel %vm1430, %v1575, 0
      %v1659 = vsel %vm1430, %v1576, 0
      %v1662 = vsel %vm1430, %v1577, 0
      %v1665 = vsel %vm1430, %v1578, 0
      %v1668 = vsel %vm1430, %v1579, 0
      %v1671 = vsel %vm1430, %v1580, 0
      %v1674 = vsel %vm1430, %v1581, 0
      %v1677 = vsel %vm1430, %v1582, 0
      %v1680 = vsel %vm1430, %v1583, 0
      %1682 = vmatpush.msra.mxu0 0.0
      %1683 = vmatpush.msra.mxu0 0.0
      %1684 = vmatpush.msra.mxu0 0.0
      %1685 = vmatpush.msra.mxu0 0.0
      %1686 = vmatpush.msra.mxu0 0.0
      %1687 = vmatpush.msra.mxu0 0.0
      %1688 = vmatpush.msra.mxu0 0.0
      %1689 = vmatpush.msra.mxu0 0.0
      %1690 = vmatpush.msra.mxu0 0.0
      %1691 = vmatpush.msra.mxu0 0.0
      %1692 = vmatpush.msra.mxu0 0.0
      %1693 = vmatpush.msra.mxu0 0.0
      %1694 = vmatpush.msra.mxu0 0.0
      %1695 = vmatpush.msra.mxu0 0.0
      %1696 = vmatpush.msra.mxu0 0.0
      %1697 = vmatpush.msra.mxu0 %v1585
      %1698 = vmatmul.f32.gmra.mxu0 %v1587
      %v1699 = vpop.f32.mrf.mxu0
      %v1700 = vadd.f32 0.0, %v1699
      %1701 = vmatmul.f32.gmra.mxu0 %v1590
      %v1702 = vpop.f32.mrf.mxu0
      %v1703 = vadd.f32 0.0, %v1702
      %1704 = vmatmul.f32.gmra.mxu0 %v1593
      %v1705 = vpop.f32.mrf.mxu0
      %v1706 = vadd.f32 0.0, %v1705
      %1707 = vmatmul.f32.gmra.mxu0 %v1596
      %v1708 = vpop.f32.mrf.mxu0
      %v1709 = vadd.f32 0.0, %v1708
      %1710 = vmatmul.f32.gmra.mxu0 %v1599
      %v1711 = vpop.f32.mrf.mxu0
      %v1712 = vadd.f32 0.0, %v1711
      %1713 = vmatmul.f32.gmra.mxu0 %v1602
      %v1714 = vpop.f32.mrf.mxu0
      %v1715 = vadd.f32 0.0, %v1714
      %1716 = vmatmul.f32.gmra.mxu0 %v1605
      %v1717 = vpop.f32.mrf.mxu0
      %v1718 = vadd.f32 0.0, %v1717
      %1719 = vmatmul.f32.gmra.mxu0 %v1608
      %v1720 = vpop.f32.mrf.mxu0
      %v1721 = vadd.f32 0.0, %v1720
      %1722 = vmatmul.f32.gmra.mxu0 %v1611
      %v1723 = vpop.f32.mrf.mxu0
      %v1724 = vadd.f32 0.0, %v1723
      %1725 = vmatmul.f32.gmra.mxu0 %v1614
      %v1726 = vpop.f32.mrf.mxu0
      %v1727 = vadd.f32 0.0, %v1726
      %1728 = vmatmul.f32.gmra.mxu0 %v1617
      %v1729 = vpop.f32.mrf.mxu0
      %v1730 = vadd.f32 0.0, %v1729
      %1731 = vmatmul.f32.gmra.mxu0 %v1620
      %v1732 = vpop.f32.mrf.mxu0
      %v1733 = vadd.f32 0.0, %v1732
      %1734 = vmatmul.f32.gmra.mxu0 %v1623
      %v1735 = vpop.f32.mrf.mxu0
      %v1736 = vadd.f32 0.0, %v1735
      %1737 = vmatmul.f32.gmra.mxu0 %v1626
      %v1738 = vpop.f32.mrf.mxu0
      %v1739 = vadd.f32 0.0, %v1738
      %1740 = vmatmul.f32.gmra.mxu0 %v1629
      %v1741 = vpop.f32.mrf.mxu0
      %v1742 = vadd.f32 0.0, %v1741
      %1743 = vmatmul.f32.gmra.mxu0 %v1632
      %v1744 = vpop.f32.mrf.mxu0
      %v1745 = vadd.f32 0.0, %v1744
      %1746 = vmatmul.f32.gmra.mxu0 %v1635
      %v1747 = vpop.f32.mrf.mxu0
      %v1748 = vadd.f32 0.0, %v1747
      %1749 = vmatmul.f32.gmra.mxu0 %v1638
      %v1750 = vpop.f32.mrf.mxu0
      %v1751 = vadd.f32 0.0, %v1750
      %1752 = vmatmul.f32.gmra.mxu0 %v1641
      %v1753 = vpop.f32.mrf.mxu0
      %v1754 = vadd.f32 0.0, %v1753
      %1755 = vmatmul.f32.gmra.mxu0 %v1644
      %v1756 = vpop.f32.mrf.mxu0
      %v1757 = vadd.f32 0.0, %v1756
      %1758 = vmatmul.f32.gmra.mxu0 %v1647
      %v1759 = vpop.f32.mrf.mxu0
      %v1760 = vadd.f32 0.0, %v1759
      %1761 = vmatmul.f32.gmra.mxu0 %v1650
      %v1762 = vpop.f32.mrf.mxu0
      %v1763 = vadd.f32 0.0, %v1762
      %1764 = vmatmul.f32.gmra.mxu0 %v1653
      %v1765 = vpop.f32.mrf.mxu0
      %v1766 = vadd.f32 0.0, %v1765
      %1767 = vmatmul.f32.gmra.mxu0 %v1656
      %v1768 = vpop.f32.mrf.mxu0
      %v1769 = vadd.f32 0.0, %v1768
      %1770 = vmatmul.f32.gmra.mxu0 %v1659
      %v1771 = vpop.f32.mrf.mxu0
      %v1772 = vadd.f32 0.0, %v1771
      %1773 = vmatmul.f32.gmra.mxu0 %v1662
      %v1774 = vpop.f32.mrf.mxu0
      %v1775 = vadd.f32 0.0, %v1774
      %1776 = vmatmul.f32.gmra.mxu0 %v1665
      %v1777 = vpop.f32.mrf.mxu0
      %v1778 = vadd.f32 0.0, %v1777
      %1779 = vmatmul.f32.gmra.mxu0 %v1668
      %v1780 = vpop.f32.mrf.mxu0
      %v1781 = vadd.f32 0.0, %v1780
      %1782 = vmatmul.f32.gmra.mxu0 %v1671
      %v1783 = vpop.f32.mrf.mxu0
      %v1784 = vadd.f32 0.0, %v1783
      %1785 = vmatmul.f32.gmra.mxu0 %v1674
      %v1786 = vpop.f32.mrf.mxu0
      %v1787 = vadd.f32 0.0, %v1786
      %1788 = vmatmul.f32.gmra.mxu0 %v1677
      %v1789 = vpop.f32.mrf.mxu0
      %v1790 = vadd.f32 0.0, %v1789
      %1791 = vmatmul.f32.gmra.mxu0 %v1680
      %v1792 = vpop.f32.mrf.mxu0
      %v1793 = vadd.f32 0.0, %v1792
      %1794 = vdwg.mxu0
      %v1796 = vsel %vm1430, %v1519, 0
      %v1799 = vsel %vm1430, %v1520, 0
      %v1802 = vsel %vm1430, %v1521, 0
      %v1805 = vsel %vm1430, %v1522, 0
      %v1808 = vsel %vm1430, %v1523, 0
      %v1811 = vsel %vm1430, %v1524, 0
      %v1814 = vsel %vm1430, %v1525, 0
      %v1817 = vsel %vm1430, %v1526, 0
      %v1820 = vsel %vm1430, %v1527, 0
      %v1823 = vsel %vm1430, %v1528, 0
      %v1826 = vsel %vm1430, %v1529, 0
      %v1829 = vsel %vm1430, %v1530, 0
      %v1832 = vsel %vm1430, %v1531, 0
      %v1835 = vsel %vm1430, %v1532, 0
      %v1838 = vsel %vm1430, %v1533, 0
      %v1841 = vsel %vm1430, %v1534, 0
      %v1844 = vsel %vm1430, %v1535, 0
      %v1847 = vsel %vm1430, %v1536, 0
      %v1850 = vsel %vm1430, %v1537, 0
      %v1853 = vsel %vm1430, %v1538, 0
      %v1856 = vsel %vm1430, %v1539, 0
      %v1859 = vsel %vm1430, %v1540, 0
      %v1862 = vsel %vm1430, %v1541, 0
      %v1865 = vsel %vm1430, %v1542, 0
      %v1868 = vsel %vm1430, %v1543, 0
      %v1871 = vsel %vm1430, %v1544, 0
      %v1874 = vsel %vm1430, %v1545, 0
      %v1877 = vsel %vm1430, %v1546, 0
      %v1880 = vsel %vm1430, %v1547, 0
      %v1883 = vsel %vm1430, %v1548, 0
      %v1886 = vsel %vm1430, %v1549, 0
      %v1889 = vsel %vm1430, %v1550, 0
      %1891 = vmatpush.msra.mxu0 0.0
      %1892 = vmatpush.msra.mxu0 0.0
      %1893 = vmatpush.msra.mxu0 0.0
      %1894 = vmatpush.msra.mxu0 0.0
      %1895 = vmatpush.msra.mxu0 0.0
      %1896 = vmatpush.msra.mxu0 0.0
      %1897 = vmatpush.msra.mxu0 0.0
      %1898 = vmatpush.msra.mxu0 0.0
      %1899 = vmatpush.msra.mxu0 0.0
      %1900 = vmatpush.msra.mxu0 0.0
      %1901 = vmatpush.msra.mxu0 0.0
      %1902 = vmatpush.msra.mxu0 0.0
      %1903 = vmatpush.msra.mxu0 0.0
      %1904 = vmatpush.msra.mxu0 0.0
      %1905 = vmatpush.msra.mxu0 0.0
      %1906 = vmatpush.msra.mxu0 %v1551
      %1907 = vmatmul.f32.gmra.mxu0 %v1796
      %v1908 = vpop.f32.mrf.mxu0
      %v1909 = vadd.f32 %v1700, %v1908
      %1910 = vmatmul.f32.gmra.mxu0 %v1799
      %v1911 = vpop.f32.mrf.mxu0
      %v1912 = vadd.f32 %v1703, %v1911
      %1913 = vmatmul.f32.gmra.mxu0 %v1802
      %v1914 = vpop.f32.mrf.mxu0
      %v1915 = vadd.f32 %v1706, %v1914
      %1916 = vmatmul.f32.gmra.mxu0 %v1805
      %v1917 = vpop.f32.mrf.mxu0
      %v1918 = vadd.f32 %v1709, %v1917
      %1919 = vmatmul.f32.gmra.mxu0 %v1808
      %v1920 = vpop.f32.mrf.mxu0
      %v1921 = vadd.f32 %v1712, %v1920
      %1922 = vmatmul.f32.gmra.mxu0 %v1811
      %v1923 = vpop.f32.mrf.mxu0
      %v1924 = vadd.f32 %v1715, %v1923
      %1925 = vmatmul.f32.gmra.mxu0 %v1814
      %v1926 = vpop.f32.mrf.mxu0
      %v1927 = vadd.f32 %v1718, %v1926
      %1928 = vmatmul.f32.gmra.mxu0 %v1817
      %v1929 = vpop.f32.mrf.mxu0
      %v1930 = vadd.f32 %v1721, %v1929
      %1931 = vmatmul.f32.gmra.mxu0 %v1820
      %v1932 = vpop.f32.mrf.mxu0
      %v1933 = vadd.f32 %v1724, %v1932
      %1934 = vmatmul.f32.gmra.mxu0 %v1823
      %v1935 = vpop.f32.mrf.mxu0
      %v1936 = vadd.f32 %v1727, %v1935
      %1937 = vmatmul.f32.gmra.mxu0 %v1826
      %v1938 = vpop.f32.mrf.mxu0
      %v1939 = vadd.f32 %v1730, %v1938
      %1940 = vmatmul.f32.gmra.mxu0 %v1829
      %v1941 = vpop.f32.mrf.mxu0
      %v1942 = vadd.f32 %v1733, %v1941
      %1943 = vmatmul.f32.gmra.mxu0 %v1832
      %v1944 = vpop.f32.mrf.mxu0
      %v1945 = vadd.f32 %v1736, %v1944
      %1946 = vmatmul.f32.gmra.mxu0 %v1835
      %v1947 = vpop.f32.mrf.mxu0
      %v1948 = vadd.f32 %v1739, %v1947
      %1949 = vmatmul.f32.gmra.mxu0 %v1838
      %v1950 = vpop.f32.mrf.mxu0
      %v1951 = vadd.f32 %v1742, %v1950
      %1952 = vmatmul.f32.gmra.mxu0 %v1841
      %v1953 = vpop.f32.mrf.mxu0
      %v1954 = vadd.f32 %v1745, %v1953
      %1955 = vmatmul.f32.gmra.mxu0 %v1844
      %v1956 = vpop.f32.mrf.mxu0
      %v1957 = vadd.f32 %v1748, %v1956
      %1958 = vmatmul.f32.gmra.mxu0 %v1847
      %v1959 = vpop.f32.mrf.mxu0
      %v1960 = vadd.f32 %v1751, %v1959
      %1961 = vmatmul.f32.gmra.mxu0 %v1850
      %v1962 = vpop.f32.mrf.mxu0
      %v1963 = vadd.f32 %v1754, %v1962
      %1964 = vmatmul.f32.gmra.mxu0 %v1853
      %v1965 = vpop.f32.mrf.mxu0
      %v1966 = vadd.f32 %v1757, %v1965
      %1967 = vmatmul.f32.gmra.mxu0 %v1856
      %v1968 = vpop.f32.mrf.mxu0
      %v1969 = vadd.f32 %v1760, %v1968
      %1970 = vmatmul.f32.gmra.mxu0 %v1859
      %v1971 = vpop.f32.mrf.mxu0
      %v1972 = vadd.f32 %v1763, %v1971
      %1973 = vmatmul.f32.gmra.mxu0 %v1862
      %v1974 = vpop.f32.mrf.mxu0
      %v1975 = vadd.f32 %v1766, %v1974
      %1976 = vmatmul.f32.gmra.mxu0 %v1865
      %v1977 = vpop.f32.mrf.mxu0
      %v1978 = vadd.f32 %v1769, %v1977
      %1979 = vmatmul.f32.gmra.mxu0 %v1868
      %v1980 = vpop.f32.mrf.mxu0
      %v1981 = vadd.f32 %v1772, %v1980
      %1982 = vmatmul.f32.gmra.mxu0 %v1871
      %v1983 = vpop.f32.mrf.mxu0
      %v1984 = vadd.f32 %v1775, %v1983
      %1985 = vmatmul.f32.gmra.mxu0 %v1874
      %v1986 = vpop.f32.mrf.mxu0
      %v1987 = vadd.f32 %v1778, %v1986
      %1988 = vmatmul.f32.gmra.mxu0 %v1877
      %v1989 = vpop.f32.mrf.mxu0
      %v1990 = vadd.f32 %v1781, %v1989
      %1991 = vmatmul.f32.gmra.mxu0 %v1880
      %v1992 = vpop.f32.mrf.mxu0
      %v1993 = vadd.f32 %v1784, %v1992
      %1994 = vmatmul.f32.gmra.mxu0 %v1883
      %v1995 = vpop.f32.mrf.mxu0
      %v1996 = vadd.f32 %v1787, %v1995
      %1997 = vmatmul.f32.gmra.mxu0 %v1886
      %v1998 = vpop.f32.mrf.mxu0
      %v1999 = vadd.f32 %v1790, %v1998
      %2000 = vmatmul.f32.gmra.mxu0 %v1889
      %v2001 = vpop.f32.mrf.mxu0
      %v2002 = vadd.f32 %v1793, %v2001
      %2003 = vdwg.mxu0
      %v2004 = vld [vmem:[#allocation2 + $0x2] sm:$0xff]
      %v2005 = vld [vmem:[#allocation2 + $0xa] sm:$0xff]
      %v2006 = vld [vmem:[#allocation2 + $0x1a] sm:$0xff]
      %v2007 = vld [vmem:[#allocation2 + $0x22] sm:$0xff]
      %v2008 = vld [vmem:[#allocation2 + $0x32] sm:$0xff]
      %v2009 = vld [vmem:[#allocation2 + $0x3a] sm:$0xff]
      %v2010 = vld [vmem:[#allocation2 + $0x4a] sm:$0xff]
      %v2011 = vld [vmem:[#allocation2 + $0x52] sm:$0xff]
      %v2012 = vld [vmem:[#allocation2 + $0x62] sm:$0xff]
      %v2013 = vld [vmem:[#allocation2 + $0x6a] sm:$0xff]
      %v2014 = vld [vmem:[#allocation2 + $0x7a] sm:$0xff]
      %v2015 = vld [vmem:[#allocation2 + $0x82] sm:$0xff]
      %v2016 = vld [vmem:[#allocation2 + $0x92] sm:$0xff]
      %v2017 = vld [vmem:[#allocation2 + $0x9a] sm:$0xff]
      %v2018 = vld [vmem:[#allocation2 + $0xaa] sm:$0xff]
      %v2019 = vld [vmem:[#allocation2 + $0xb2] sm:$0xff]
      %v2020 = vld [vmem:[#allocation2 + $0xc2] sm:$0xff]
      %v2021 = vld [vmem:[#allocation2 + $0xca] sm:$0xff]
      %v2022 = vld [vmem:[#allocation2 + $0xda] sm:$0xff]
      %v2023 = vld [vmem:[#allocation2 + $0xe2] sm:$0xff]
      %v2024 = vld [vmem:[#allocation2 + $0xf2] sm:$0xff]
      %v2025 = vld [vmem:[#allocation2 + $0xfa] sm:$0xff]
      %v2026 = vld [vmem:[#allocation2 + $0x10a] sm:$0xff]
      %v2027 = vld [vmem:[#allocation2 + $0x112] sm:$0xff]
      %v2028 = vld [vmem:[#allocation2 + $0x122] sm:$0xff]
      %v2029 = vld [vmem:[#allocation2 + $0x12a] sm:$0xff]
      %v2030 = vld [vmem:[#allocation2 + $0x13a] sm:$0xff]
      %v2031 = vld [vmem:[#allocation2 + $0x142] sm:$0xff]
      %v2032 = vld [vmem:[#allocation2 + $0x152] sm:$0xff]
      %v2033 = vld [vmem:[#allocation2 + $0x15a] sm:$0xff]
      %v2034 = vld [vmem:[#allocation2 + $0x16a] sm:$0xff]
      %v2035 = vld [vmem:[#allocation2 + $0x172] sm:$0xff]
      %s2036 = scalar_lea.vmem %s4, 16
      %v2037 = vld [vmem:[%s2036] sm:$0xff]
      %v2039 = vsel %vm1430, %v2004, 0
      %v2042 = vsel %vm1430, %v2005, 0
      %v2045 = vsel %vm1430, %v2006, 0
      %v2048 = vsel %vm1430, %v2007, 0
      %v2051 = vsel %vm1430, %v2008, 0
      %v2054 = vsel %vm1430, %v2009, 0
      %v2057 = vsel %vm1430, %v2010, 0
      %v2060 = vsel %vm1430, %v2011, 0
      %v2063 = vsel %vm1430, %v2012, 0
      %v2066 = vsel %vm1430, %v2013, 0
      %v2069 = vsel %vm1430, %v2014, 0
      %v2072 = vsel %vm1430, %v2015, 0
      %v2075 = vsel %vm1430, %v2016, 0
      %v2078 = vsel %vm1430, %v2017, 0
      %v2081 = vsel %vm1430, %v2018, 0
      %v2084 = vsel %vm1430, %v2019, 0
      %v2087 = vsel %vm1430, %v2020, 0
      %v2090 = vsel %vm1430, %v2021, 0
      %v2093 = vsel %vm1430, %v2022, 0
      %v2096 = vsel %vm1430, %v2023, 0
      %v2099 = vsel %vm1430, %v2024, 0
      %v2102 = vsel %vm1430, %v2025, 0
      %v2105 = vsel %vm1430, %v2026, 0
      %v2108 = vsel %vm1430, %v2027, 0
      %v2111 = vsel %vm1430, %v2028, 0
      %v2114 = vsel %vm1430, %v2029, 0
      %v2117 = vsel %vm1430, %v2030, 0
      %v2120 = vsel %vm1430, %v2031, 0
      %v2123 = vsel %vm1430, %v2032, 0
      %v2126 = vsel %vm1430, %v2033, 0
      %v2129 = vsel %vm1430, %v2034, 0
      %v2132 = vsel %vm1430, %v2035, 0
      %2134 = vmatpush.msra.mxu0 0.0
      %2135 = vmatpush.msra.mxu0 0.0
      %2136 = vmatpush.msra.mxu0 0.0
      %2137 = vmatpush.msra.mxu0 0.0
      %2138 = vmatpush.msra.mxu0 0.0
      %2139 = vmatpush.msra.mxu0 0.0
      %2140 = vmatpush.msra.mxu0 0.0
      %2141 = vmatpush.msra.mxu0 0.0
      %2142 = vmatpush.msra.mxu0 0.0
      %2143 = vmatpush.msra.mxu0 0.0
      %2144 = vmatpush.msra.mxu0 0.0
      %2145 = vmatpush.msra.mxu0 0.0
      %2146 = vmatpush.msra.mxu0 0.0
      %2147 = vmatpush.msra.mxu0 0.0
      %2148 = vmatpush.msra.mxu0 0.0
      %2149 = vmatpush.msra.mxu0 %v2037
      %2150 = vmatmul.f32.gmra.mxu0 %v2039
      %v2151 = vpop.f32.mrf.mxu0
      %v2152 = vadd.f32 0.0, %v2151
      %2153 = vmatmul.f32.gmra.mxu0 %v2042
      %v2154 = vpop.f32.mrf.mxu0
      %v2155 = vadd.f32 0.0, %v2154
      %2156 = vmatmul.f32.gmra.mxu0 %v2045
      %v2157 = vpop.f32.mrf.mxu0
      %v2158 = vadd.f32 0.0, %v2157
      %2159 = vmatmul.f32.gmra.mxu0 %v2048
      %v2160 = vpop.f32.mrf.mxu0
      %v2161 = vadd.f32 0.0, %v2160
      %2162 = vmatmul.f32.gmra.mxu0 %v2051
      %v2163 = vpop.f32.mrf.mxu0
      %v2164 = vadd.f32 0.0, %v2163
      %2165 = vmatmul.f32.gmra.mxu0 %v2054
      %v2166 = vpop.f32.mrf.mxu0
      %v2167 = vadd.f32 0.0, %v2166
      %2168 = vmatmul.f32.gmra.mxu0 %v2057
      %v2169 = vpop.f32.mrf.mxu0
      %v2170 = vadd.f32 0.0, %v2169
      %2171 = vmatmul.f32.gmra.mxu0 %v2060
      %v2172 = vpop.f32.mrf.mxu0
      %v2173 = vadd.f32 0.0, %v2172
      %2174 = vmatmul.f32.gmra.mxu0 %v2063
      %v2175 = vpop.f32.mrf.mxu0
      %v2176 = vadd.f32 0.0, %v2175
      %2177 = vmatmul.f32.gmra.mxu0 %v2066
      %v2178 = vpop.f32.mrf.mxu0
      %v2179 = vadd.f32 0.0, %v2178
      %2180 = vmatmul.f32.gmra.mxu0 %v2069
      %v2181 = vpop.f32.mrf.mxu0
      %v2182 = vadd.f32 0.0, %v2181
      %2183 = vmatmul.f32.gmra.mxu0 %v2072
      %v2184 = vpop.f32.mrf.mxu0
      %v2185 = vadd.f32 0.0, %v2184
      %2186 = vmatmul.f32.gmra.mxu0 %v2075
      %v2187 = vpop.f32.mrf.mxu0
      %v2188 = vadd.f32 0.0, %v2187
      %2189 = vmatmul.f32.gmra.mxu0 %v2078
      %v2190 = vpop.f32.mrf.mxu0
      %v2191 = vadd.f32 0.0, %v2190
      %2192 = vmatmul.f32.gmra.mxu0 %v2081
      %v2193 = vpop.f32.mrf.mxu0
      %v2194 = vadd.f32 0.0, %v2193
      %2195 = vmatmul.f32.gmra.mxu0 %v2084
      %v2196 = vpop.f32.mrf.mxu0
      %v2197 = vadd.f32 0.0, %v2196
      %2198 = vmatmul.f32.gmra.mxu0 %v2087
      %v2199 = vpop.f32.mrf.mxu0
      %v2200 = vadd.f32 0.0, %v2199
      %2201 = vmatmul.f32.gmra.mxu0 %v2090
      %v2202 = vpop.f32.mrf.mxu0
      %v2203 = vadd.f32 0.0, %v2202
      %2204 = vmatmul.f32.gmra.mxu0 %v2093
      %v2205 = vpop.f32.mrf.mxu0
      %v2206 = vadd.f32 0.0, %v2205
      %2207 = vmatmul.f32.gmra.mxu0 %v2096
      %v2208 = vpop.f32.mrf.mxu0
      %v2209 = vadd.f32 0.0, %v2208
      %2210 = vmatmul.f32.gmra.mxu0 %v2099
      %v2211 = vpop.f32.mrf.mxu0
      %v2212 = vadd.f32 0.0, %v2211
      %2213 = vmatmul.f32.gmra.mxu0 %v2102
      %v2214 = vpop.f32.mrf.mxu0
      %v2215 = vadd.f32 0.0, %v2214
      %2216 = vmatmul.f32.gmra.mxu0 %v2105
      %v2217 = vpop.f32.mrf.mxu0
      %v2218 = vadd.f32 0.0, %v2217
      %2219 = vmatmul.f32.gmra.mxu0 %v2108
      %v2220 = vpop.f32.mrf.mxu0
      %v2221 = vadd.f32 0.0, %v2220
      %2222 = vmatmul.f32.gmra.mxu0 %v2111
      %v2223 = vpop.f32.mrf.mxu0
      %v2224 = vadd.f32 0.0, %v2223
      %2225 = vmatmul.f32.gmra.mxu0 %v2114
      %v2226 = vpop.f32.mrf.mxu0
      %v2227 = vadd.f32 0.0, %v2226
      %2228 = vmatmul.f32.gmra.mxu0 %v2117
      %v2229 = vpop.f32.mrf.mxu0
      %v2230 = vadd.f32 0.0, %v2229
      %2231 = vmatmul.f32.gmra.mxu0 %v2120
      %v2232 = vpop.f32.mrf.mxu0
      %v2233 = vadd.f32 0.0, %v2232
      %2234 = vmatmul.f32.gmra.mxu0 %v2123
      %v2235 = vpop.f32.mrf.mxu0
      %v2236 = vadd.f32 0.0, %v2235
      %2237 = vmatmul.f32.gmra.mxu0 %v2126
      %v2238 = vpop.f32.mrf.mxu0
      %v2239 = vadd.f32 0.0, %v2238
      %2240 = vmatmul.f32.gmra.mxu0 %v2129
      %v2241 = vpop.f32.mrf.mxu0
      %v2242 = vadd.f32 0.0, %v2241
      %2243 = vmatmul.f32.gmra.mxu0 %v2132
      %v2244 = vpop.f32.mrf.mxu0
      %v2245 = vadd.f32 0.0, %v2244
      %2246 = vdwg.mxu0
      %v2247 = vadd.f32 %v1909, %v2152
      %v2248 = vadd.f32 %v1912, %v2155
      %v2249 = vadd.f32 %v1915, %v2158
      %v2250 = vadd.f32 %v1918, %v2161
      %v2251 = vadd.f32 %v1921, %v2164
      %v2252 = vadd.f32 %v1924, %v2167
      %v2253 = vadd.f32 %v1927, %v2170
      %v2254 = vadd.f32 %v1930, %v2173
      %v2255 = vadd.f32 %v1933, %v2176
      %v2256 = vadd.f32 %v1936, %v2179
      %v2257 = vadd.f32 %v1939, %v2182
      %v2258 = vadd.f32 %v1942, %v2185
      %v2259 = vadd.f32 %v1945, %v2188
      %v2260 = vadd.f32 %v1948, %v2191
      %v2261 = vadd.f32 %v1951, %v2194
      %v2262 = vadd.f32 %v1954, %v2197
      %v2263 = vadd.f32 %v1957, %v2200
      %v2264 = vadd.f32 %v1960, %v2203
      %v2265 = vadd.f32 %v1963, %v2206
      %v2266 = vadd.f32 %v1966, %v2209
      %v2267 = vadd.f32 %v1969, %v2212
      %v2268 = vadd.f32 %v1972, %v2215
      %v2269 = vadd.f32 %v1975, %v2218
      %v2270 = vadd.f32 %v1978, %v2221
      %v2271 = vadd.f32 %v1981, %v2224
      %v2272 = vadd.f32 %v1984, %v2227
      %v2273 = vadd.f32 %v1987, %v2230
      %v2274 = vadd.f32 %v1990, %v2233
      %v2275 = vadd.f32 %v1993, %v2236
      %v2276 = vadd.f32 %v1996, %v2239
      %v2277 = vadd.f32 %v1999, %v2242
      %v2278 = vadd.f32 %v2002, %v2245
      %v2279 = vld [vmem:[%s1486] sm:$0xff]
      %v2280 = vld [vmem:[%s1486 + $0x8] sm:$0xff]
      %v2281 = vld [vmem:[%s1486 + $0x18] sm:$0xff]
      %v2282 = vld [vmem:[%s1486 + $0x20] sm:$0xff]
      %v2283 = vld [vmem:[%s1486 + $0x30] sm:$0xff]
      %v2284 = vld [vmem:[%s1486 + $0x38] sm:$0xff]
      %v2285 = vld [vmem:[%s1486 + $0x48] sm:$0xff]
      %v2286 = vld [vmem:[%s1486 + $0x50] sm:$0xff]
      %v2287 = vld [vmem:[%s1486 + $0x60] sm:$0xff]
      %v2288 = vld [vmem:[%s1486 + $0x68] sm:$0xff]
      %v2289 = vld [vmem:[%s1486 + $0x78] sm:$0xff]
      %v2290 = vld [vmem:[%s1486 + $0x80] sm:$0xff]
      %v2291 = vld [vmem:[%s1486 + $0x90] sm:$0xff]
      %v2292 = vld [vmem:[%s1486 + $0x98] sm:$0xff]
      %v2293 = vld [vmem:[%s1486 + $0xa8] sm:$0xff]
      %v2294 = vld [vmem:[%s1486 + $0xb0] sm:$0xff]
      %v2295 = vld [vmem:[%s1486 + $0xc0] sm:$0xff]
      %v2296 = vld [vmem:[%s1486 + $0xc8] sm:$0xff]
      %v2297 = vld [vmem:[%s1486 + $0xd8] sm:$0xff]
      %v2298 = vld [vmem:[%s1486 + $0xe0] sm:$0xff]
      %v2299 = vld [vmem:[%s1486 + $0xf0] sm:$0xff]
      %v2300 = vld [vmem:[%s1486 + $0xf8] sm:$0xff]
      %v2301 = vld [vmem:[%s1486 + $0x108] sm:$0xff]
      %v2302 = vld [vmem:[%s1486 + $0x110] sm:$0xff]
      %v2303 = vld [vmem:[%s1486 + $0x120] sm:$0xff]
      %v2304 = vld [vmem:[%s1486 + $0x128] sm:$0xff]
      %v2305 = vld [vmem:[%s1486 + $0x138] sm:$0xff]
      %v2306 = vld [vmem:[%s1486 + $0x140] sm:$0xff]
      %v2307 = vld [vmem:[%s1486 + $0x150] sm:$0xff]
      %v2308 = vld [vmem:[%s1486 + $0x158] sm:$0xff]
      %v2309 = vld [vmem:[%s1486 + $0x168] sm:$0xff]
      %v2310 = vld [vmem:[%s1486 + $0x170] sm:$0xff]
      %s2311 = scalar_lea.vmem %s4, 24
      %v2312 = vld [vmem:[%s2311] sm:$0xff]
      %v2314 = vsel %vm1430, %v2279, 0
      %v2317 = vsel %vm1430, %v2280, 0
      %v2320 = vsel %vm1430, %v2281, 0
      %v2323 = vsel %vm1430, %v2282, 0
      %v2326 = vsel %vm1430, %v2283, 0
      %v2329 = vsel %vm1430, %v2284, 0
      %v2332 = vsel %vm1430, %v2285, 0
      %v2335 = vsel %vm1430, %v2286, 0
      %v2338 = vsel %vm1430, %v2287, 0
      %v2341 = vsel %vm1430, %v2288, 0
      %v2344 = vsel %vm1430, %v2289, 0
      %v2347 = vsel %vm1430, %v2290, 0
      %v2350 = vsel %vm1430, %v2291, 0
      %v2353 = vsel %vm1430, %v2292, 0
      %v2356 = vsel %vm1430, %v2293, 0
      %v2359 = vsel %vm1430, %v2294, 0
      %v2362 = vsel %vm1430, %v2295, 0
      %v2365 = vsel %vm1430, %v2296, 0
      %v2368 = vsel %vm1430, %v2297, 0
      %v2371 = vsel %vm1430, %v2298, 0
      %v2374 = vsel %vm1430, %v2299, 0
      %v2377 = vsel %vm1430, %v2300, 0
      %v2380 = vsel %vm1430, %v2301, 0
      %v2383 = vsel %vm1430, %v2302, 0
      %v2386 = vsel %vm1430, %v2303, 0
      %v2389 = vsel %vm1430, %v2304, 0
      %v2392 = vsel %vm1430, %v2305, 0
      %v2395 = vsel %vm1430, %v2306, 0
      %v2398 = vsel %vm1430, %v2307, 0
      %v2401 = vsel %vm1430, %v2308, 0
      %v2404 = vsel %vm1430, %v2309, 0
      %v2407 = vsel %vm1430, %v2310, 0
      %2409 = vmatpush.msra.mxu0 0.0
      %2410 = vmatpush.msra.mxu0 0.0
      %2411 = vmatpush.msra.mxu0 0.0
      %2412 = vmatpush.msra.mxu0 0.0
      %2413 = vmatpush.msra.mxu0 0.0
      %2414 = vmatpush.msra.mxu0 0.0
      %2415 = vmatpush.msra.mxu0 0.0
      %2416 = vmatpush.msra.mxu0 0.0
      %2417 = vmatpush.msra.mxu0 0.0
      %2418 = vmatpush.msra.mxu0 0.0
      %2419 = vmatpush.msra.mxu0 0.0
      %2420 = vmatpush.msra.mxu0 0.0
      %2421 = vmatpush.msra.mxu0 0.0
      %2422 = vmatpush.msra.mxu0 0.0
      %2423 = vmatpush.msra.mxu0 0.0
      %2424 = vmatpush.msra.mxu0 %v2312
      %2425 = vmatmul.f32.gmra.mxu0 %v2314
      %v2426 = vpop.f32.mrf.mxu0
      %v2427 = vadd.f32 0.0, %v2426
      %2428 = vmatmul.f32.gmra.mxu0 %v2317
      %v2429 = vpop.f32.mrf.mxu0
      %v2430 = vadd.f32 0.0, %v2429
      %2431 = vmatmul.f32.gmra.mxu0 %v2320
      %v2432 = vpop.f32.mrf.mxu0
      %v2433 = vadd.f32 0.0, %v2432
      %2434 = vmatmul.f32.gmra.mxu0 %v2323
      %v2435 = vpop.f32.mrf.mxu0
      %v2436 = vadd.f32 0.0, %v2435
      %2437 = vmatmul.f32.gmra.mxu0 %v2326
      %v2438 = vpop.f32.mrf.mxu0
      %v2439 = vadd.f32 0.0, %v2438
      %2440 = vmatmul.f32.gmra.mxu0 %v2329
      %v2441 = vpop.f32.mrf.mxu0
      %v2442 = vadd.f32 0.0, %v2441
      %2443 = vmatmul.f32.gmra.mxu0 %v2332
      %v2444 = vpop.f32.mrf.mxu0
      %v2445 = vadd.f32 0.0, %v2444
      %2446 = vmatmul.f32.gmra.mxu0 %v2335
      %v2447 = vpop.f32.mrf.mxu0
      %v2448 = vadd.f32 0.0, %v2447
      %2449 = vmatmul.f32.gmra.mxu0 %v2338
      %v2450 = vpop.f32.mrf.mxu0
      %v2451 = vadd.f32 0.0, %v2450
      %2452 = vmatmul.f32.gmra.mxu0 %v2341
      %v2453 = vpop.f32.mrf.mxu0
      %v2454 = vadd.f32 0.0, %v2453
      %2455 = vmatmul.f32.gmra.mxu0 %v2344
      %v2456 = vpop.f32.mrf.mxu0
      %v2457 = vadd.f32 0.0, %v2456
      %2458 = vmatmul.f32.gmra.mxu0 %v2347
      %v2459 = vpop.f32.mrf.mxu0
      %v2460 = vadd.f32 0.0, %v2459
      %2461 = vmatmul.f32.gmra.mxu0 %v2350
      %v2462 = vpop.f32.mrf.mxu0
      %v2463 = vadd.f32 0.0, %v2462
      %2464 = vmatmul.f32.gmra.mxu0 %v2353
      %v2465 = vpop.f32.mrf.mxu0
      %v2466 = vadd.f32 0.0, %v2465
      %2467 = vmatmul.f32.gmra.mxu0 %v2356
      %v2468 = vpop.f32.mrf.mxu0
      %v2469 = vadd.f32 0.0, %v2468
      %2470 = vmatmul.f32.gmra.mxu0 %v2359
      %v2471 = vpop.f32.mrf.mxu0
      %v2472 = vadd.f32 0.0, %v2471
      %2473 = vmatmul.f32.gmra.mxu0 %v2362
      %v2474 = vpop.f32.mrf.mxu0
      %v2475 = vadd.f32 0.0, %v2474
      %2476 = vmatmul.f32.gmra.mxu0 %v2365
      %v2477 = vpop.f32.mrf.mxu0
      %v2478 = vadd.f32 0.0, %v2477
      %2479 = vmatmul.f32.gmra.mxu0 %v2368
      %v2480 = vpop.f32.mrf.mxu0
      %v2481 = vadd.f32 0.0, %v2480
      %2482 = vmatmul.f32.gmra.mxu0 %v2371
      %v2483 = vpop.f32.mrf.mxu0
      %v2484 = vadd.f32 0.0, %v2483
      %2485 = vmatmul.f32.gmra.mxu0 %v2374
      %v2486 = vpop.f32.mrf.mxu0
      %v2487 = vadd.f32 0.0, %v2486
      %2488 = vmatmul.f32.gmra.mxu0 %v2377
      %v2489 = vpop.f32.mrf.mxu0
      %v2490 = vadd.f32 0.0, %v2489
      %2491 = vmatmul.f32.gmra.mxu0 %v2380
      %v2492 = vpop.f32.mrf.mxu0
      %v2493 = vadd.f32 0.0, %v2492
      %2494 = vmatmul.f32.gmra.mxu0 %v2383
      %v2495 = vpop.f32.mrf.mxu0
      %v2496 = vadd.f32 0.0, %v2495
      %2497 = vmatmul.f32.gmra.mxu0 %v2386
      %v2498 = vpop.f32.mrf.mxu0
      %v2499 = vadd.f32 0.0, %v2498
      %2500 = vmatmul.f32.gmra.mxu0 %v2389
      %v2501 = vpop.f32.mrf.mxu0
      %v2502 = vadd.f32 0.0, %v2501
      %2503 = vmatmul.f32.gmra.mxu0 %v2392
      %v2504 = vpop.f32.mrf.mxu0
      %v2505 = vadd.f32 0.0, %v2504
      %2506 = vmatmul.f32.gmra.mxu0 %v2395
      %v2507 = vpop.f32.mrf.mxu0
      %v2508 = vadd.f32 0.0, %v2507
      %2509 = vmatmul.f32.gmra.mxu0 %v2398
      %v2510 = vpop.f32.mrf.mxu0
      %v2511 = vadd.f32 0.0, %v2510
      %2512 = vmatmul.f32.gmra.mxu0 %v2401
      %v2513 = vpop.f32.mrf.mxu0
      %v2514 = vadd.f32 0.0, %v2513
      %2515 = vmatmul.f32.gmra.mxu0 %v2404
      %v2516 = vpop.f32.mrf.mxu0
      %v2517 = vadd.f32 0.0, %v2516
      %2518 = vmatmul.f32.gmra.mxu0 %v2407
      %v2519 = vpop.f32.mrf.mxu0
      %v2520 = vadd.f32 0.0, %v2519
      %2521 = vdwg.mxu0
      %v2522 = vadd.f32 %v2247, %v2427
      %v2523 = vadd.f32 %v2248, %v2430
      %v2524 = vadd.f32 %v2249, %v2433
      %v2525 = vadd.f32 %v2250, %v2436
      %v2526 = vadd.f32 %v2251, %v2439
      %v2527 = vadd.f32 %v2252, %v2442
      %v2528 = vadd.f32 %v2253, %v2445
      %v2529 = vadd.f32 %v2254, %v2448
      %v2530 = vadd.f32 %v2255, %v2451
      %v2531 = vadd.f32 %v2256, %v2454
      %v2532 = vadd.f32 %v2257, %v2457
      %v2533 = vadd.f32 %v2258, %v2460
      %v2534 = vadd.f32 %v2259, %v2463
      %v2535 = vadd.f32 %v2260, %v2466
      %v2536 = vadd.f32 %v2261, %v2469
      %v2537 = vadd.f32 %v2262, %v2472
      %v2538 = vadd.f32 %v2263, %v2475
      %v2539 = vadd.f32 %v2264, %v2478
      %v2540 = vadd.f32 %v2265, %v2481
      %v2541 = vadd.f32 %v2266, %v2484
      %v2542 = vadd.f32 %v2267, %v2487
      %v2543 = vadd.f32 %v2268, %v2490
      %v2544 = vadd.f32 %v2269, %v2493
      %v2545 = vadd.f32 %v2270, %v2496
      %v2546 = vadd.f32 %v2271, %v2499
      %v2547 = vadd.f32 %v2272, %v2502
      %v2548 = vadd.f32 %v2273, %v2505
      %v2549 = vadd.f32 %v2274, %v2508
      %v2550 = vadd.f32 %v2275, %v2511
      %v2551 = vadd.f32 %v2276, %v2514
      %v2552 = vadd.f32 %v2277, %v2517
      %v2553 = vadd.f32 %v2278, %v2520
      %v2554 = vld [vmem:[%s1486 + $0x1] sm:$0xff]
      %v2555 = vld [vmem:[%s1486 + $0x9] sm:$0xff]
      %v2556 = vld [vmem:[%s1486 + $0x19] sm:$0xff]
      %v2557 = vld [vmem:[%s1486 + $0x21] sm:$0xff]
      %v2558 = vld [vmem:[%s1486 + $0x31] sm:$0xff]
      %v2559 = vld [vmem:[%s1486 + $0x39] sm:$0xff]
      %v2560 = vld [vmem:[%s1486 + $0x49] sm:$0xff]
      %v2561 = vld [vmem:[%s1486 + $0x51] sm:$0xff]
      %v2562 = vld [vmem:[%s1486 + $0x61] sm:$0xff]
      %v2563 = vld [vmem:[%s1486 + $0x69] sm:$0xff]
      %v2564 = vld [vmem:[%s1486 + $0x79] sm:$0xff]
      %v2565 = vld [vmem:[%s1486 + $0x81] sm:$0xff]
      %v2566 = vld [vmem:[%s1486 + $0x91] sm:$0xff]
      %v2567 = vld [vmem:[%s1486 + $0x99] sm:$0xff]
      %v2568 = vld [vmem:[%s1486 + $0xa9] sm:$0xff]
      %v2569 = vld [vmem:[%s1486 + $0xb1] sm:$0xff]
      %v2570 = vld [vmem:[%s1486 + $0xc1] sm:$0xff]
      %v2571 = vld [vmem:[%s1486 + $0xc9] sm:$0xff]
      %v2572 = vld [vmem:[%s1486 + $0xd9] sm:$0xff]
      %v2573 = vld [vmem:[%s1486 + $0xe1] sm:$0xff]
      %v2574 = vld [vmem:[%s1486 + $0xf1] sm:$0xff]
      %v2575 = vld [vmem:[%s1486 + $0xf9] sm:$0xff]
      %v2576 = vld [vmem:[%s1486 + $0x109] sm:$0xff]
      %v2577 = vld [vmem:[%s1486 + $0x111] sm:$0xff]
      %v2578 = vld [vmem:[%s1486 + $0x121] sm:$0xff]
      %v2579 = vld [vmem:[%s1486 + $0x129] sm:$0xff]
      %v2580 = vld [vmem:[%s1486 + $0x139] sm:$0xff]
      %v2581 = vld [vmem:[%s1486 + $0x141] sm:$0xff]
      %v2582 = vld [vmem:[%s1486 + $0x151] sm:$0xff]
      %v2583 = vld [vmem:[%s1486 + $0x159] sm:$0xff]
      %v2584 = vld [vmem:[%s1486 + $0x169] sm:$0xff]
      %v2585 = vld [vmem:[%s1486 + $0x171] sm:$0xff]
      %s2586 = scalar_lea.vmem %s4, 32
      %v2587 = vld [vmem:[%s2586] sm:$0xff]
      %v2589 = vsel %vm1430, %v2554, 0
      %v2592 = vsel %vm1430, %v2555, 0
      %v2595 = vsel %vm1430, %v2556, 0
      %v2598 = vsel %vm1430, %v2557, 0
      %v2601 = vsel %vm1430, %v2558, 0
      %v2604 = vsel %vm1430, %v2559, 0
      %v2607 = vsel %vm1430, %v2560, 0
      %v2610 = vsel %vm1430, %v2561, 0
      %v2613 = vsel %vm1430, %v2562, 0
      %v2616 = vsel %vm1430, %v2563, 0
      %v2619 = vsel %vm1430, %v2564, 0
      %v2622 = vsel %vm1430, %v2565, 0
      %v2625 = vsel %vm1430, %v2566, 0
      %v2628 = vsel %vm1430, %v2567, 0
      %v2631 = vsel %vm1430, %v2568, 0
      %v2634 = vsel %vm1430, %v2569, 0
      %v2637 = vsel %vm1430, %v2570, 0
      %v2640 = vsel %vm1430, %v2571, 0
      %v2643 = vsel %vm1430, %v2572, 0
      %v2646 = vsel %vm1430, %v2573, 0
      %v2649 = vsel %vm1430, %v2574, 0
      %v2652 = vsel %vm1430, %v2575, 0
      %v2655 = vsel %vm1430, %v2576, 0
      %v2658 = vsel %vm1430, %v2577, 0
      %v2661 = vsel %vm1430, %v2578, 0
      %v2664 = vsel %vm1430, %v2579, 0
      %v2667 = vsel %vm1430, %v2580, 0
      %v2670 = vsel %vm1430, %v2581, 0
      %v2673 = vsel %vm1430, %v2582, 0
      %v2676 = vsel %vm1430, %v2583, 0
      %v2679 = vsel %vm1430, %v2584, 0
      %v2682 = vsel %vm1430, %v2585, 0
      %2684 = vmatpush.msra.mxu0 0.0
      %2685 = vmatpush.msra.mxu0 0.0
      %2686 = vmatpush.msra.mxu0 0.0
      %2687 = vmatpush.msra.mxu0 0.0
      %2688 = vmatpush.msra.mxu0 0.0
      %2689 = vmatpush.msra.mxu0 0.0
      %2690 = vmatpush.msra.mxu0 0.0
      %2691 = vmatpush.msra.mxu0 0.0
      %2692 = vmatpush.msra.mxu0 0.0
      %2693 = vmatpush.msra.mxu0 0.0
      %2694 = vmatpush.msra.mxu0 0.0
      %2695 = vmatpush.msra.mxu0 0.0
      %2696 = vmatpush.msra.mxu0 0.0
      %2697 = vmatpush.msra.mxu0 0.0
      %2698 = vmatpush.msra.mxu0 0.0
      %2699 = vmatpush.msra.mxu0 %v2587
      %2700 = vmatmul.f32.gmra.mxu0 %v2589
      %v2701 = vpop.f32.mrf.mxu0
      %v2702 = vadd.f32 0.0, %v2701
      %2703 = vmatmul.f32.gmra.mxu0 %v2592
      %v2704 = vpop.f32.mrf.mxu0
      %v2705 = vadd.f32 0.0, %v2704
      %2706 = vmatmul.f32.gmra.mxu0 %v2595
      %v2707 = vpop.f32.mrf.mxu0
      %v2708 = vadd.f32 0.0, %v2707
      %2709 = vmatmul.f32.gmra.mxu0 %v2598
      %v2710 = vpop.f32.mrf.mxu0
      %v2711 = vadd.f32 0.0, %v2710
      %2712 = vmatmul.f32.gmra.mxu0 %v2601
      %v2713 = vpop.f32.mrf.mxu0
      %v2714 = vadd.f32 0.0, %v2713
      %2715 = vmatmul.f32.gmra.mxu0 %v2604
      %v2716 = vpop.f32.mrf.mxu0
      %v2717 = vadd.f32 0.0, %v2716
      %2718 = vmatmul.f32.gmra.mxu0 %v2607
      %v2719 = vpop.f32.mrf.mxu0
      %v2720 = vadd.f32 0.0, %v2719
      %2721 = vmatmul.f32.gmra.mxu0 %v2610
      %v2722 = vpop.f32.mrf.mxu0
      %v2723 = vadd.f32 0.0, %v2722
      %2724 = vmatmul.f32.gmra.mxu0 %v2613
      %v2725 = vpop.f32.mrf.mxu0
      %v2726 = vadd.f32 0.0, %v2725
      %2727 = vmatmul.f32.gmra.mxu0 %v2616
      %v2728 = vpop.f32.mrf.mxu0
      %v2729 = vadd.f32 0.0, %v2728
      %2730 = vmatmul.f32.gmra.mxu0 %v2619
      %v2731 = vpop.f32.mrf.mxu0
      %v2732 = vadd.f32 0.0, %v2731
      %2733 = vmatmul.f32.gmra.mxu0 %v2622
      %v2734 = vpop.f32.mrf.mxu0
      %v2735 = vadd.f32 0.0, %v2734
      %2736 = vmatmul.f32.gmra.mxu0 %v2625
      %v2737 = vpop.f32.mrf.mxu0
      %v2738 = vadd.f32 0.0, %v2737
      %2739 = vmatmul.f32.gmra.mxu0 %v2628
      %v2740 = vpop.f32.mrf.mxu0
      %v2741 = vadd.f32 0.0, %v2740
      %2742 = vmatmul.f32.gmra.mxu0 %v2631
      %v2743 = vpop.f32.mrf.mxu0
      %v2744 = vadd.f32 0.0, %v2743
      %2745 = vmatmul.f32.gmra.mxu0 %v2634
      %v2746 = vpop.f32.mrf.mxu0
      %v2747 = vadd.f32 0.0, %v2746
      %2748 = vmatmul.f32.gmra.mxu0 %v2637
      %v2749 = vpop.f32.mrf.mxu0
      %v2750 = vadd.f32 0.0, %v2749
      %2751 = vmatmul.f32.gmra.mxu0 %v2640
      %v2752 = vpop.f32.mrf.mxu0
      %v2753 = vadd.f32 0.0, %v2752
      %2754 = vmatmul.f32.gmra.mxu0 %v2643
      %v2755 = vpop.f32.mrf.mxu0
      %v2756 = vadd.f32 0.0, %v2755
      %2757 = vmatmul.f32.gmra.mxu0 %v2646
      %v2758 = vpop.f32.mrf.mxu0
      %v2759 = vadd.f32 0.0, %v2758
      %2760 = vmatmul.f32.gmra.mxu0 %v2649
      %v2761 = vpop.f32.mrf.mxu0
      %v2762 = vadd.f32 0.0, %v2761
      %2763 = vmatmul.f32.gmra.mxu0 %v2652
      %v2764 = vpop.f32.mrf.mxu0
      %v2765 = vadd.f32 0.0, %v2764
      %2766 = vmatmul.f32.gmra.mxu0 %v2655
      %v2767 = vpop.f32.mrf.mxu0
      %v2768 = vadd.f32 0.0, %v2767
      %2769 = vmatmul.f32.gmra.mxu0 %v2658
      %v2770 = vpop.f32.mrf.mxu0
      %v2771 = vadd.f32 0.0, %v2770
      %2772 = vmatmul.f32.gmra.mxu0 %v2661
      %v2773 = vpop.f32.mrf.mxu0
      %v2774 = vadd.f32 0.0, %v2773
      %2775 = vmatmul.f32.gmra.mxu0 %v2664
      %v2776 = vpop.f32.mrf.mxu0
      %v2777 = vadd.f32 0.0, %v2776
      %2778 = vmatmul.f32.gmra.mxu0 %v2667
      %v2779 = vpop.f32.mrf.mxu0
      %v2780 = vadd.f32 0.0, %v2779
      %2781 = vmatmul.f32.gmra.mxu0 %v2670
      %v2782 = vpop.f32.mrf.mxu0
      %v2783 = vadd.f32 0.0, %v2782
      %2784 = vmatmul.f32.gmra.mxu0 %v2673
      %v2785 = vpop.f32.mrf.mxu0
      %v2786 = vadd.f32 0.0, %v2785
      %2787 = vmatmul.f32.gmra.mxu0 %v2676
      %v2788 = vpop.f32.mrf.mxu0
      %v2789 = vadd.f32 0.0, %v2788
      %2790 = vmatmul.f32.gmra.mxu0 %v2679
      %v2791 = vpop.f32.mrf.mxu0
      %v2792 = vadd.f32 0.0, %v2791
      %2793 = vmatmul.f32.gmra.mxu0 %v2682
      %v2794 = vpop.f32.mrf.mxu0
      %v2795 = vadd.f32 0.0, %v2794
      %2796 = vdwg.mxu0
      %v2797 = vadd.f32 %v2522, %v2702
      %v2798 = vadd.f32 %v2523, %v2705
      %v2799 = vadd.f32 %v2524, %v2708
      %v2800 = vadd.f32 %v2525, %v2711
      %v2801 = vadd.f32 %v2526, %v2714
      %v2802 = vadd.f32 %v2527, %v2717
      %v2803 = vadd.f32 %v2528, %v2720
      %v2804 = vadd.f32 %v2529, %v2723
      %v2805 = vadd.f32 %v2530, %v2726
      %v2806 = vadd.f32 %v2531, %v2729
      %v2807 = vadd.f32 %v2532, %v2732
      %v2808 = vadd.f32 %v2533, %v2735
      %v2809 = vadd.f32 %v2534, %v2738
      %v2810 = vadd.f32 %v2535, %v2741
      %v2811 = vadd.f32 %v2536, %v2744
      %v2812 = vadd.f32 %v2537, %v2747
      %v2813 = vadd.f32 %v2538, %v2750
      %v2814 = vadd.f32 %v2539, %v2753
      %v2815 = vadd.f32 %v2540, %v2756
      %v2816 = vadd.f32 %v2541, %v2759
      %v2817 = vadd.f32 %v2542, %v2762
      %v2818 = vadd.f32 %v2543, %v2765
      %v2819 = vadd.f32 %v2544, %v2768
      %v2820 = vadd.f32 %v2545, %v2771
      %v2821 = vadd.f32 %v2546, %v2774
      %v2822 = vadd.f32 %v2547, %v2777
      %v2823 = vadd.f32 %v2548, %v2780
      %v2824 = vadd.f32 %v2549, %v2783
      %v2825 = vadd.f32 %v2550, %v2786
      %v2826 = vadd.f32 %v2551, %v2789
      %v2827 = vadd.f32 %v2552, %v2792
      %v2828 = vadd.f32 %v2553, %v2795
      %v2829 = vld [vmem:[%s1486 + $0x2] sm:$0xff]
      %v2830 = vld [vmem:[%s1486 + $0xa] sm:$0xff]
      %v2831 = vld [vmem:[%s1486 + $0x1a] sm:$0xff]
      %v2832 = vld [vmem:[%s1486 + $0x22] sm:$0xff]
      %v2833 = vld [vmem:[%s1486 + $0x32] sm:$0xff]
      %v2834 = vld [vmem:[%s1486 + $0x3a] sm:$0xff]
      %v2835 = vld [vmem:[%s1486 + $0x4a] sm:$0xff]
      %v2836 = vld [vmem:[%s1486 + $0x52] sm:$0xff]
      %v2837 = vld [vmem:[%s1486 + $0x62] sm:$0xff]
      %v2838 = vld [vmem:[%s1486 + $0x6a] sm:$0xff]
      %v2839 = vld [vmem:[%s1486 + $0x7a] sm:$0xff]
      %v2840 = vld [vmem:[%s1486 + $0x82] sm:$0xff]
      %v2841 = vld [vmem:[%s1486 + $0x92] sm:$0xff]
      %v2842 = vld [vmem:[%s1486 + $0x9a] sm:$0xff]
      %v2843 = vld [vmem:[%s1486 + $0xaa] sm:$0xff]
      %v2844 = vld [vmem:[%s1486 + $0xb2] sm:$0xff]
      %v2845 = vld [vmem:[%s1486 + $0xc2] sm:$0xff]
      %v2846 = vld [vmem:[%s1486 + $0xca] sm:$0xff]
      %v2847 = vld [vmem:[%s1486 + $0xda] sm:$0xff]
      %v2848 = vld [vmem:[%s1486 + $0xe2] sm:$0xff]
      %v2849 = vld [vmem:[%s1486 + $0xf2] sm:$0xff]
      %v2850 = vld [vmem:[%s1486 + $0xfa] sm:$0xff]
      %v2851 = vld [vmem:[%s1486 + $0x10a] sm:$0xff]
      %v2852 = vld [vmem:[%s1486 + $0x112] sm:$0xff]
      %v2853 = vld [vmem:[%s1486 + $0x122] sm:$0xff]
      %v2854 = vld [vmem:[%s1486 + $0x12a] sm:$0xff]
      %v2855 = vld [vmem:[%s1486 + $0x13a] sm:$0xff]
      %v2856 = vld [vmem:[%s1486 + $0x142] sm:$0xff]
      %v2857 = vld [vmem:[%s1486 + $0x152] sm:$0xff]
      %v2858 = vld [vmem:[%s1486 + $0x15a] sm:$0xff]
      %v2859 = vld [vmem:[%s1486 + $0x16a] sm:$0xff]
      %v2860 = vld [vmem:[%s1486 + $0x172] sm:$0xff]
      %s2861 = scalar_lea.vmem %s4, 40
      %v2862 = vld [vmem:[%s2861] sm:$0xff]
      %v2864 = vsel %vm1430, %v2829, 0
      %v2867 = vsel %vm1430, %v2830, 0
      %v2870 = vsel %vm1430, %v2831, 0
      %v2873 = vsel %vm1430, %v2832, 0
      %v2876 = vsel %vm1430, %v2833, 0
      %v2879 = vsel %vm1430, %v2834, 0
      %v2882 = vsel %vm1430, %v2835, 0
      %v2885 = vsel %vm1430, %v2836, 0
      %v2888 = vsel %vm1430, %v2837, 0
      %v2891 = vsel %vm1430, %v2838, 0
      %v2894 = vsel %vm1430, %v2839, 0
      %v2897 = vsel %vm1430, %v2840, 0
      %v2900 = vsel %vm1430, %v2841, 0
      %v2903 = vsel %vm1430, %v2842, 0
      %v2906 = vsel %vm1430, %v2843, 0
      %v2909 = vsel %vm1430, %v2844, 0
      %v2912 = vsel %vm1430, %v2845, 0
      %v2915 = vsel %vm1430, %v2846, 0
      %v2918 = vsel %vm1430, %v2847, 0
      %v2921 = vsel %vm1430, %v2848, 0
      %v2924 = vsel %vm1430, %v2849, 0
      %v2927 = vsel %vm1430, %v2850, 0
      %v2930 = vsel %vm1430, %v2851, 0
      %v2933 = vsel %vm1430, %v2852, 0
      %v2936 = vsel %vm1430, %v2853, 0
      %v2939 = vsel %vm1430, %v2854, 0
      %v2942 = vsel %vm1430, %v2855, 0
      %v2945 = vsel %vm1430, %v2856, 0
      %v2948 = vsel %vm1430, %v2857, 0
      %v2951 = vsel %vm1430, %v2858, 0
      %v2954 = vsel %vm1430, %v2859, 0
      %v2957 = vsel %vm1430, %v2860, 0
      %2959 = vmatpush.msra.mxu0 0.0
      %2960 = vmatpush.msra.mxu0 0.0
      %2961 = vmatpush.msra.mxu0 0.0
      %2962 = vmatpush.msra.mxu0 0.0
      %2963 = vmatpush.msra.mxu0 0.0
      %2964 = vmatpush.msra.mxu0 0.0
      %2965 = vmatpush.msra.mxu0 0.0
      %2966 = vmatpush.msra.mxu0 0.0
      %2967 = vmatpush.msra.mxu0 0.0
      %2968 = vmatpush.msra.mxu0 0.0
      %2969 = vmatpush.msra.mxu0 0.0
      %2970 = vmatpush.msra.mxu0 0.0
      %2971 = vmatpush.msra.mxu0 0.0
      %2972 = vmatpush.msra.mxu0 0.0
      %2973 = vmatpush.msra.mxu0 0.0
      %2974 = vmatpush.msra.mxu0 %v2862
      %2975 = vmatmul.f32.gmra.mxu0 %v2864
      %v2976 = vpop.f32.mrf.mxu0
      %v2977 = vadd.f32 0.0, %v2976
      %2978 = vmatmul.f32.gmra.mxu0 %v2867
      %v2979 = vpop.f32.mrf.mxu0
      %v2980 = vadd.f32 0.0, %v2979
      %2981 = vmatmul.f32.gmra.mxu0 %v2870
      %v2982 = vpop.f32.mrf.mxu0
      %v2983 = vadd.f32 0.0, %v2982
      %2984 = vmatmul.f32.gmra.mxu0 %v2873
      %v2985 = vpop.f32.mrf.mxu0
      %v2986 = vadd.f32 0.0, %v2985
      %2987 = vmatmul.f32.gmra.mxu0 %v2876
      %v2988 = vpop.f32.mrf.mxu0
      %v2989 = vadd.f32 0.0, %v2988
      %2990 = vmatmul.f32.gmra.mxu0 %v2879
      %v2991 = vpop.f32.mrf.mxu0
      %v2992 = vadd.f32 0.0, %v2991
      %2993 = vmatmul.f32.gmra.mxu0 %v2882
      %v2994 = vpop.f32.mrf.mxu0
      %v2995 = vadd.f32 0.0, %v2994
      %2996 = vmatmul.f32.gmra.mxu0 %v2885
      %v2997 = vpop.f32.mrf.mxu0
      %v2998 = vadd.f32 0.0, %v2997
      %2999 = vmatmul.f32.gmra.mxu0 %v2888
      %v3000 = vpop.f32.mrf.mxu0
      %v3001 = vadd.f32 0.0, %v3000
      %3002 = vmatmul.f32.gmra.mxu0 %v2891
      %v3003 = vpop.f32.mrf.mxu0
      %v3004 = vadd.f32 0.0, %v3003
      %3005 = vmatmul.f32.gmra.mxu0 %v2894
      %v3006 = vpop.f32.mrf.mxu0
      %v3007 = vadd.f32 0.0, %v3006
      %3008 = vmatmul.f32.gmra.mxu0 %v2897
      %v3009 = vpop.f32.mrf.mxu0
      %v3010 = vadd.f32 0.0, %v3009
      %3011 = vmatmul.f32.gmra.mxu0 %v2900
      %v3012 = vpop.f32.mrf.mxu0
      %v3013 = vadd.f32 0.0, %v3012
      %3014 = vmatmul.f32.gmra.mxu0 %v2903
      %v3015 = vpop.f32.mrf.mxu0
      %v3016 = vadd.f32 0.0, %v3015
      %3017 = vmatmul.f32.gmra.mxu0 %v2906
      %v3018 = vpop.f32.mrf.mxu0
      %v3019 = vadd.f32 0.0, %v3018
      %3020 = vmatmul.f32.gmra.mxu0 %v2909
      %v3021 = vpop.f32.mrf.mxu0
      %v3022 = vadd.f32 0.0, %v3021
      %3023 = vmatmul.f32.gmra.mxu0 %v2912
      %v3024 = vpop.f32.mrf.mxu0
      %v3025 = vadd.f32 0.0, %v3024
      %3026 = vmatmul.f32.gmra.mxu0 %v2915
      %v3027 = vpop.f32.mrf.mxu0
      %v3028 = vadd.f32 0.0, %v3027
      %3029 = vmatmul.f32.gmra.mxu0 %v2918
      %v3030 = vpop.f32.mrf.mxu0
      %v3031 = vadd.f32 0.0, %v3030
      %3032 = vmatmul.f32.gmra.mxu0 %v2921
      %v3033 = vpop.f32.mrf.mxu0
      %v3034 = vadd.f32 0.0, %v3033
      %3035 = vmatmul.f32.gmra.mxu0 %v2924
      %v3036 = vpop.f32.mrf.mxu0
      %v3037 = vadd.f32 0.0, %v3036
      %3038 = vmatmul.f32.gmra.mxu0 %v2927
      %v3039 = vpop.f32.mrf.mxu0
      %v3040 = vadd.f32 0.0, %v3039
      %3041 = vmatmul.f32.gmra.mxu0 %v2930
      %v3042 = vpop.f32.mrf.mxu0
      %v3043 = vadd.f32 0.0, %v3042
      %3044 = vmatmul.f32.gmra.mxu0 %v2933
      %v3045 = vpop.f32.mrf.mxu0
      %v3046 = vadd.f32 0.0, %v3045
      %3047 = vmatmul.f32.gmra.mxu0 %v2936
      %v3048 = vpop.f32.mrf.mxu0
      %v3049 = vadd.f32 0.0, %v3048
      %3050 = vmatmul.f32.gmra.mxu0 %v2939
      %v3051 = vpop.f32.mrf.mxu0
      %v3052 = vadd.f32 0.0, %v3051
      %3053 = vmatmul.f32.gmra.mxu0 %v2942
      %v3054 = vpop.f32.mrf.mxu0
      %v3055 = vadd.f32 0.0, %v3054
      %3056 = vmatmul.f32.gmra.mxu0 %v2945
      %v3057 = vpop.f32.mrf.mxu0
      %v3058 = vadd.f32 0.0, %v3057
      %3059 = vmatmul.f32.gmra.mxu0 %v2948
      %v3060 = vpop.f32.mrf.mxu0
      %v3061 = vadd.f32 0.0, %v3060
      %3062 = vmatmul.f32.gmra.mxu0 %v2951
      %v3063 = vpop.f32.mrf.mxu0
      %v3064 = vadd.f32 0.0, %v3063
      %3065 = vmatmul.f32.gmra.mxu0 %v2954
      %v3066 = vpop.f32.mrf.mxu0
      %v3067 = vadd.f32 0.0, %v3066
      %3068 = vmatmul.f32.gmra.mxu0 %v2957
      %v3069 = vpop.f32.mrf.mxu0
      %v3070 = vadd.f32 0.0, %v3069
      %3071 = vdwg.mxu0
      %v3072 = vadd.f32 %v2797, %v2977
      %v3073 = vadd.f32 %v2798, %v2980
      %v3074 = vadd.f32 %v2799, %v2983
      %v3075 = vadd.f32 %v2800, %v2986
      %v3076 = vadd.f32 %v2801, %v2989
      %v3077 = vadd.f32 %v2802, %v2992
      %v3078 = vadd.f32 %v2803, %v2995
      %v3079 = vadd.f32 %v2804, %v2998
      %v3080 = vadd.f32 %v2805, %v3001
      %v3081 = vadd.f32 %v2806, %v3004
      %v3082 = vadd.f32 %v2807, %v3007
      %v3083 = vadd.f32 %v2808, %v3010
      %v3084 = vadd.f32 %v2809, %v3013
      %v3085 = vadd.f32 %v2810, %v3016
      %v3086 = vadd.f32 %v2811, %v3019
      %v3087 = vadd.f32 %v2812, %v3022
      %v3088 = vadd.f32 %v2813, %v3025
      %v3089 = vadd.f32 %v2814, %v3028
      %v3090 = vadd.f32 %v2815, %v3031
      %v3091 = vadd.f32 %v2816, %v3034
      %v3092 = vadd.f32 %v2817, %v3037
      %v3093 = vadd.f32 %v2818, %v3040
      %v3094 = vadd.f32 %v2819, %v3043
      %v3095 = vadd.f32 %v2820, %v3046
      %v3096 = vadd.f32 %v2821, %v3049
      %v3097 = vadd.f32 %v2822, %v3052
      %v3098 = vadd.f32 %v2823, %v3055
      %v3099 = vadd.f32 %v2824, %v3058
      %v3100 = vadd.f32 %v2825, %v3061
      %v3101 = vadd.f32 %v2826, %v3064
      %v3102 = vadd.f32 %v2827, %v3067
      %v3103 = vadd.f32 %v2828, %v3070
      %s3104 = scalar_lea.vmem [#allocation2], 48
      %v3105 = vld [vmem:[%s3104] sm:$0xff]
      %v3106 = vld [vmem:[%s3104 + $0x8] sm:$0xff]
      %v3107 = vld [vmem:[%s3104 + $0x18] sm:$0xff]
      %v3108 = vld [vmem:[%s3104 + $0x20] sm:$0xff]
      %v3109 = vld [vmem:[%s3104 + $0x30] sm:$0xff]
      %v3110 = vld [vmem:[%s3104 + $0x38] sm:$0xff]
      %v3111 = vld [vmem:[%s3104 + $0x48] sm:$0xff]
      %v3112 = vld [vmem:[%s3104 + $0x50] sm:$0xff]
      %v3113 = vld [vmem:[%s3104 + $0x60] sm:$0xff]
      %v3114 = vld [vmem:[%s3104 + $0x68] sm:$0xff]
      %v3115 = vld [vmem:[%s3104 + $0x78] sm:$0xff]
      %v3116 = vld [vmem:[%s3104 + $0x80] sm:$0xff]
      %v3117 = vld [vmem:[%s3104 + $0x90] sm:$0xff]
      %v3118 = vld [vmem:[%s3104 + $0x98] sm:$0xff]
      %v3119 = vld [vmem:[%s3104 + $0xa8] sm:$0xff]
      %v3120 = vld [vmem:[%s3104 + $0xb0] sm:$0xff]
      %v3121 = vld [vmem:[%s3104 + $0xc0] sm:$0xff]
      %v3122 = vld [vmem:[%s3104 + $0xc8] sm:$0xff]
      %v3123 = vld [vmem:[%s3104 + $0xd8] sm:$0xff]
      %v3124 = vld [vmem:[%s3104 + $0xe0] sm:$0xff]
      %v3125 = vld [vmem:[%s3104 + $0xf0] sm:$0xff]
      %v3126 = vld [vmem:[%s3104 + $0xf8] sm:$0xff]
      %v3127 = vld [vmem:[%s3104 + $0x108] sm:$0xff]
      %v3128 = vld [vmem:[%s3104 + $0x110] sm:$0xff]
      %v3129 = vld [vmem:[%s3104 + $0x120] sm:$0xff]
      %v3130 = vld [vmem:[%s3104 + $0x128] sm:$0xff]
      %v3131 = vld [vmem:[%s3104 + $0x138] sm:$0xff]
      %v3132 = vld [vmem:[%s3104 + $0x140] sm:$0xff]
      %v3133 = vld [vmem:[%s3104 + $0x150] sm:$0xff]
      %v3134 = vld [vmem:[%s3104 + $0x158] sm:$0xff]
      %v3135 = vld [vmem:[%s3104 + $0x168] sm:$0xff]
      %v3136 = vld [vmem:[%s3104 + $0x170] sm:$0xff]
      %s3137 = scalar_lea.vmem %s4, 48
      %v3138 = vld [vmem:[%s3137] sm:$0xff]
      %v3140 = vsel %vm1430, %v3105, 0
      %v3143 = vsel %vm1430, %v3106, 0
      %v3146 = vsel %vm1430, %v3107, 0
      %v3149 = vsel %vm1430, %v3108, 0
      %v3152 = vsel %vm1430, %v3109, 0
      %v3155 = vsel %vm1430, %v3110, 0
      %v3158 = vsel %vm1430, %v3111, 0
      %v3161 = vsel %vm1430, %v3112, 0
      %v3164 = vsel %vm1430, %v3113, 0
      %v3167 = vsel %vm1430, %v3114, 0
      %v3170 = vsel %vm1430, %v3115, 0
      %v3173 = vsel %vm1430, %v3116, 0
      %v3176 = vsel %vm1430, %v3117, 0
      %v3179 = vsel %vm1430, %v3118, 0
      %v3182 = vsel %vm1430, %v3119, 0
      %v3185 = vsel %vm1430, %v3120, 0
      %v3188 = vsel %vm1430, %v3121, 0
      %v3191 = vsel %vm1430, %v3122, 0
      %v3194 = vsel %vm1430, %v3123, 0
      %v3197 = vsel %vm1430, %v3124, 0
      %v3200 = vsel %vm1430, %v3125, 0
      %v3203 = vsel %vm1430, %v3126, 0
      %v3206 = vsel %vm1430, %v3127, 0
      %v3209 = vsel %vm1430, %v3128, 0
      %v3212 = vsel %vm1430, %v3129, 0
      %v3215 = vsel %vm1430, %v3130, 0
      %v3218 = vsel %vm1430, %v3131, 0
      %v3221 = vsel %vm1430, %v3132, 0
      %v3224 = vsel %vm1430, %v3133, 0
      %v3227 = vsel %vm1430, %v3134, 0
      %v3230 = vsel %vm1430, %v3135, 0
      %v3233 = vsel %vm1430, %v3136, 0
      %3235 = vmatpush.msra.mxu0 0.0
      %3236 = vmatpush.msra.mxu0 0.0
      %3237 = vmatpush.msra.mxu0 0.0
      %3238 = vmatpush.msra.mxu0 0.0
      %3239 = vmatpush.msra.mxu0 0.0
      %3240 = vmatpush.msra.mxu0 0.0
      %3241 = vmatpush.msra.mxu0 0.0
      %3242 = vmatpush.msra.mxu0 0.0
      %3243 = vmatpush.msra.mxu0 0.0
      %3244 = vmatpush.msra.mxu0 0.0
      %3245 = vmatpush.msra.mxu0 0.0
      %3246 = vmatpush.msra.mxu0 0.0
      %3247 = vmatpush.msra.mxu0 0.0
      %3248 = vmatpush.msra.mxu0 0.0
      %3249 = vmatpush.msra.mxu0 0.0
      %3250 = vmatpush.msra.mxu0 %v3138
      %3251 = vmatmul.f32.gmra.mxu0 %v3140
      %v3252 = vpop.f32.mrf.mxu0
      %v3253 = vadd.f32 0.0, %v3252
      %3254 = vmatmul.f32.gmra.mxu0 %v3143
      %v3255 = vpop.f32.mrf.mxu0
      %v3256 = vadd.f32 0.0, %v3255
      %3257 = vmatmul.f32.gmra.mxu0 %v3146
      %v3258 = vpop.f32.mrf.mxu0
      %v3259 = vadd.f32 0.0, %v3258
      %3260 = vmatmul.f32.gmra.mxu0 %v3149
      %v3261 = vpop.f32.mrf.mxu0
      %v3262 = vadd.f32 0.0, %v3261
      %3263 = vmatmul.f32.gmra.mxu0 %v3152
      %v3264 = vpop.f32.mrf.mxu0
      %v3265 = vadd.f32 0.0, %v3264
      %3266 = vmatmul.f32.gmra.mxu0 %v3155
      %v3267 = vpop.f32.mrf.mxu0
      %v3268 = vadd.f32 0.0, %v3267
      %3269 = vmatmul.f32.gmra.mxu0 %v3158
      %v3270 = vpop.f32.mrf.mxu0
      %v3271 = vadd.f32 0.0, %v3270
      %3272 = vmatmul.f32.gmra.mxu0 %v3161
      %v3273 = vpop.f32.mrf.mxu0
      %v3274 = vadd.f32 0.0, %v3273
      %3275 = vmatmul.f32.gmra.mxu0 %v3164
      %v3276 = vpop.f32.mrf.mxu0
      %v3277 = vadd.f32 0.0, %v3276
      %3278 = vmatmul.f32.gmra.mxu0 %v3167
      %v3279 = vpop.f32.mrf.mxu0
      %v3280 = vadd.f32 0.0, %v3279
      %3281 = vmatmul.f32.gmra.mxu0 %v3170
      %v3282 = vpop.f32.mrf.mxu0
      %v3283 = vadd.f32 0.0, %v3282
      %3284 = vmatmul.f32.gmra.mxu0 %v3173
      %v3285 = vpop.f32.mrf.mxu0
      %v3286 = vadd.f32 0.0, %v3285
      %3287 = vmatmul.f32.gmra.mxu0 %v3176
      %v3288 = vpop.f32.mrf.mxu0
      %v3289 = vadd.f32 0.0, %v3288
      %3290 = vmatmul.f32.gmra.mxu0 %v3179
      %v3291 = vpop.f32.mrf.mxu0
      %v3292 = vadd.f32 0.0, %v3291
      %3293 = vmatmul.f32.gmra.mxu0 %v3182
      %v3294 = vpop.f32.mrf.mxu0
      %v3295 = vadd.f32 0.0, %v3294
      %3296 = vmatmul.f32.gmra.mxu0 %v3185
      %v3297 = vpop.f32.mrf.mxu0
      %v3298 = vadd.f32 0.0, %v3297
      %3299 = vmatmul.f32.gmra.mxu0 %v3188
      %v3300 = vpop.f32.mrf.mxu0
      %v3301 = vadd.f32 0.0, %v3300
      %3302 = vmatmul.f32.gmra.mxu0 %v3191
      %v3303 = vpop.f32.mrf.mxu0
      %v3304 = vadd.f32 0.0, %v3303
      %3305 = vmatmul.f32.gmra.mxu0 %v3194
      %v3306 = vpop.f32.mrf.mxu0
      %v3307 = vadd.f32 0.0, %v3306
      %3308 = vmatmul.f32.gmra.mxu0 %v3197
      %v3309 = vpop.f32.mrf.mxu0
      %v3310 = vadd.f32 0.0, %v3309
      %3311 = vmatmul.f32.gmra.mxu0 %v3200
      %v3312 = vpop.f32.mrf.mxu0
      %v3313 = vadd.f32 0.0, %v3312
      %3314 = vmatmul.f32.gmra.mxu0 %v3203
      %v3315 = vpop.f32.mrf.mxu0
      %v3316 = vadd.f32 0.0, %v3315
      %3317 = vmatmul.f32.gmra.mxu0 %v3206
      %v3318 = vpop.f32.mrf.mxu0
      %v3319 = vadd.f32 0.0, %v3318
      %3320 = vmatmul.f32.gmra.mxu0 %v3209
      %v3321 = vpop.f32.mrf.mxu0
      %v3322 = vadd.f32 0.0, %v3321
      %3323 = vmatmul.f32.gmra.mxu0 %v3212
      %v3324 = vpop.f32.mrf.mxu0
      %v3325 = vadd.f32 0.0, %v3324
      %3326 = vmatmul.f32.gmra.mxu0 %v3215
      %v3327 = vpop.f32.mrf.mxu0
      %v3328 = vadd.f32 0.0, %v3327
      %3329 = vmatmul.f32.gmra.mxu0 %v3218
      %v3330 = vpop.f32.mrf.mxu0
      %v3331 = vadd.f32 0.0, %v3330
      %3332 = vmatmul.f32.gmra.mxu0 %v3221
      %v3333 = vpop.f32.mrf.mxu0
      %v3334 = vadd.f32 0.0, %v3333
      %3335 = vmatmul.f32.gmra.mxu0 %v3224
      %v3336 = vpop.f32.mrf.mxu0
      %v3337 = vadd.f32 0.0, %v3336
      %3338 = vmatmul.f32.gmra.mxu0 %v3227
      %v3339 = vpop.f32.mrf.mxu0
      %v3340 = vadd.f32 0.0, %v3339
      %3341 = vmatmul.f32.gmra.mxu0 %v3230
      %v3342 = vpop.f32.mrf.mxu0
      %v3343 = vadd.f32 0.0, %v3342
      %3344 = vmatmul.f32.gmra.mxu0 %v3233
      %v3345 = vpop.f32.mrf.mxu0
      %v3346 = vadd.f32 0.0, %v3345
      %3347 = vdwg.mxu0
      %v3348 = vadd.f32 %v3072, %v3253
      %v3349 = vadd.f32 %v3073, %v3256
      %v3350 = vadd.f32 %v3074, %v3259
      %v3351 = vadd.f32 %v3075, %v3262
      %v3352 = vadd.f32 %v3076, %v3265
      %v3353 = vadd.f32 %v3077, %v3268
      %v3354 = vadd.f32 %v3078, %v3271
      %v3355 = vadd.f32 %v3079, %v3274
      %v3356 = vadd.f32 %v3080, %v3277
      %v3357 = vadd.f32 %v3081, %v3280
      %v3358 = vadd.f32 %v3082, %v3283
      %v3359 = vadd.f32 %v3083, %v3286
      %v3360 = vadd.f32 %v3084, %v3289
      %v3361 = vadd.f32 %v3085, %v3292
      %v3362 = vadd.f32 %v3086, %v3295
      %v3363 = vadd.f32 %v3087, %v3298
      %v3364 = vadd.f32 %v3088, %v3301
      %v3365 = vadd.f32 %v3089, %v3304
      %v3366 = vadd.f32 %v3090, %v3307
      %v3367 = vadd.f32 %v3091, %v3310
      %v3368 = vadd.f32 %v3092, %v3313
      %v3369 = vadd.f32 %v3093, %v3316
      %v3370 = vadd.f32 %v3094, %v3319
      %v3371 = vadd.f32 %v3095, %v3322
      %v3372 = vadd.f32 %v3096, %v3325
      %v3373 = vadd.f32 %v3097, %v3328
      %v3374 = vadd.f32 %v3098, %v3331
      %v3375 = vadd.f32 %v3099, %v3334
      %v3376 = vadd.f32 %v3100, %v3337
      %v3377 = vadd.f32 %v3101, %v3340
      %v3378 = vadd.f32 %v3102, %v3343
      %v3379 = vadd.f32 %v3103, %v3346
      %v3380 = vld [vmem:[%s3104 + $0x1] sm:$0xff]
      %v3381 = vld [vmem:[%s3104 + $0x9] sm:$0xff]
      %v3382 = vld [vmem:[%s3104 + $0x19] sm:$0xff]
      %v3383 = vld [vmem:[%s3104 + $0x21] sm:$0xff]
      %v3384 = vld [vmem:[%s3104 + $0x31] sm:$0xff]
      %v3385 = vld [vmem:[%s3104 + $0x39] sm:$0xff]
      %v3386 = vld [vmem:[%s3104 + $0x49] sm:$0xff]
      %v3387 = vld [vmem:[%s3104 + $0x51] sm:$0xff]
      %v3388 = vld [vmem:[%s3104 + $0x61] sm:$0xff]
      %v3389 = vld [vmem:[%s3104 + $0x69] sm:$0xff]
      %v3390 = vld [vmem:[%s3104 + $0x79] sm:$0xff]
      %v3391 = vld [vmem:[%s3104 + $0x81] sm:$0xff]
      %v3392 = vld [vmem:[%s3104 + $0x91] sm:$0xff]
      %v3393 = vld [vmem:[%s3104 + $0x99] sm:$0xff]
      %v3394 = vld [vmem:[%s3104 + $0xa9] sm:$0xff]
      %v3395 = vld [vmem:[%s3104 + $0xb1] sm:$0xff]
      %v3396 = vld [vmem:[%s3104 + $0xc1] sm:$0xff]
      %v3397 = vld [vmem:[%s3104 + $0xc9] sm:$0xff]
      %v3398 = vld [vmem:[%s3104 + $0xd9] sm:$0xff]
      %v3399 = vld [vmem:[%s3104 + $0xe1] sm:$0xff]
      %v3400 = vld [vmem:[%s3104 + $0xf1] sm:$0xff]
      %v3401 = vld [vmem:[%s3104 + $0xf9] sm:$0xff]
      %v3402 = vld [vmem:[%s3104 + $0x109] sm:$0xff]
      %v3403 = vld [vmem:[%s3104 + $0x111] sm:$0xff]
      %v3404 = vld [vmem:[%s3104 + $0x121] sm:$0xff]
      %v3405 = vld [vmem:[%s3104 + $0x129] sm:$0xff]
      %v3406 = vld [vmem:[%s3104 + $0x139] sm:$0xff]
      %v3407 = vld [vmem:[%s3104 + $0x141] sm:$0xff]
      %v3408 = vld [vmem:[%s3104 + $0x151] sm:$0xff]
      %v3409 = vld [vmem:[%s3104 + $0x159] sm:$0xff]
      %v3410 = vld [vmem:[%s3104 + $0x169] sm:$0xff]
      %v3411 = vld [vmem:[%s3104 + $0x171] sm:$0xff]
      %s3412 = scalar_lea.vmem %s4, 56
      %v3413 = vld [vmem:[%s3412] sm:$0xff]
      %v3415 = vsel %vm1430, %v3380, 0
      %v3418 = vsel %vm1430, %v3381, 0
      %v3421 = vsel %vm1430, %v3382, 0
      %v3424 = vsel %vm1430, %v3383, 0
      %v3427 = vsel %vm1430, %v3384, 0
      %v3430 = vsel %vm1430, %v3385, 0
      %v3433 = vsel %vm1430, %v3386, 0
      %v3436 = vsel %vm1430, %v3387, 0
      %v3439 = vsel %vm1430, %v3388, 0
      %v3442 = vsel %vm1430, %v3389, 0
      %v3445 = vsel %vm1430, %v3390, 0
      %v3448 = vsel %vm1430, %v3391, 0
      %v3451 = vsel %vm1430, %v3392, 0
      %v3454 = vsel %vm1430, %v3393, 0
      %v3457 = vsel %vm1430, %v3394, 0
      %v3460 = vsel %vm1430, %v3395, 0
      %v3463 = vsel %vm1430, %v3396, 0
      %v3466 = vsel %vm1430, %v3397, 0
      %v3469 = vsel %vm1430, %v3398, 0
      %v3472 = vsel %vm1430, %v3399, 0
      %v3475 = vsel %vm1430, %v3400, 0
      %v3478 = vsel %vm1430, %v3401, 0
      %v3481 = vsel %vm1430, %v3402, 0
      %v3484 = vsel %vm1430, %v3403, 0
      %v3487 = vsel %vm1430, %v3404, 0
      %v3490 = vsel %vm1430, %v3405, 0
      %v3493 = vsel %vm1430, %v3406, 0
      %v3496 = vsel %vm1430, %v3407, 0
      %v3499 = vsel %vm1430, %v3408, 0
      %v3502 = vsel %vm1430, %v3409, 0
      %v3505 = vsel %vm1430, %v3410, 0
      %v3508 = vsel %vm1430, %v3411, 0
      %3510 = vmatpush.msra.mxu0 0.0
      %3511 = vmatpush.msra.mxu0 0.0
      %3512 = vmatpush.msra.mxu0 0.0
      %3513 = vmatpush.msra.mxu0 0.0
      %3514 = vmatpush.msra.mxu0 0.0
      %3515 = vmatpush.msra.mxu0 0.0
      %3516 = vmatpush.msra.mxu0 0.0
      %3517 = vmatpush.msra.mxu0 0.0
      %3518 = vmatpush.msra.mxu0 0.0
      %3519 = vmatpush.msra.mxu0 0.0
      %3520 = vmatpush.msra.mxu0 0.0
      %3521 = vmatpush.msra.mxu0 0.0
      %3522 = vmatpush.msra.mxu0 0.0
      %3523 = vmatpush.msra.mxu0 0.0
      %3524 = vmatpush.msra.mxu0 0.0
      %3525 = vmatpush.msra.mxu0 %v3413
      %3526 = vmatmul.f32.gmra.mxu0 %v3415
      %v3527 = vpop.f32.mrf.mxu0
      %v3528 = vadd.f32 0.0, %v3527
      %3529 = vmatmul.f32.gmra.mxu0 %v3418
      %v3530 = vpop.f32.mrf.mxu0
      %v3531 = vadd.f32 0.0, %v3530
      %3532 = vmatmul.f32.gmra.mxu0 %v3421
      %v3533 = vpop.f32.mrf.mxu0
      %v3534 = vadd.f32 0.0, %v3533
      %3535 = vmatmul.f32.gmra.mxu0 %v3424
      %v3536 = vpop.f32.mrf.mxu0
      %v3537 = vadd.f32 0.0, %v3536
      %3538 = vmatmul.f32.gmra.mxu0 %v3427
      %v3539 = vpop.f32.mrf.mxu0
      %v3540 = vadd.f32 0.0, %v3539
      %3541 = vmatmul.f32.gmra.mxu0 %v3430
      %v3542 = vpop.f32.mrf.mxu0
      %v3543 = vadd.f32 0.0, %v3542
      %3544 = vmatmul.f32.gmra.mxu0 %v3433
      %v3545 = vpop.f32.mrf.mxu0
      %v3546 = vadd.f32 0.0, %v3545
      %3547 = vmatmul.f32.gmra.mxu0 %v3436
      %v3548 = vpop.f32.mrf.mxu0
      %v3549 = vadd.f32 0.0, %v3548
      %3550 = vmatmul.f32.gmra.mxu0 %v3439
      %v3551 = vpop.f32.mrf.mxu0
      %v3552 = vadd.f32 0.0, %v3551
      %3553 = vmatmul.f32.gmra.mxu0 %v3442
      %v3554 = vpop.f32.mrf.mxu0
      %v3555 = vadd.f32 0.0, %v3554
      %3556 = vmatmul.f32.gmra.mxu0 %v3445
      %v3557 = vpop.f32.mrf.mxu0
      %v3558 = vadd.f32 0.0, %v3557
      %3559 = vmatmul.f32.gmra.mxu0 %v3448
      %v3560 = vpop.f32.mrf.mxu0
      %v3561 = vadd.f32 0.0, %v3560
      %3562 = vmatmul.f32.gmra.mxu0 %v3451
      %v3563 = vpop.f32.mrf.mxu0
      %v3564 = vadd.f32 0.0, %v3563
      %3565 = vmatmul.f32.gmra.mxu0 %v3454
      %v3566 = vpop.f32.mrf.mxu0
      %v3567 = vadd.f32 0.0, %v3566
      %3568 = vmatmul.f32.gmra.mxu0 %v3457
      %v3569 = vpop.f32.mrf.mxu0
      %v3570 = vadd.f32 0.0, %v3569
      %3571 = vmatmul.f32.gmra.mxu0 %v3460
      %v3572 = vpop.f32.mrf.mxu0
      %v3573 = vadd.f32 0.0, %v3572
      %3574 = vmatmul.f32.gmra.mxu0 %v3463
      %v3575 = vpop.f32.mrf.mxu0
      %v3576 = vadd.f32 0.0, %v3575
      %3577 = vmatmul.f32.gmra.mxu0 %v3466
      %v3578 = vpop.f32.mrf.mxu0
      %v3579 = vadd.f32 0.0, %v3578
      %3580 = vmatmul.f32.gmra.mxu0 %v3469
      %v3581 = vpop.f32.mrf.mxu0
      %v3582 = vadd.f32 0.0, %v3581
      %3583 = vmatmul.f32.gmra.mxu0 %v3472
      %v3584 = vpop.f32.mrf.mxu0
      %v3585 = vadd.f32 0.0, %v3584
      %3586 = vmatmul.f32.gmra.mxu0 %v3475
      %v3587 = vpop.f32.mrf.mxu0
      %v3588 = vadd.f32 0.0, %v3587
      %3589 = vmatmul.f32.gmra.mxu0 %v3478
      %v3590 = vpop.f32.mrf.mxu0
      %v3591 = vadd.f32 0.0, %v3590
      %3592 = vmatmul.f32.gmra.mxu0 %v3481
      %v3593 = vpop.f32.mrf.mxu0
      %v3594 = vadd.f32 0.0, %v3593
      %3595 = vmatmul.f32.gmra.mxu0 %v3484
      %v3596 = vpop.f32.mrf.mxu0
      %v3597 = vadd.f32 0.0, %v3596
      %3598 = vmatmul.f32.gmra.mxu0 %v3487
      %v3599 = vpop.f32.mrf.mxu0
      %v3600 = vadd.f32 0.0, %v3599
      %3601 = vmatmul.f32.gmra.mxu0 %v3490
      %v3602 = vpop.f32.mrf.mxu0
      %v3603 = vadd.f32 0.0, %v3602
      %3604 = vmatmul.f32.gmra.mxu0 %v3493
      %v3605 = vpop.f32.mrf.mxu0
      %v3606 = vadd.f32 0.0, %v3605
      %3607 = vmatmul.f32.gmra.mxu0 %v3496
      %v3608 = vpop.f32.mrf.mxu0
      %v3609 = vadd.f32 0.0, %v3608
      %3610 = vmatmul.f32.gmra.mxu0 %v3499
      %v3611 = vpop.f32.mrf.mxu0
      %v3612 = vadd.f32 0.0, %v3611
      %3613 = vmatmul.f32.gmra.mxu0 %v3502
      %v3614 = vpop.f32.mrf.mxu0
      %v3615 = vadd.f32 0.0, %v3614
      %3616 = vmatmul.f32.gmra.mxu0 %v3505
      %v3617 = vpop.f32.mrf.mxu0
      %v3618 = vadd.f32 0.0, %v3617
      %3619 = vmatmul.f32.gmra.mxu0 %v3508
      %v3620 = vpop.f32.mrf.mxu0
      %v3621 = vadd.f32 0.0, %v3620
      %3622 = vdwg.mxu0
      %v3623 = vadd.f32 %v3348, %v3528
      %v3624 = vadd.f32 %v3349, %v3531
      %v3625 = vadd.f32 %v3350, %v3534
      %v3626 = vadd.f32 %v3351, %v3537
      %v3627 = vadd.f32 %v3352, %v3540
      %v3628 = vadd.f32 %v3353, %v3543
      %v3629 = vadd.f32 %v3354, %v3546
      %v3630 = vadd.f32 %v3355, %v3549
      %v3631 = vadd.f32 %v3356, %v3552
      %v3632 = vadd.f32 %v3357, %v3555
      %v3633 = vadd.f32 %v3358, %v3558
      %v3634 = vadd.f32 %v3359, %v3561
      %v3635 = vadd.f32 %v3360, %v3564
      %v3636 = vadd.f32 %v3361, %v3567
      %v3637 = vadd.f32 %v3362, %v3570
      %v3638 = vadd.f32 %v3363, %v3573
      %v3639 = vadd.f32 %v3364, %v3576
      %v3640 = vadd.f32 %v3365, %v3579
      %v3641 = vadd.f32 %v3366, %v3582
      %v3642 = vadd.f32 %v3367, %v3585
      %v3643 = vadd.f32 %v3368, %v3588
      %v3644 = vadd.f32 %v3369, %v3591
      %v3645 = vadd.f32 %v3370, %v3594
      %v3646 = vadd.f32 %v3371, %v3597
      %v3647 = vadd.f32 %v3372, %v3600
      %v3648 = vadd.f32 %v3373, %v3603
      %v3649 = vadd.f32 %v3374, %v3606
      %v3650 = vadd.f32 %v3375, %v3609
      %v3651 = vadd.f32 %v3376, %v3612
      %v3652 = vadd.f32 %v3377, %v3615
      %v3653 = vadd.f32 %v3378, %v3618
      %v3654 = vadd.f32 %v3379, %v3621
      %v3655 = vld [vmem:[%s3104 + $0x2] sm:$0xff]
      %v3656 = vld [vmem:[%s3104 + $0xa] sm:$0xff]
      %v3657 = vld [vmem:[%s3104 + $0x1a] sm:$0xff]
      %v3658 = vld [vmem:[%s3104 + $0x22] sm:$0xff]
      %v3659 = vld [vmem:[%s3104 + $0x32] sm:$0xff]
      %v3660 = vld [vmem:[%s3104 + $0x3a] sm:$0xff]
      %v3661 = vld [vmem:[%s3104 + $0x4a] sm:$0xff]
      %v3662 = vld [vmem:[%s3104 + $0x52] sm:$0xff]
      %v3663 = vld [vmem:[%s3104 + $0x62] sm:$0xff]
      %v3664 = vld [vmem:[%s3104 + $0x6a] sm:$0xff]
      %v3665 = vld [vmem:[%s3104 + $0x7a] sm:$0xff]
      %v3666 = vld [vmem:[%s3104 + $0x82] sm:$0xff]
      %v3667 = vld [vmem:[%s3104 + $0x92] sm:$0xff]
      %v3668 = vld [vmem:[%s3104 + $0x9a] sm:$0xff]
      %v3669 = vld [vmem:[%s3104 + $0xaa] sm:$0xff]
      %v3670 = vld [vmem:[%s3104 + $0xb2] sm:$0xff]
      %v3671 = vld [vmem:[%s3104 + $0xc2] sm:$0xff]
      %v3672 = vld [vmem:[%s3104 + $0xca] sm:$0xff]
      %v3673 = vld [vmem:[%s3104 + $0xda] sm:$0xff]
      %v3674 = vld [vmem:[%s3104 + $0xe2] sm:$0xff]
      %v3675 = vld [vmem:[%s3104 + $0xf2] sm:$0xff]
      %v3676 = vld [vmem:[%s3104 + $0xfa] sm:$0xff]
      %v3677 = vld [vmem:[%s3104 + $0x10a] sm:$0xff]
      %v3678 = vld [vmem:[%s3104 + $0x112] sm:$0xff]
      %v3679 = vld [vmem:[%s3104 + $0x122] sm:$0xff]
      %v3680 = vld [vmem:[%s3104 + $0x12a] sm:$0xff]
      %v3681 = vld [vmem:[%s3104 + $0x13a] sm:$0xff]
      %v3682 = vld [vmem:[%s3104 + $0x142] sm:$0xff]
      %v3683 = vld [vmem:[%s3104 + $0x152] sm:$0xff]
      %v3684 = vld [vmem:[%s3104 + $0x15a] sm:$0xff]
      %v3685 = vld [vmem:[%s3104 + $0x16a] sm:$0xff]
      %v3686 = vld [vmem:[%s3104 + $0x172] sm:$0xff]
      %s3687 = scalar_lea.vmem %s4, 64
      %v3688 = vld [vmem:[%s3687] sm:$0xff]
      %v3690 = vsel %vm1430, %v3655, 0
      %v3693 = vsel %vm1430, %v3656, 0
      %v3696 = vsel %vm1430, %v3657, 0
      %v3699 = vsel %vm1430, %v3658, 0
      %v3702 = vsel %vm1430, %v3659, 0
      %v3705 = vsel %vm1430, %v3660, 0
      %v3708 = vsel %vm1430, %v3661, 0
      %v3711 = vsel %vm1430, %v3662, 0
      %v3714 = vsel %vm1430, %v3663, 0
      %v3717 = vsel %vm1430, %v3664, 0
      %v3720 = vsel %vm1430, %v3665, 0
      %v3723 = vsel %vm1430, %v3666, 0
      %v3726 = vsel %vm1430, %v3667, 0
      %v3729 = vsel %vm1430, %v3668, 0
      %v3732 = vsel %vm1430, %v3669, 0
      %v3735 = vsel %vm1430, %v3670, 0
      %v3738 = vsel %vm1430, %v3671, 0
      %v3741 = vsel %vm1430, %v3672, 0
      %v3744 = vsel %vm1430, %v3673, 0
      %v3747 = vsel %vm1430, %v3674, 0
      %v3750 = vsel %vm1430, %v3675, 0
      %v3753 = vsel %vm1430, %v3676, 0
      %v3756 = vsel %vm1430, %v3677, 0
      %v3759 = vsel %vm1430, %v3678, 0
      %v3762 = vsel %vm1430, %v3679, 0
      %v3765 = vsel %vm1430, %v3680, 0
      %v3768 = vsel %vm1430, %v3681, 0
      %v3771 = vsel %vm1430, %v3682, 0
      %v3774 = vsel %vm1430, %v3683, 0
      %v3777 = vsel %vm1430, %v3684, 0
      %v3780 = vsel %vm1430, %v3685, 0
      %v3783 = vsel %vm1430, %v3686, 0
      %3785 = vmatpush.msra.mxu0 0.0
      %3786 = vmatpush.msra.mxu0 0.0
      %3787 = vmatpush.msra.mxu0 0.0
      %3788 = vmatpush.msra.mxu0 0.0
      %3789 = vmatpush.msra.mxu0 0.0
      %3790 = vmatpush.msra.mxu0 0.0
      %3791 = vmatpush.msra.mxu0 0.0
      %3792 = vmatpush.msra.mxu0 0.0
      %3793 = vmatpush.msra.mxu0 0.0
      %3794 = vmatpush.msra.mxu0 0.0
      %3795 = vmatpush.msra.mxu0 0.0
      %3796 = vmatpush.msra.mxu0 0.0
      %3797 = vmatpush.msra.mxu0 0.0
      %3798 = vmatpush.msra.mxu0 0.0
      %3799 = vmatpush.msra.mxu0 0.0
      %3800 = vmatpush.msra.mxu0 %v3688
      %3801 = vmatmul.f32.gmra.mxu0 %v3690
      %v3802 = vpop.f32.mrf.mxu0
      %v3803 = vadd.f32 0.0, %v3802
      %3804 = vmatmul.f32.gmra.mxu0 %v3693
      %v3805 = vpop.f32.mrf.mxu0
      %v3806 = vadd.f32 0.0, %v3805
      %3807 = vmatmul.f32.gmra.mxu0 %v3696
      %v3808 = vpop.f32.mrf.mxu0
      %v3809 = vadd.f32 0.0, %v3808
      %3810 = vmatmul.f32.gmra.mxu0 %v3699
      %v3811 = vpop.f32.mrf.mxu0
      %v3812 = vadd.f32 0.0, %v3811
      %3813 = vmatmul.f32.gmra.mxu0 %v3702
      %v3814 = vpop.f32.mrf.mxu0
      %v3815 = vadd.f32 0.0, %v3814
      %3816 = vmatmul.f32.gmra.mxu0 %v3705
      %v3817 = vpop.f32.mrf.mxu0
      %v3818 = vadd.f32 0.0, %v3817
      %3819 = vmatmul.f32.gmra.mxu0 %v3708
      %v3820 = vpop.f32.mrf.mxu0
      %v3821 = vadd.f32 0.0, %v3820
      %3822 = vmatmul.f32.gmra.mxu0 %v3711
      %v3823 = vpop.f32.mrf.mxu0
      %v3824 = vadd.f32 0.0, %v3823
      %3825 = vmatmul.f32.gmra.mxu0 %v3714
      %v3826 = vpop.f32.mrf.mxu0
      %v3827 = vadd.f32 0.0, %v3826
      %3828 = vmatmul.f32.gmra.mxu0 %v3717
      %v3829 = vpop.f32.mrf.mxu0
      %v3830 = vadd.f32 0.0, %v3829
      %3831 = vmatmul.f32.gmra.mxu0 %v3720
      %v3832 = vpop.f32.mrf.mxu0
      %v3833 = vadd.f32 0.0, %v3832
      %3834 = vmatmul.f32.gmra.mxu0 %v3723
      %v3835 = vpop.f32.mrf.mxu0
      %v3836 = vadd.f32 0.0, %v3835
      %3837 = vmatmul.f32.gmra.mxu0 %v3726
      %v3838 = vpop.f32.mrf.mxu0
      %v3839 = vadd.f32 0.0, %v3838
      %3840 = vmatmul.f32.gmra.mxu0 %v3729
      %v3841 = vpop.f32.mrf.mxu0
      %v3842 = vadd.f32 0.0, %v3841
      %3843 = vmatmul.f32.gmra.mxu0 %v3732
      %v3844 = vpop.f32.mrf.mxu0
      %v3845 = vadd.f32 0.0, %v3844
      %3846 = vmatmul.f32.gmra.mxu0 %v3735
      %v3847 = vpop.f32.mrf.mxu0
      %v3848 = vadd.f32 0.0, %v3847
      %3849 = vmatmul.f32.gmra.mxu0 %v3738
      %v3850 = vpop.f32.mrf.mxu0
      %v3851 = vadd.f32 0.0, %v3850
      %3852 = vmatmul.f32.gmra.mxu0 %v3741
      %v3853 = vpop.f32.mrf.mxu0
      %v3854 = vadd.f32 0.0, %v3853
      %3855 = vmatmul.f32.gmra.mxu0 %v3744
      %v3856 = vpop.f32.mrf.mxu0
      %v3857 = vadd.f32 0.0, %v3856
      %3858 = vmatmul.f32.gmra.mxu0 %v3747
      %v3859 = vpop.f32.mrf.mxu0
      %v3860 = vadd.f32 0.0, %v3859
      %3861 = vmatmul.f32.gmra.mxu0 %v3750
      %v3862 = vpop.f32.mrf.mxu0
      %v3863 = vadd.f32 0.0, %v3862
      %3864 = vmatmul.f32.gmra.mxu0 %v3753
      %v3865 = vpop.f32.mrf.mxu0
      %v3866 = vadd.f32 0.0, %v3865
      %3867 = vmatmul.f32.gmra.mxu0 %v3756
      %v3868 = vpop.f32.mrf.mxu0
      %v3869 = vadd.f32 0.0, %v3868
      %3870 = vmatmul.f32.gmra.mxu0 %v3759
      %v3871 = vpop.f32.mrf.mxu0
      %v3872 = vadd.f32 0.0, %v3871
      %3873 = vmatmul.f32.gmra.mxu0 %v3762
      %v3874 = vpop.f32.mrf.mxu0
      %v3875 = vadd.f32 0.0, %v3874
      %3876 = vmatmul.f32.gmra.mxu0 %v3765
      %v3877 = vpop.f32.mrf.mxu0
      %v3878 = vadd.f32 0.0, %v3877
      %3879 = vmatmul.f32.gmra.mxu0 %v3768
      %v3880 = vpop.f32.mrf.mxu0
      %v3881 = vadd.f32 0.0, %v3880
      %3882 = vmatmul.f32.gmra.mxu0 %v3771
      %v3883 = vpop.f32.mrf.mxu0
      %v3884 = vadd.f32 0.0, %v3883
      %3885 = vmatmul.f32.gmra.mxu0 %v3774
      %v3886 = vpop.f32.mrf.mxu0
      %v3887 = vadd.f32 0.0, %v3886
      %3888 = vmatmul.f32.gmra.mxu0 %v3777
      %v3889 = vpop.f32.mrf.mxu0
      %v3890 = vadd.f32 0.0, %v3889
      %3891 = vmatmul.f32.gmra.mxu0 %v3780
      %v3892 = vpop.f32.mrf.mxu0
      %v3893 = vadd.f32 0.0, %v3892
      %3894 = vmatmul.f32.gmra.mxu0 %v3783
      %v3895 = vpop.f32.mrf.mxu0
      %v3896 = vadd.f32 0.0, %v3895
      %3897 = vdwg.mxu0
      %v3898 = vadd.f32 %v3623, %v3803
      %v3899 = vadd.f32 %v3624, %v3806
      %v3900 = vadd.f32 %v3625, %v3809
      %v3901 = vadd.f32 %v3626, %v3812
      %v3902 = vadd.f32 %v3627, %v3815
      %v3903 = vadd.f32 %v3628, %v3818
      %v3904 = vadd.f32 %v3629, %v3821
      %v3905 = vadd.f32 %v3630, %v3824
      %v3906 = vadd.f32 %v3631, %v3827
      %v3907 = vadd.f32 %v3632, %v3830
      %v3908 = vadd.f32 %v3633, %v3833
      %v3909 = vadd.f32 %v3634, %v3836
      %v3910 = vadd.f32 %v3635, %v3839
      %v3911 = vadd.f32 %v3636, %v3842
      %v3912 = vadd.f32 %v3637, %v3845
      %v3913 = vadd.f32 %v3638, %v3848
      %v3914 = vadd.f32 %v3639, %v3851
      %v3915 = vadd.f32 %v3640, %v3854
      %v3916 = vadd.f32 %v3641, %v3857
      %v3917 = vadd.f32 %v3642, %v3860
      %v3918 = vadd.f32 %v3643, %v3863
      %v3919 = vadd.f32 %v3644, %v3866
      %v3920 = vadd.f32 %v3645, %v3869
      %v3921 = vadd.f32 %v3646, %v3872
      %v3922 = vadd.f32 %v3647, %v3875
      %v3923 = vadd.f32 %v3648, %v3878
      %v3924 = vadd.f32 %v3649, %v3881
      %v3925 = vadd.f32 %v3650, %v3884
      %v3926 = vadd.f32 %v3651, %v3887
      %v3927 = vadd.f32 %v3652, %v3890
      %v3928 = vadd.f32 %v3653, %v3893
      %v3929 = vadd.f32 %v3654, %v3896
      %v3930 = vld [vmem:[%s5] sm:$0x1]
      %v3932 = vperm.slane %v3930, 0
      %v3934 = vmul.f32 %v3898, %v3932
      %v3935 = vmul.f32 %v3899, %v3932
      %v3936 = vmul.f32 %v3900, %v3932
      %v3937 = vmul.f32 %v3901, %v3932
      %v3938 = vmul.f32 %v3902, %v3932
      %v3939 = vmul.f32 %v3903, %v3932
      %v3940 = vmul.f32 %v3904, %v3932
      %v3941 = vmul.f32 %v3905, %v3932
      %v3942 = vmul.f32 %v3906, %v3932
      %v3943 = vmul.f32 %v3907, %v3932
      %v3944 = vmul.f32 %v3908, %v3932
      %v3945 = vmul.f32 %v3909, %v3932
      %v3946 = vmul.f32 %v3910, %v3932
      %v3947 = vmul.f32 %v3911, %v3932
      %v3948 = vmul.f32 %v3912, %v3932
      %v3949 = vmul.f32 %v3913, %v3932
      %v3950 = vmul.f32 %v3914, %v3932
      %v3951 = vmul.f32 %v3915, %v3932
      %v3952 = vmul.f32 %v3916, %v3932
      %v3953 = vmul.f32 %v3917, %v3932
      %v3954 = vmul.f32 %v3918, %v3932
      %v3955 = vmul.f32 %v3919, %v3932
      %v3956 = vmul.f32 %v3920, %v3932
      %v3957 = vmul.f32 %v3921, %v3932
      %v3958 = vmul.f32 %v3922, %v3932
      %v3959 = vmul.f32 %v3923, %v3932
      %v3960 = vmul.f32 %v3924, %v3932
      %v3961 = vmul.f32 %v3925, %v3932
      %v3962 = vmul.f32 %v3926, %v3932
      %v3963 = vmul.f32 %v3927, %v3932
      %v3964 = vmul.f32 %v3928, %v3932
      %v3965 = vmul.f32 %v3929, %v3932
      %v3966 = vld [vmem:[%s6] sm:$0x1]
      %v3968 = vperm.slane %v3966, 0
      %v3970 = vadd.f32 %v3934, %v3968
      %v3971 = vadd.f32 %v3935, %v3968
      %v3972 = vadd.f32 %v3936, %v3968
      %v3973 = vadd.f32 %v3937, %v3968
      %v3974 = vadd.f32 %v3938, %v3968
      %v3975 = vadd.f32 %v3939, %v3968
      %v3976 = vadd.f32 %v3940, %v3968
      %v3977 = vadd.f32 %v3941, %v3968
      %v3978 = vadd.f32 %v3942, %v3968
      %v3979 = vadd.f32 %v3943, %v3968
      %v3980 = vadd.f32 %v3944, %v3968
      %v3981 = vadd.f32 %v3945, %v3968
      %v3982 = vadd.f32 %v3946, %v3968
      %v3983 = vadd.f32 %v3947, %v3968
      %v3984 = vadd.f32 %v3948, %v3968
      %v3985 = vadd.f32 %v3949, %v3968
      %v3986 = vadd.f32 %v3950, %v3968
      %v3987 = vadd.f32 %v3951, %v3968
      %v3988 = vadd.f32 %v3952, %v3968
      %v3989 = vadd.f32 %v3953, %v3968
      %v3990 = vadd.f32 %v3954, %v3968
      %v3991 = vadd.f32 %v3955, %v3968
      %v3992 = vadd.f32 %v3956, %v3968
      %v3993 = vadd.f32 %v3957, %v3968
      %v3994 = vadd.f32 %v3958, %v3968
      %v3995 = vadd.f32 %v3959, %v3968
      %v3996 = vadd.f32 %v3960, %v3968
      %v3997 = vadd.f32 %v3961, %v3968
      %v3998 = vadd.f32 %v3962, %v3968
      %v3999 = vadd.f32 %v3963, %v3968
      %v4000 = vadd.f32 %v3964, %v3968
      %v4001 = vadd.f32 %v3965, %v3968
      %v4002 = vmax.f32 %v3970, 0.0
      %v4003 = vmax.f32 %v3971, 0.0
      %v4004 = vmax.f32 %v3972, 0.0
      %v4005 = vmax.f32 %v3973, 0.0
      %v4006 = vmax.f32 %v3974, 0.0
      %v4007 = vmax.f32 %v3975, 0.0
      %v4008 = vmax.f32 %v3976, 0.0
      %v4009 = vmax.f32 %v3977, 0.0
      %v4010 = vmax.f32 %v3978, 0.0
      %v4011 = vmax.f32 %v3979, 0.0
      %v4012 = vmax.f32 %v3980, 0.0
      %v4013 = vmax.f32 %v3981, 0.0
      %v4014 = vmax.f32 %v3982, 0.0
      %v4015 = vmax.f32 %v3983, 0.0
      %v4016 = vmax.f32 %v3984, 0.0
      %v4017 = vmax.f32 %v3985, 0.0
      %v4018 = vmax.f32 %v3986, 0.0
      %v4019 = vmax.f32 %v3987, 0.0
      %v4020 = vmax.f32 %v3988, 0.0
      %v4021 = vmax.f32 %v3989, 0.0
      %v4022 = vmax.f32 %v3990, 0.0
      %v4023 = vmax.f32 %v3991, 0.0
      %v4024 = vmax.f32 %v3992, 0.0
      %v4025 = vmax.f32 %v3993, 0.0
      %v4026 = vmax.f32 %v3994, 0.0
      %v4027 = vmax.f32 %v3995, 0.0
      %v4028 = vmax.f32 %v3996, 0.0
      %v4029 = vmax.f32 %v3997, 0.0
      %v4030 = vmax.f32 %v3998, 0.0
      %v4031 = vmax.f32 %v3999, 0.0
      %v4032 = vmax.f32 %v4000, 0.0
      %v4033 = vmax.f32 %v4001, 0.0
      %v4034 = vadd.f32 %v4002, %v1398
      %v4035 = vadd.f32 %v4003, %v1399
      %v4036 = vadd.f32 %v4004, %v1400
      %v4037 = vadd.f32 %v4005, %v1401
      %v4038 = vadd.f32 %v4006, %v1402
      %v4039 = vadd.f32 %v4007, %v1403
      %v4040 = vadd.f32 %v4008, %v1404
      %v4041 = vadd.f32 %v4009, %v1405
      %v4042 = vadd.f32 %v4010, %v1406
      %v4043 = vadd.f32 %v4011, %v1407
      %v4044 = vadd.f32 %v4012, %v1408
      %v4045 = vadd.f32 %v4013, %v1409
      %v4046 = vadd.f32 %v4014, %v1410
      %v4047 = vadd.f32 %v4015, %v1411
      %v4048 = vadd.f32 %v4016, %v1412
      %v4049 = vadd.f32 %v4017, %v1413
      %v4050 = vadd.f32 %v4018, %v1414
      %v4051 = vadd.f32 %v4019, %v1415
      %v4052 = vadd.f32 %v4020, %v1416
      %v4053 = vadd.f32 %v4021, %v1417
      %v4054 = vadd.f32 %v4022, %v1418
      %v4055 = vadd.f32 %v4023, %v1419
      %v4056 = vadd.f32 %v4024, %v1420
      %v4057 = vadd.f32 %v4025, %v1421
      %v4058 = vadd.f32 %v4026, %v1422
      %v4059 = vadd.f32 %v4027, %v1423
      %v4060 = vadd.f32 %v4028, %v1424
      %v4061 = vadd.f32 %v4029, %v1425
      %v4062 = vadd.f32 %v4030, %v1426
      %v4063 = vadd.f32 %v4031, %v1427
      %v4064 = vadd.f32 %v4032, %v1428
      %v4065 = vadd.f32 %v4033, %v1429
      %v4066 = vmax.f32 %v4034, 0.0
      %v4067 = vmax.f32 %v4035, 0.0
      %v4068 = vmax.f32 %v4036, 0.0
      %v4069 = vmax.f32 %v4037, 0.0
      %v4070 = vmax.f32 %v4038, 0.0
      %v4071 = vmax.f32 %v4039, 0.0
      %v4072 = vmax.f32 %v4040, 0.0
      %v4073 = vmax.f32 %v4041, 0.0
      %v4074 = vmax.f32 %v4042, 0.0
      %v4075 = vmax.f32 %v4043, 0.0
      %v4076 = vmax.f32 %v4044, 0.0
      %v4077 = vmax.f32 %v4045, 0.0
      %v4078 = vmax.f32 %v4046, 0.0
      %v4079 = vmax.f32 %v4047, 0.0
      %v4080 = vmax.f32 %v4048, 0.0
      %v4081 = vmax.f32 %v4049, 0.0
      %v4082 = vmax.f32 %v4050, 0.0
      %v4083 = vmax.f32 %v4051, 0.0
      %v4084 = vmax.f32 %v4052, 0.0
      %v4085 = vmax.f32 %v4053, 0.0
      %v4086 = vmax.f32 %v4054, 0.0
      %v4087 = vmax.f32 %v4055, 0.0
      %v4088 = vmax.f32 %v4056, 0.0
      %v4089 = vmax.f32 %v4057, 0.0
      %v4090 = vmax.f32 %v4058, 0.0
      %v4091 = vmax.f32 %v4059, 0.0
      %v4092 = vmax.f32 %v4060, 0.0
      %v4093 = vmax.f32 %v4061, 0.0
      %v4094 = vmax.f32 %v4062, 0.0
      %v4095 = vmax.f32 %v4063, 0.0
      %v4096 = vmax.f32 %v4064, 0.0
      %v4097 = vmax.f32 %v4065, 0.0
      %4098 = vst.msk [vmem:[%s359] sm:$0xff] %vm1430, %v4066
      %4099 = vst.msk [vmem:[%s359 + $0x8] sm:$0xff] %vm1430, %v4067
      %4100 = vst.msk [vmem:[%s359 + $0x10] sm:$0xff] %vm1430, %v4068
      %4101 = vst.msk [vmem:[%s359 + $0x18] sm:$0xff] %vm1430, %v4069
      %4102 = vst.msk [vmem:[%s359 + $0x20] sm:$0xff] %vm1430, %v4070
      %4103 = vst.msk [vmem:[%s359 + $0x28] sm:$0xff] %vm1430, %v4071
      %4104 = vst.msk [vmem:[%s359 + $0x30] sm:$0xff] %vm1430, %v4072
      %4105 = vst.msk [vmem:[%s359 + $0x38] sm:$0xff] %vm1430, %v4073
      %4106 = vst.msk [vmem:[%s359 + $0x40] sm:$0xff] %vm1430, %v4074
      %4107 = vst.msk [vmem:[%s359 + $0x48] sm:$0xff] %vm1430, %v4075
      %4108 = vst.msk [vmem:[%s359 + $0x50] sm:$0xff] %vm1430, %v4076
      %4109 = vst.msk [vmem:[%s359 + $0x58] sm:$0xff] %vm1430, %v4077
      %4110 = vst.msk [vmem:[%s359 + $0x60] sm:$0xff] %vm1430, %v4078
      %4111 = vst.msk [vmem:[%s359 + $0x68] sm:$0xff] %vm1430, %v4079
      %4112 = vst.msk [vmem:[%s359 + $0x70] sm:$0xff] %vm1430, %v4080
      %4113 = vst.msk [vmem:[%s359 + $0x78] sm:$0xff] %vm1430, %v4081
      %4114 = vst.msk [vmem:[%s359 + $0x80] sm:$0xff] %vm1430, %v4082
      %4115 = vst.msk [vmem:[%s359 + $0x88] sm:$0xff] %vm1430, %v4083
      %4116 = vst.msk [vmem:[%s359 + $0x90] sm:$0xff] %vm1430, %v4084
      %4117 = vst.msk [vmem:[%s359 + $0x98] sm:$0xff] %vm1430, %v4085
      %4118 = vst.msk [vmem:[%s359 + $0xa0] sm:$0xff] %vm1430, %v4086
      %4119 = vst.msk [vmem:[%s359 + $0xa8] sm:$0xff] %vm1430, %v4087
      %4120 = vst.msk [vmem:[%s359 + $0xb0] sm:$0xff] %vm1430, %v4088
      %4121 = vst.msk [vmem:[%s359 + $0xb8] sm:$0xff] %vm1430, %v4089
      %4122 = vst.msk [vmem:[%s359 + $0xc0] sm:$0xff] %vm1430, %v4090
      %4123 = vst.msk [vmem:[%s359 + $0xc8] sm:$0xff] %vm1430, %v4091
      %4124 = vst.msk [vmem:[%s359 + $0xd0] sm:$0xff] %vm1430, %v4092
      %4125 = vst.msk [vmem:[%s359 + $0xd8] sm:$0xff] %vm1430, %v4093
      %4126 = vst.msk [vmem:[%s359 + $0xe0] sm:$0xff] %vm1430, %v4094
      %4127 = vst.msk [vmem:[%s359 + $0xe8] sm:$0xff] %vm1430, %v4095
      %4128 = vst.msk [vmem:[%s359 + $0xf0] sm:$0xff] %vm1430, %v4096
      %4129 = vst.msk [vmem:[%s359 + $0xf8] sm:$0xff] %vm1430, %v4097
      %p4130 = scmp.lt.s32.totalorder %s21, 1
      %s4131 = scalar_select %p4130, %s21, 1
      %s4132 = smul.addr %s4131, 32
      %s4133 = smul.addr %s4132, 8
      %s4134 = scalar_lea.vmem %s10, %s4133
      // Predicated region
      $region61: #{resblock_forward.1} parent=59 // pred_check
        %p4135 = pneg %p254
      $region62: #{resblock_forward.1} parent=59 // pred_check_branch
        %4137 = sbr.rel (%p4135) target = $region64
      $region63: #{resblock_forward.1} parent=59 // pred_region
        _
      $region64: #{resblock_forward.1} parent=59 // pred_fallthru
        _
    $region60: #{resblock_forward.1} parent=5 // pred_fallthru
      _
    %p4138 = scmp.le.s32.totalorder 2, %s16
    // Predicated region
    $region65: #{resblock_forward.1} parent=5 // pred_check
      %p4139 = pneg %p4138
    $region66: #{resblock_forward.1} parent=5 // pred_check_branch
      %4141 = sbr.rel (%p4139) target = $region68
    $region67: #{resblock_forward.1} parent=5 // pred_region
      %s4142 = ssub.s32 %s16, 2
      // Predicated region
      $region69: #{resblock_forward.1} parent=67 // pred_check
        %p4143 = pneg %p260
      $region70: #{resblock_forward.1} parent=67 // pred_check_branch
        %4145 = sbr.rel (%p4143) target = $region72
      $region71: #{resblock_forward.1} parent=67 // pred_region
        %p4146 = scmp.lt.s32.totalorder %s22, 1
        %s4147 = scalar_select %p4146, %s22, 1
        %s4148 = smul.addr %s4147, 32
        %s4149 = smul.addr %s4148, 8
        %s4150 = scalar_lea.vmem %s10, %s4149
      $region72: #{resblock_forward.1} parent=67 // pred_fallthru
        _
    $region68: #{resblock_forward.1} parent=5 // pred_fallthru
      _
  $region6: #{resblock_forward.1} parent=0 // loop_footer
    %s20 = sadd.s32 1, %s16
  $region7: #{resblock_forward.1} parent=0 // loop_footer_branch
    %15 = sbr.rel target = $region3
  $region8: #{resblock_forward.1} parent=0 // loop_exit
    _

</llo_original>
